<compile_context>
chip_gen: v6e
topology: v6e:2x2x1
jax: 0.10.0
libtpu: 0.0.40
codegen_flags: <defaults>
</compile_context>

<pallas_src>
import functools

import jax
import jax.numpy as jnp
from jax.experimental import pallas as pl
from jax.experimental.pallas import tpu as pltpu

_VMEM = pl.BlockSpec(memory_space=pltpu.MemorySpace.VMEM)
_INV_SQRT2 = 0.7071067811865475
_LN_EPS = 1e-5


# ------------------------------- helpers (in-kernel) -------------------------

def _gelu(x):
    # exact (erf-based) GELU, matching HF "gelu"
    return 0.5 * x * (1.0 + jax.lax.erf(x * _INV_SQRT2))


def _layernorm(x, g, b, eps):
    mu = jnp.mean(x, axis=-1, keepdims=True)
    xc = x - mu
    var = jnp.mean(xc * xc, axis=-1, keepdims=True)
    return xc * jax.lax.rsqrt(var + eps) * g + b


def _bf16(x):
    return x.astype(jnp.bfloat16)


# --------------------------------- kernels -----------------------------------

def _conv_ln_gelu_kernel(x_ref, w_ref, b_ref, g_ref, beta_ref, o_ref,
                         *, ksize, stride, cin, t_out, eps):
    """Conv1d (valid, stride) + LayerNorm(channels) + GELU.

    x_ref : (1, L//stride, stride*cin)  stride-packed input (free reshape)
    w_ref : (ksize, cin, cout) bf16     per-tap weight slabs
    """
    x = x_ref[0]                                      # (L2, stride*cin) f32
    cout = o_ref.shape[-1]
    acc = jnp.zeros((t_out, cout), jnp.float32)
    for j in range(ksize):                            # in-kernel tap accumulation
        q, r = divmod(j, stride)
        tap = x[q:q + t_out, r * cin:(r + 1) * cin]
        acc = acc + jnp.dot(_bf16(tap), w_ref[j],
                            preferred_element_type=jnp.float32)
    acc = acc + b_ref[...]
    o_ref[0] = _gelu(_layernorm(acc, g_ref[...], beta_ref[...], eps))


def _featproj_kernel(x_ref, g_ref, b_ref, w_ref, bias_ref, o_ref, *, eps):
    """feature_projection: LayerNorm -> Linear (dropout is identity in eval)."""
    xn = _layernorm(x_ref[...], g_ref[...], b_ref[...], eps)
    o_ref[...] = jnp.dot(_bf16(xn), w_ref[...],
                         preferred_element_type=jnp.float32) + bias_ref[...]


def _encoder_kernel(hp_ref, posw_ref, posb_ref,
                    ln1g_ref, ln1b_ref, wqkv_ref, bqkv_ref, wo_ref, bo_ref,
                    ln2g_ref, ln2b_ref, w1_ref, b1_ref, w2_ref, b2_ref,
                    o_ref, *, pos_k, num_heads, eps):
    """Whole stable-layer-norm encoder, fused.

    grid = (batch, layer).  Output block o_ref (1, T, H) is VMEM-resident
    across the layer axis and carries the residual stream.

    l == 0 : grouped pos-conv (same padding, even-kernel trailing drop)
             + GELU + residual, seeding the residual stream.
    every l: pre-LN attention block + pre-LN feed-forward block.
    """
    l = pl.program_id(1)
    t = o_ref.shape[1]
    hdim = o_ref.shape[2]
    dh = hdim // num_heads

    @pl.when(l == 0)
    def _():
        hp = hp_ref[0]                                 # (T + 2*(K//2), H) f32
        acc = jnp.zeros((t, hdim), jnp.float32)
        for j in range(pos_k):                         # per-tap matmul accumulation
            acc = acc + jnp.dot(_bf16(hp[j:j + t]), posw_ref[j],
                                preferred_element_type=jnp.float32)
        acc = acc + posb_ref[...]
        pad = pos_k // 2
        o_ref[0] = hp[pad:pad + t] + _gelu(acc)        # residual + GELU(pos-conv)

    x = o_ref[0]                                       # (T, H) residual stream

    # ---- pre-LN self-attention block (scaling folded into Q weight/bias) ----
    xn = _layernorm(x, ln1g_ref[0], ln1b_ref[0], eps)
    qkv = jnp.dot(_bf16(xn), wqkv_ref[0],
                  preferred_element_type=jnp.float32) + bqkv_ref[0]     # (T, 3H)
    ctxs = []
    for hd in range(num_heads):
        qh = qkv[:, hd * dh:(hd + 1) * dh]
        kh = qkv[:, hdim + hd * dh:hdim + (hd + 1) * dh]
        vh = qkv[:, 2 * hdim + hd * dh:2 * hdim + (hd + 1) * dh]
        s = jax.lax.dot_general(_bf16(qh), _bf16(kh),
                                (((1,), (1,)), ((), ())),
                                preferred_element_type=jnp.float32)     # (T, T)
        m = jnp.max(s, axis=-1, keepdims=True)
        p = jnp.exp(s - m)
        inv = pl.reciprocal(jnp.sum(p, axis=-1, keepdims=True), approx=True)
        ctxs.append(jnp.dot(_bf16(p * inv), _bf16(vh),
                            preferred_element_type=jnp.float32))        # (T, Dh)
    ctx = jnp.concatenate(ctxs, axis=-1)                                # (T, H)
    attn = jnp.dot(_bf16(ctx), wo_ref[0],
                   preferred_element_type=jnp.float32) + bo_ref[0]
    x = x + attn

    # ---- pre-LN feed-forward block ----
    xn = _layernorm(x, ln2g_ref[0], ln2b_ref[0], eps)
    ff = _gelu(jnp.dot(_bf16(xn), w1_ref[0],
                       preferred_element_type=jnp.float32) + b1_ref[0])
    x = x + jnp.dot(_bf16(ff), w2_ref[0],
                    preferred_element_type=jnp.float32) + b2_ref[0]

    o_ref[0] = x


def _head_kernel(h_ref, g_ref, b_ref, wp_ref, bp_ref, wc_ref, bc_ref, o_ref,
                 *, eps):
    """Final encoder LN -> mean pool over time -> projector -> classifier.
    (pool before projector: exact because the projector is affine and
     attention_mask is None)."""
    xn = _layernorm(h_ref[...], g_ref[...], b_ref[...], eps)   # (B, T, H)
    pooled = jnp.mean(xn, axis=1)                              # (B, H)
    proj = jnp.dot(_bf16(pooled), wp_ref[...],
                   preferred_element_type=jnp.float32) + bp_ref[...]
    o_ref[...] = jnp.dot(_bf16(proj), wc_ref[...],
                         preferred_element_type=jnp.float32) + bc_ref[...]


# ------------------------------ kernel wrappers -------------------------------

def conv_ln_gelu(x_packed, w, b, g, beta, *, ksize, stride, cin, t_out):
    B, L2, SC = x_packed.shape
    cout = w.shape[-1]
    row = lambda i: (i, 0, 0)
    z2 = lambda i: (0, 0)
    z3 = lambda i: (0, 0, 0)
    return pl.pallas_call(
        functools.partial(_conv_ln_gelu_kernel, ksize=ksize, stride=stride,
                          cin=cin, t_out=t_out, eps=_LN_EPS),
        out_shape=jax.ShapeDtypeStruct((B, t_out, cout), jnp.float32),
        grid=(B,),
        in_specs=[pl.BlockSpec((1, L2, SC), row),
                  pl.BlockSpec((ksize, cin, cout), z3),
                  pl.BlockSpec((1, cout), z2),
                  pl.BlockSpec((1, cout), z2),
                  pl.BlockSpec((1, cout), z2)],
        out_specs=pl.BlockSpec((1, t_out, cout), row),
        compiler_params=pltpu.CompilerParams(dimension_semantics=("parallel",)),
    )(x_packed, w, b, g, beta)


def feature_projection(x, g, b, w, bias):
    B, T, C = x.shape
    H = w.shape[-1]
    out = pl.pallas_call(
        functools.partial(_featproj_kernel, eps=_LN_EPS),
        out_shape=jax.ShapeDtypeStruct((B * T, H), jnp.float32),
        in_specs=[_VMEM] * 5,
        out_specs=_VMEM,
    )(x.reshape(B * T, C), g, b, w, bias)
    return out.reshape(B, T, H)


def encoder_stack(hp, pos_w, pos_b, L, *, t_len, num_heads, pos_k):
    """One pallas_call for pos-conv + all transformer layers.

    hp : (B, T + 2*(K//2), H) padded hidden states after feature projection
    L  : dict of per-layer parameters stacked along a leading layer axis
    """
    B, Tp, H = hp.shape
    num_layers = L["wqkv"].shape[0]
    F = L["w1"].shape[-1]
    hpmap = lambda b, l: (b, 0, 0)
    cmap3 = lambda b, l: (0, 0, 0)
    cmap2 = lambda b, l: (0, 0)
    lmap3 = lambda b, l: (l, 0, 0)
    outmap = lambda b, l: (b, 0, 0)
    return pl.pallas_call(
        functools.partial(_encoder_kernel, pos_k=pos_k,
                          num_heads=num_heads, eps=_LN_EPS),
        out_shape=jax.ShapeDtypeStruct((B, t_len, H), jnp.float32),
        grid=(B, num_layers),
        in_specs=[pl.BlockSpec((1, Tp, H), hpmap),
                  pl.BlockSpec((pos_k, H, H), cmap3),
                  pl.BlockSpec((1, H), cmap2),
                  pl.BlockSpec((1, 1, H), lmap3),        # ln1 gamma
                  pl.BlockSpec((1, 1, H), lmap3),        # ln1 beta
                  pl.BlockSpec((1, H, 3 * H), lmap3),    # merged QKV weight
                  pl.BlockSpec((1, 1, 3 * H), lmap3),    # merged QKV bias
                  pl.BlockSpec((1, H, H), lmap3),        # O-projection weight
                  pl.BlockSpec((1, 1, H), lmap3),        # O-projection bias
                  pl.BlockSpec((1, 1, H), lmap3),        # ln2 gamma
                  pl.BlockSpec((1, 1, H), lmap3),        # ln2 beta
                  pl.BlockSpec((1, H, F), lmap3),        # FF1 weight
                  pl.BlockSpec((1, 1, F), lmap3),        # FF1 bias
                  pl.BlockSpec((1, F, H), lmap3),        # FF2 weight
                  pl.BlockSpec((1, 1, H), lmap3)],       # FF2 bias
        out_specs=pl.BlockSpec((1, t_len, H), outmap),
        compiler_params=pltpu.CompilerParams(
            dimension_semantics=("parallel", "arbitrary")),
    )(hp, pos_w, pos_b,
      L["ln1_g"], L["ln1_b"], L["wqkv"], L["bqkv"], L["wo"], L["bo"],
      L["ln2_g"], L["ln2_b"], L["w1"], L["b1"], L["w2"], L["b2"])


def final_head(h, g, b, wp, bp, wc, bc):
    B = h.shape[0]
    n_cls = wc.shape[-1]
    return pl.pallas_call(
        functools.partial(_head_kernel, eps=_LN_EPS),
        out_shape=jax.ShapeDtypeStruct((B, n_cls), jnp.float32),
        in_specs=[_VMEM] * 7,
        out_specs=_VMEM,
    )(h, g, b, wp, bp, wc, bc)


# ------------------------------ JAX glue (layout) ------------------------------

def pack_conv_input(x, stride):
    """(B, L, C) -> (B, ceil(L/stride), stride*C). Pure reshape (plus tiny pad),
    no K-fold im2col blowup; the K conv taps become contiguous slices in-kernel."""
    B, L, C = x.shape
    Lp = ((L + stride - 1) // stride) * stride
    if Lp != L:
        x = jnp.pad(x, ((0, 0), (0, Lp - L), (0, 0)))
    return x.reshape(B, Lp // stride, stride * C)


# ----------------------------------- config ------------------------------------

CFG = dict(
    num_input_channels=8,                  # widened first conv, as in the module
    num_classes=10,
    conv_layers=[(32, 4, 2), (32, 2, 2)],  # (out_ch, kernel, stride): scaled-down feature extractor
    hidden=32,
    num_heads=4,
    ffn=64,
    num_layers=2,
    pos_conv_kernel=8,
    pos_conv_groups=4,
    proj=256,                              # classifier_proj_size; classifier = Linear(256, num_classes)
)


# -------------------------------- parameter init --------------------------------

def init_params(key, cfg):
    cnt = [0]

    def nk():
        cnt[0] += 1
        return jax.random.fold_in(key, cnt[0])

    def dense(din, dout):
        return dict(w=0.05 * jax.random.normal(nk(), (din, dout), jnp.float32),
                    b=0.02 * jax.random.normal(nk(), (dout,), jnp.float32))

    def ln(d):
        return dict(g=1.0 + 0.01 * jax.random.normal(nk(), (d,), jnp.float32),
                    b=0.01 * jax.random.normal(nk(), (d,), jnp.float32))

    params = {}
    c_in = cfg["num_input_channels"]
    convs = []
    for (c_out, k, _s) in cfg["conv_layers"]:
        convs.append(dict(
            w=0.05 * jax.random.normal(nk(), (c_out, c_in, k), jnp.float32),  # torch (Cout,Cin,K)
            b=0.02 * jax.random.normal(nk(), (c_out,), jnp.float32),
            ln=ln(c_out)))
        c_in = c_out
    params["convs"] = convs

    H = cfg["hidden"]
    params["fp_ln"] = ln(c_in)
    params["fp_proj"] = dense(c_in, H)

    G = cfg["pos_conv_groups"]
    K = cfg["pos_conv_kernel"]
    # TODO(synk): torch weight_norm on pos_conv is folded into a plain weight here.
    params["pos_conv"] = dict(
        w=0.05 * jax.random.normal(nk(), (H, H // G, K), jnp.float32),
        b=0.02 * jax.random.normal(nk(), (H,), jnp.float32))

    layers = []
    for _ in range(cfg["num_layers"]):
        layers.append(dict(
            ln1=ln(H),
            q=dense(H, H), k=dense(H, H), v=dense(H, H), o=dense(H, H),
            ln2=ln(H),
            ff1=dense(H, cfg["ffn"]), ff2=dense(cfg["ffn"], H)))
    params["layers"] = layers
    params["enc_ln"] = ln(H)
    params["projector"] = dense(H, cfg["proj"])
    params["classifier"] = dense(cfg["proj"], cfg["num_classes"])
    return params


# -------------------------- parameter preprocessing (once) ----------------------

def preprocess_params(params, cfg):
    """One-time weight layout transforms, per-layer stacking and bf16 casts,
    hoisted out of forward()."""
    H = cfg["hidden"]
    pp = {}

    convs = []
    for i, _ in enumerate(cfg["conv_layers"]):
        p = params["convs"][i]
        convs.append(dict(
            w=jnp.transpose(p["w"], (2, 1, 0)).astype(jnp.bfloat16),   # (K, Cin, Cout)
            b=p["b"].reshape(1, -1),
            g=p["ln"]["g"].reshape(1, -1),
            beta=p["ln"]["b"].reshape(1, -1)))
    pp["convs"] = convs

    c_last = cfg["conv_layers"][-1][0]
    pp["fp"] = dict(g=params["fp_ln"]["g"].reshape(1, c_last),
                    b=params["fp_ln"]["b"].reshape(1, c_last),
                    w=params["fp_proj"]["w"].astype(jnp.bfloat16),
                    bias=params["fp_proj"]["b"].reshape(1, H))

    # grouped pos-conv -> per-tap block-diagonal (K, H, H) matmul weights
    # TODO(synk): at real HuBERT sizes (H=1024, G=16) tile per-group instead of block-diag.
    G = cfg["pos_conv_groups"]
    K = cfg["pos_conv_kernel"]
    cg = H // G
    wsrc = params["pos_conv"]["w"]                        # torch (H, H//G, K)
    w_taps = jnp.zeros((K, H, H), jnp.float32)
    for g in range(G):
        blk = jnp.transpose(wsrc[g * cg:(g + 1) * cg], (2, 1, 0))   # (K, Cg, Cg)
        w_taps = w_taps.at[:, g * cg:(g + 1) * cg, g * cg:(g + 1) * cg].set(blk)
    pp["pos"] = dict(w=w_taps.astype(jnp.bfloat16),
                     b=params["pos_conv"]["b"].reshape(1, H))

    nH = cfg["num_heads"]
    dh = H // nH
    scale = dh ** -0.5
    layers = params["layers"]

    def st(fn, cast=None):
        a = jnp.stack([fn(lp) for lp in layers], axis=0)
        return a.astype(cast) if cast is not None else a

    pp["enc_layers"] = dict(
        ln1_g=st(lambda lp: lp["ln1"]["g"].reshape(1, H)),
        ln1_b=st(lambda lp: lp["ln1"]["b"].reshape(1, H)),
        wqkv=st(lambda lp: jnp.concatenate(
            [lp["q"]["w"] * scale, lp["k"]["w"], lp["v"]["w"]], axis=1),
            cast=jnp.bfloat16),
        bqkv=st(lambda lp: jnp.concatenate(
            [lp["q"]["b"] * scale, lp["k"]["b"], lp["v"]["b"]]).reshape(1, 3 * H)),
        wo=st(lambda lp: lp["o"]["w"], cast=jnp.bfloat16),
        bo=st(lambda lp: lp["o"]["b"].reshape(1, H)),
        ln2_g=st(lambda lp: lp["ln2"]["g"].reshape(1, H)),
        ln2_b=st(lambda lp: lp["ln2"]["b"].reshape(1, H)),
        w1=st(lambda lp: lp["ff1"]["w"], cast=jnp.bfloat16),
        b1=st(lambda lp: lp["ff1"]["b"].reshape(1, -1)),
        w2=st(lambda lp: lp["ff2"]["w"], cast=jnp.bfloat16),
        b2=st(lambda lp: lp["ff2"]["b"].reshape(1, H)),
    )

    pp["enc_g"] = params["enc_ln"]["g"].reshape(1, 1, H)
    pp["enc_b"] = params["enc_ln"]["b"].reshape(1, 1, H)
    pp["proj_w"] = params["projector"]["w"].astype(jnp.bfloat16)
    pp["proj_b"] = params["projector"]["b"].reshape(1, -1)
    pp["cls_w"] = params["classifier"]["w"].astype(jnp.bfloat16)
    pp["cls_b"] = params["classifier"]["b"].reshape(1, -1)
    return pp


# ----------------------------------- forward ------------------------------------

def forward(pp, cfg, input_values):
    """input_values: (B, C_in, L) like the PyTorch module.  Returns logits (B, num_classes)."""
    h = jnp.transpose(input_values, (0, 2, 1)).astype(jnp.float32)    # (B, L, Cin)

    # feature extractor: [Conv1d -> LayerNorm(channels) -> GELU] x N  (one fused kernel each)
    for i, (_c_out, k, s) in enumerate(cfg["conv_layers"]):
        cp = pp["convs"][i]
        B, L, C = h.shape
        t_out = (L - k) // s + 1
        h = conv_ln_gelu(pack_conv_input(h, s), cp["w"], cp["b"], cp["g"], cp["beta"],
                         ksize=k, stride=s, cin=C, t_out=t_out)

    # extract_features.transpose(1, 2) is a no-op in channels-last layout.
    # feature_projection: LayerNorm -> Linear (dropout identity in eval), fused.
    h = feature_projection(h, pp["fp"]["g"], pp["fp"]["b"], pp["fp"]["w"], pp["fp"]["bias"])
    # TODO(synk): _mask_hidden_states / SpecAugment is training-only; identity at inference.

    # encoder (stable-layer-norm variant), single fused pallas_call:
    #   grouped pos-conv embedding + GELU + residual  (even kernel -> first T outputs)
    #   + all transformer layers (residual stream stays in VMEM across layers).
    K = cfg["pos_conv_kernel"]
    pad = K // 2
    hp = jnp.pad(h, ((0, 0), (pad, pad), (0, 0)))
    h = encoder_stack(hp, pp["pos"]["w"], pp["pos"]["b"], pp["enc_layers"],
                      t_len=h.shape[1], num_heads=cfg["num_heads"], pos_k=K)
    # encoder / layer dropouts (eval: identity)

    # final encoder LN + mean pool (attention_mask None) + projector + classifier, fused.
    return final_head(h, pp["enc_g"], pp["enc_b"], pp["proj_w"], pp["proj_b"],
                      pp["cls_w"], pp["cls_b"])


# ------------------------------------- main --------------------------------------

if __name__ == "__main__":
    key = jax.random.PRNGKey(0)
    cfg = CFG
    params = init_params(jax.random.fold_in(key, 1), cfg)
    pp = preprocess_params(params, cfg)          # one-time layout transforms / casts

    B, L = 2, 64
    x = jax.random.normal(jax.random.fold_in(key, 2),
                          (B, cfg["num_input_channels"], L), jnp.float32)

    fwd = jax.jit(lambda p, xx: forward(p, cfg, xx))
    logits = jax.block_until_ready(fwd(pp, x))

    assert logits.shape == (B, cfg["num_classes"]), logits.shape
    assert bool(jnp.all(jnp.isfinite(logits)))
    print("KERNEL_OK")
</pallas_src>

<mosaic_0001>
module attributes {stable_mosaic.version = 11 : i64} {
  func.func @_conv_ln_gelu_kernel(%arg0: i32, %arg1: memref<1x16x64xf32, #tpu.memory_space<vmem>>, %arg2: memref<2x32x32xbf16, #tpu.memory_space<vmem>>, %arg3: memref<1x32xf32, #tpu.memory_space<vmem>>, %arg4: memref<1x32xf32, #tpu.memory_space<vmem>>, %arg5: memref<1x32xf32, #tpu.memory_space<vmem>>, %arg6: memref<1x15x32xf32, #tpu.memory_space<vmem>>) attributes {dimension_semantics = [#tpu.dimension_semantics<parallel>], iteration_bounds = array<i64: 2>, scalar_prefetch = 0 : i64, scratch_operands = 0 : i64, tpu.core_type = #tpu.core_type<tc>, window_params = [{transform_indices = @transform_0, window_bounds = array<i64: 1, 16, 64>}, {pipeline_mode = #tpu.pipeline_mode<synchronous>, transform_indices = @transform_1, window_bounds = array<i64: 2, 32, 32>}, {pipeline_mode = #tpu.pipeline_mode<synchronous>, transform_indices = @transform_2, window_bounds = array<i64: 1, 32>}, {pipeline_mode = #tpu.pipeline_mode<synchronous>, transform_indices = @transform_3, window_bounds = array<i64: 1, 32>}, {pipeline_mode = #tpu.pipeline_mode<synchronous>, transform_indices = @transform_4, window_bounds = array<i64: 1, 32>}, {transform_indices = @transform_5, window_bounds = array<i64: 1, 15, 32>}]} {
    %c0 = arith.constant 0 : index
    %c0_0 = arith.constant 0 : index
    %c0_1 = arith.constant 0 : index
    %0 = vector.load %arg1[%c0, %c0_0, %c0_1] : memref<1x16x64xf32, #tpu.memory_space<vmem>>, vector<1x16x64xf32>
    %1 = vector.shape_cast %0 : vector<1x16x64xf32> to vector<16x64xf32>
    %cst = arith.constant 0.000000e+00 : f32
    %2 = vector.broadcast %cst : f32 to vector<15x32xf32>
    %3 = vector.extract_strided_slice %1 {offsets = [0, 0], sizes = [15, 32], strides = [1, 1]} : vector<16x64xf32> to vector<15x32xf32>
    %4 = arith.truncf %3 : vector<15x32xf32> to vector<15x32xbf16>
    %c0_2 = arith.constant 0 : index
    %c0_3 = arith.constant 0 : index
    %c0_4 = arith.constant 0 : index
    %5 = vector.load %arg2[%c0_2, %c0_3, %c0_4] : memref<2x32x32xbf16, #tpu.memory_space<vmem>>, vector<1x32x32xbf16>
    %6 = vector.shape_cast %5 : vector<1x32x32xbf16> to vector<32x32xbf16>
    %cst_5 = arith.constant dense<0.000000e+00> : vector<15x32xf32>
    %7 = tpu.matmul %4, %6, %cst_5 {dimension_numbers = #tpu.dot_dimension_numbers<[1], [0], [0], [1], [0, 0, 1, 1], [], []>} : vector<15x32xbf16>, vector<32x32xbf16>, vector<15x32xf32> -> vector<15x32xf32>
    %8 = arith.addf %2, %7 : vector<15x32xf32>
    %9 = vector.extract_strided_slice %1 {offsets = [0, 32], sizes = [15, 32], strides = [1, 1]} : vector<16x64xf32> to vector<15x32xf32>
    %10 = arith.truncf %9 : vector<15x32xf32> to vector<15x32xbf16>
    %c1 = arith.constant 1 : index
    %c0_6 = arith.constant 0 : index
    %c0_7 = arith.constant 0 : index
    %11 = vector.load %arg2[%c1, %c0_6, %c0_7] : memref<2x32x32xbf16, #tpu.memory_space<vmem>>, vector<1x32x32xbf16>
    %12 = vector.shape_cast %11 : vector<1x32x32xbf16> to vector<32x32xbf16>
    %cst_8 = arith.constant dense<0.000000e+00> : vector<15x32xf32>
    %13 = tpu.matmul %10, %12, %cst_8 {dimension_numbers = #tpu.dot_dimension_numbers<[1], [0], [0], [1], [0, 0, 1, 1], [], []>} : vector<15x32xbf16>, vector<32x32xbf16>, vector<15x32xf32> -> vector<15x32xf32>
    %14 = arith.addf %8, %13 : vector<15x32xf32>
    %c0_9 = arith.constant 0 : index
    %c0_10 = arith.constant 0 : index
    %15 = vector.load %arg3[%c0_9, %c0_10] : memref<1x32xf32, #tpu.memory_space<vmem>>, vector<1x32xf32>
    %16 = vector.broadcast %15 : vector<1x32xf32> to vector<15x32xf32>
    %17 = arith.addf %14, %16 : vector<15x32xf32>
    %c0_11 = arith.constant 0 : index
    %c0_12 = arith.constant 0 : index
    %18 = vector.load %arg4[%c0_11, %c0_12] : memref<1x32xf32, #tpu.memory_space<vmem>>, vector<1x32xf32>
    %c0_13 = arith.constant 0 : index
    %c0_14 = arith.constant 0 : index
    %19 = vector.load %arg5[%c0_13, %c0_14] : memref<1x32xf32, #tpu.memory_space<vmem>>, vector<1x32xf32>
    %cst_15 = arith.constant dense<0.000000e+00> : vector<15xf32>
    %20 = vector.multi_reduction <add>, %17, %cst_15 [1] : vector<15x32xf32> to vector<15xf32>
    %21 = vector.shape_cast %20 : vector<15xf32> to vector<15x1xf32>
    %cst_16 = arith.constant 3.200000e+01 : f32
    %22 = vector.broadcast %cst_16 : f32 to vector<15x1xf32>
    %23 = arith.divf %21, %22 : vector<15x1xf32>
    %24 = vector.broadcast %23 : vector<15x1xf32> to vector<15x32xf32>
    %25 = arith.subf %17, %24 : vector<15x32xf32>
    %26 = arith.mulf %25, %25 : vector<15x32xf32>
    %cst_17 = arith.constant dense<0.000000e+00> : vector<15xf32>
    %27 = vector.multi_reduction <add>, %26, %cst_17 [1] : vector<15x32xf32> to vector<15xf32>
    %28 = vector.shape_cast %27 : vector<15xf32> to vector<15x1xf32>
    %cst_18 = arith.constant 3.200000e+01 : f32
    %29 = vector.broadcast %cst_18 : f32 to vector<15x1xf32>
    %30 = arith.divf %28, %29 : vector<15x1xf32>
    %cst_19 = arith.constant 9.99999974E-6 : f32
    %31 = vector.broadcast %cst_19 : f32 to vector<15x1xf32>
    %32 = arith.addf %30, %31 : vector<15x1xf32>
    %33 = math.rsqrt %32 : vector<15x1xf32>
    %34 = vector.broadcast %33 : vector<15x1xf32> to vector<15x32xf32>
    %35 = arith.mulf %25, %34 : vector<15x32xf32>
    %36 = vector.broadcast %18 : vector<1x32xf32> to vector<15x32xf32>
    %37 = arith.mulf %35, %36 : vector<15x32xf32>
    %38 = vector.broadcast %19 : vector<1x32xf32> to vector<15x32xf32>
    %39 = arith.addf %37, %38 : vector<15x32xf32>
    %cst_20 = arith.constant 5.000000e-01 : f32
    %40 = vector.broadcast %cst_20 : f32 to vector<15x32xf32>
    %41 = arith.mulf %40, %39 : vector<15x32xf32>
    %cst_21 = arith.constant 0.707106769 : f32
    %42 = vector.broadcast %cst_21 : f32 to vector<15x32xf32>
    %43 = arith.mulf %39, %42 : vector<15x32xf32>
    %44 = math.erf %43 : vector<15x32xf32>
    %cst_22 = arith.constant 1.000000e+00 : f32
    %45 = vector.broadcast %cst_22 : f32 to vector<15x32xf32>
    %46 = arith.addf %45, %44 : vector<15x32xf32>
    %47 = arith.mulf %41, %46 : vector<15x32xf32>
    %c0_23 = arith.constant 0 : index
    %c0_24 = arith.constant 0 : index
    %c0_25 = arith.constant 0 : index
    %48 = vector.load %arg6[%c0_23, %c0_24, %c0_25] : memref<1x15x32xf32, #tpu.memory_space<vmem>>, vector<1x15x32xf32>
    %49 = vector.shape_cast %48 : vector<1x15x32xf32> to vector<15x32xf32>
    %50 = vector.shape_cast %47 : vector<15x32xf32> to vector<1x15x32xf32>
    tpu.vector_store %arg6[%c0_23, %c0_24, %c0_25], %50 {strides = array<i32>} : memref<1x15x32xf32, #tpu.memory_space<vmem>>, vector<1x15x32xf32>,
    return
  }
  func.func @transform_0(%arg0: i32) -> (i32, i32, i32) {
    %c0_i32 = arith.constant 0 : i32
    %c0_i32_0 = arith.constant 0 : i32
    %c0_i32_1 = arith.constant 0 : i32
    return %arg0, %c0_i32, %c0_i32_0 : i32, i32, i32
  }
  func.func @transform_1(%arg0: i32) -> (i32, i32, i32) {
    %c0_i32 = arith.constant 0 : i32
    %c0_i32_0 = arith.constant 0 : i32
    %c0_i32_1 = arith.constant 0 : i32
    %c0_i32_2 = arith.constant 0 : i32
    return %c0_i32, %c0_i32_0, %c0_i32_1 : i32, i32, i32
  }
  func.func @transform_2(%arg0: i32) -> (i32, i32) {
    %c0_i32 = arith.constant 0 : i32
    %c0_i32_0 = arith.constant 0 : i32
    %c0_i32_1 = arith.constant 0 : i32
    return %c0_i32, %c0_i32_0 : i32, i32
  }
  func.func @transform_3(%arg0: i32) -> (i32, i32) {
    %c0_i32 = arith.constant 0 : i32
    %c0_i32_0 = arith.constant 0 : i32
    %c0_i32_1 = arith.constant 0 : i32
    return %c0_i32, %c0_i32_0 : i32, i32
  }
  func.func @transform_4(%arg0: i32) -> (i32, i32) {
    %c0_i32 = arith.constant 0 : i32
    %c0_i32_0 = arith.constant 0 : i32
    %c0_i32_1 = arith.constant 0 : i32
    return %c0_i32, %c0_i32_0 : i32, i32
  }
  func.func @transform_5(%arg0: i32) -> (i32, i32, i32) {
    %c0_i32 = arith.constant 0 : i32
    %c0_i32_0 = arith.constant 0 : i32
    %c0_i32_1 = arith.constant 0 : i32
    return %arg0, %c0_i32, %c0_i32_0 : i32, i32, i32
  }
}

module attributes {stable_mosaic.version = 11 : i64} {
  func.func @_conv_ln_gelu_kernel(%arg0: i32, %arg1: memref<1x32x16xf32, #tpu.memory_space<vmem>>, %arg2: memref<4x8x32xbf16, #tpu.memory_space<vmem>>, %arg3: memref<1x32xf32, #tpu.memory_space<vmem>>, %arg4: memref<1x32xf32, #tpu.memory_space<vmem>>, %arg5: memref<1x32xf32, #tpu.memory_space<vmem>>, %arg6: memref<1x31x32xf32, #tpu.memory_space<vmem>>) attributes {dimension_semantics = [#tpu.dimension_semantics<parallel>], iteration_bounds = array<i64: 2>, scalar_prefetch = 0 : i64, scratch_operands = 0 : i64, tpu.core_type = #tpu.core_type<tc>, window_params = [{transform_indices = @transform_0, window_bounds = array<i64: 1, 32, 16>}, {pipeline_mode = #tpu.pipeline_mode<synchronous>, transform_indices = @transform_1, window_bounds = array<i64: 4, 8, 32>}, {pipeline_mode = #tpu.pipeline_mode<synchronous>, transform_indices = @transform_2, window_bounds = array<i64: 1, 32>}, {pipeline_mode = #tpu.pipeline_mode<synchronous>, transform_indices = @transform_3, window_bounds = array<i64: 1, 32>}, {pipeline_mode = #tpu.pipeline_mode<synchronous>, transform_indices = @transform_4, window_bounds = array<i64: 1, 32>}, {transform_indices = @transform_5, window_bounds = array<i64: 1, 31, 32>}]} {
    %c0 = arith.constant 0 : index
    %c0_0 = arith.constant 0 : index
    %c0_1 = arith.constant 0 : index
    %0 = vector.load %arg1[%c0, %c0_0, %c0_1] : memref<1x32x16xf32, #tpu.memory_space<vmem>>, vector<1x32x16xf32>
    %1 = vector.shape_cast %0 : vector<1x32x16xf32> to vector<32x16xf32>
    %cst = arith.constant 0.000000e+00 : f32
    %2 = vector.broadcast %cst : f32 to vector<31x32xf32>
    %3 = vector.extract_strided_slice %1 {offsets = [0, 0], sizes = [31, 8], strides = [1, 1]} : vector<32x16xf32> to vector<31x8xf32>
    %4 = arith.truncf %3 : vector<31x8xf32> to vector<31x8xbf16>
    %c0_2 = arith.constant 0 : index
    %c0_3 = arith.constant 0 : index
    %c0_4 = arith.constant 0 : index
    %5 = vector.load %arg2[%c0_2, %c0_3, %c0_4] : memref<4x8x32xbf16, #tpu.memory_space<vmem>>, vector<1x8x32xbf16>
    %6 = vector.shape_cast %5 : vector<1x8x32xbf16> to vector<8x32xbf16>
    %cst_5 = arith.constant dense<0.000000e+00> : vector<31x32xf32>
    %7 = tpu.matmul %4, %6, %cst_5 {dimension_numbers = #tpu.dot_dimension_numbers<[1], [0], [0], [1], [0, 0, 1, 1], [], []>} : vector<31x8xbf16>, vector<8x32xbf16>, vector<31x32xf32> -> vector<31x32xf32>
    %8 = arith.addf %2, %7 : vector<31x32xf32>
    %9 = vector.extract_strided_slice %1 {offsets = [0, 8], sizes = [31, 8], strides = [1, 1]} : vector<32x16xf32> to vector<31x8xf32>
    %10 = arith.truncf %9 : vector<31x8xf32> to vector<31x8xbf16>
    %c1 = arith.constant 1 : index
    %c0_6 = arith.constant 0 : index
    %c0_7 = arith.constant 0 : index
    %11 = vector.load %arg2[%c1, %c0_6, %c0_7] : memref<4x8x32xbf16, #tpu.memory_space<vmem>>, vector<1x8x32xbf16>
    %12 = vector.shape_cast %11 : vector<1x8x32xbf16> to vector<8x32xbf16>
    %cst_8 = arith.constant dense<0.000000e+00> : vector<31x32xf32>
    %13 = tpu.matmul %10, %12, %cst_8 {dimension_numbers = #tpu.dot_dimension_numbers<[1], [0], [0], [1], [0, 0, 1, 1], [], []>} : vector<31x8xbf16>, vector<8x32xbf16>, vector<31x32xf32> -> vector<31x32xf32>
    %14 = arith.addf %8, %13 : vector<31x32xf32>
    %15 = vector.extract_strided_slice %1 {offsets = [1, 0], sizes = [31, 8], strides = [1, 1]} : vector<32x16xf32> to vector<31x8xf32>
    %16 = arith.truncf %15 : vector<31x8xf32> to vector<31x8xbf16>
    %c2 = arith.constant 2 : index
    %c0_9 = arith.constant 0 : index
    %c0_10 = arith.constant 0 : index
    %17 = vector.load %arg2[%c2, %c0_9, %c0_10] : memref<4x8x32xbf16, #tpu.memory_space<vmem>>, vector<1x8x32xbf16>
    %18 = vector.shape_cast %17 : vector<1x8x32xbf16> to vector<8x32xbf16>
    %cst_11 = arith.constant dense<0.000000e+00> : vector<31x32xf32>
    %19 = tpu.matmul %16, %18, %cst_11 {dimension_numbers = #tpu.dot_dimension_numbers<[1], [0], [0], [1], [0, 0, 1, 1], [], []>} : vector<31x8xbf16>, vector<8x32xbf16>, vector<31x32xf32> -> vector<31x32xf32>
    %20 = arith.addf %14, %19 : vector<31x32xf32>
    %21 = vector.extract_strided_slice %1 {offsets = [1, 8], sizes = [31, 8], strides = [1, 1]} : vector<32x16xf32> to vector<31x8xf32>
    %22 = arith.truncf %21 : vector<31x8xf32> to vector<31x8xbf16>
    %c3 = arith.constant 3 : index
    %c0_12 = arith.constant 0 : index
    %c0_13 = arith.constant 0 : index
    %23 = vector.load %arg2[%c3, %c0_12, %c0_13] : memref<4x8x32xbf16, #tpu.memory_space<vmem>>, vector<1x8x32xbf16>
    %24 = vector.shape_cast %23 : vector<1x8x32xbf16> to vector<8x32xbf16>
    %cst_14 = arith.constant dense<0.000000e+00> : vector<31x32xf32>
    %25 = tpu.matmul %22, %24, %cst_14 {dimension_numbers = #tpu.dot_dimension_numbers<[1], [0], [0], [1], [0, 0, 1, 1], [], []>} : vector<31x8xbf16>, vector<8x32xbf16>, vector<31x32xf32> -> vector<31x32xf32>
    %26 = arith.addf %20, %25 : vector<31x32xf32>
    %c0_15 = arith.constant 0 : index
    %c0_16 = arith.constant 0 : index
    %27 = vector.load %arg3[%c0_15, %c0_16] : memref<1x32xf32, #tpu.memory_space<vmem>>, vector<1x32xf32>
    %28 = vector.broadcast %27 : vector<1x32xf32> to vector<31x32xf32>
    %29 = arith.addf %26, %28 : vector<31x32xf32>
    %c0_17 = arith.constant 0 : index
    %c0_18 = arith.constant 0 : index
    %30 = vector.load %arg4[%c0_17, %c0_18] : memref<1x32xf32, #tpu.memory_space<vmem>>, vector<1x32xf32>
    %c0_19 = arith.constant 0 : index
    %c0_20 = arith.constant 0 : index
    %31 = vector.load %arg5[%c0_19, %c0_20] : memref<1x32xf32, #tpu.memory_space<vmem>>, vector<1x32xf32>
    %cst_21 = arith.constant dense<0.000000e+00> : vector<31xf32>
    %32 = vector.multi_reduction <add>, %29, %cst_21 [1] : vector<31x32xf32> to vector<31xf32>
    %33 = vector.shape_cast %32 : vector<31xf32> to vector<31x1xf32>
    %cst_22 = arith.constant 3.200000e+01 : f32
    %34 = vector.broadcast %cst_22 : f32 to vector<31x1xf32>
    %35 = arith.divf %33, %34 : vector<31x1xf32>
    %36 = vector.broadcast %35 : vector<31x1xf32> to vector<31x32xf32>
    %37 = arith.subf %29, %36 : vector<31x32xf32>
    %38 = arith.mulf %37, %37 : vector<31x32xf32>
    %cst_23 = arith.constant dense<0.000000e+00> : vector<31xf32>
    %39 = vector.multi_reduction <add>, %38, %cst_23 [1] : vector<31x32xf32> to vector<31xf32>
    %40 = vector.shape_cast %39 : vector<31xf32> to vector<31x1xf32>
    %cst_24 = arith.constant 3.200000e+01 : f32
    %41 = vector.broadcast %cst_24 : f32 to vector<31x1xf32>
    %42 = arith.divf %40, %41 : vector<31x1xf32>
    %cst_25 = arith.constant 9.99999974E-6 : f32
    %43 = vector.broadcast %cst_25 : f32 to vector<31x1xf32>
    %44 = arith.addf %42, %43 : vector<31x1xf32>
    %45 = math.rsqrt %44 : vector<31x1xf32>
    %46 = vector.broadcast %45 : vector<31x1xf32> to vector<31x32xf32>
    %47 = arith.mulf %37, %46 : vector<31x32xf32>
    %48 = vector.broadcast %30 : vector<1x32xf32> to vector<31x32xf32>
    %49 = arith.mulf %47, %48 : vector<31x32xf32>
    %50 = vector.broadcast %31 : vector<1x32xf32> to vector<31x32xf32>
    %51 = arith.addf %49, %50 : vector<31x32xf32>
    %cst_26 = arith.constant 5.000000e-01 : f32
    %52 = vector.broadcast %cst_26 : f32 to vector<31x32xf32>
    %53 = arith.mulf %52, %51 : vector<31x32xf32>
    %cst_27 = arith.constant 0.707106769 : f32
    %54 = vector.broadcast %cst_27 : f32 to vector<31x32xf32>
    %55 = arith.mulf %51, %54 : vector<31x32xf32>
    %56 = math.erf %55 : vector<31x32xf32>
    %cst_28 = arith.constant 1.000000e+00 : f32
    %57 = vector.broadcast %cst_28 : f32 to vector<31x32xf32>
    %58 = arith.addf %57, %56 : vector<31x32xf32>
    %59 = arith.mulf %53, %58 : vector<31x32xf32>
    %c0_29 = arith.constant 0 : index
    %c0_30 = arith.constant 0 : index
    %c0_31 = arith.constant 0 : index
    %60 = vector.load %arg6[%c0_29, %c0_30, %c0_31] : memref<1x31x32xf32, #tpu.memory_space<vmem>>, vector<1x31x32xf32>
    %61 = vector.shape_cast %60 : vector<1x31x32xf32> to vector<31x32xf32>
    %62 = vector.shape_cast %59 : vector<31x32xf32> to vector<1x31x32xf32>
    tpu.vector_store %arg6[%c0_29, %c0_30, %c0_31], %62 {strides = array<i32>} : memref<1x31x32xf32, #tpu.memory_space<vmem>>, vector<1x31x32xf32>,
    return
  }
  func.func @transform_0(%arg0: i32) -> (i32, i32, i32) {
    %c0_i32 = arith.constant 0 : i32
    %c0_i32_0 = arith.constant 0 : i32
    %c0_i32_1 = arith.constant 0 : i32
    return %arg0, %c0_i32, %c0_i32_0 : i32, i32, i32
  }
  func.func @transform_1(%arg0: i32) -> (i32, i32, i32) {
    %c0_i32 = arith.constant 0 : i32
    %c0_i32_0 = arith.constant 0 : i32
    %c0_i32_1 = arith.constant 0 : i32
    %c0_i32_2 = arith.constant 0 : i32
    return %c0_i32, %c0_i32_0, %c0_i32_1 : i32, i32, i32
  }
  func.func @transform_2(%arg0: i32) -> (i32, i32) {
    %c0_i32 = arith.constant 0 : i32
    %c0_i32_0 = arith.constant 0 : i32
    %c0_i32_1 = arith.constant 0 : i32
    return %c0_i32, %c0_i32_0 : i32, i32
  }
  func.func @transform_3(%arg0: i32) -> (i32, i32) {
    %c0_i32 = arith.constant 0 : i32
    %c0_i32_0 = arith.constant 0 : i32
    %c0_i32_1 = arith.constant 0 : i32
    return %c0_i32, %c0_i32_0 : i32, i32
  }
  func.func @transform_4(%arg0: i32) -> (i32, i32) {
    %c0_i32 = arith.constant 0 : i32
    %c0_i32_0 = arith.constant 0 : i32
    %c0_i32_1 = arith.constant 0 : i32
    return %c0_i32, %c0_i32_0 : i32, i32
  }
  func.func @transform_5(%arg0: i32) -> (i32, i32, i32) {
    %c0_i32 = arith.constant 0 : i32
    %c0_i32_0 = arith.constant 0 : i32
    %c0_i32_1 = arith.constant 0 : i32
    return %arg0, %c0_i32, %c0_i32_0 : i32, i32, i32
  }
}

module attributes {stable_mosaic.version = 11 : i64} {
  func.func @_featproj_kernel(%arg0: memref<30x32xf32, #tpu.memory_space<vmem>>, %arg1: memref<1x32xf32, #tpu.memory_space<vmem>>, %arg2: memref<1x32xf32, #tpu.memory_space<vmem>>, %arg3: memref<32x32xbf16, #tpu.memory_space<vmem>>, %arg4: memref<1x32xf32, #tpu.memory_space<vmem>>, %arg5: memref<30x32xf32, #tpu.memory_space<vmem>>) attributes {dimension_semantics = [], scalar_prefetch = 0 : i64, scratch_operands = 0 : i64, tpu.core_type = #tpu.core_type<tc>} {
    %c0 = arith.constant 0 : index
    %c0_0 = arith.constant 0 : index
    %0 = vector.load %arg0[%c0, %c0_0] : memref<30x32xf32, #tpu.memory_space<vmem>>, vector<30x32xf32>
    %c0_1 = arith.constant 0 : index
    %c0_2 = arith.constant 0 : index
    %1 = vector.load %arg1[%c0_1, %c0_2] : memref<1x32xf32, #tpu.memory_space<vmem>>, vector<1x32xf32>
    %c0_3 = arith.constant 0 : index
    %c0_4 = arith.constant 0 : index
    %2 = vector.load %arg2[%c0_3, %c0_4] : memref<1x32xf32, #tpu.memory_space<vmem>>, vector<1x32xf32>
    %cst = arith.constant dense<0.000000e+00> : vector<30xf32>
    %3 = vector.multi_reduction <add>, %0, %cst [1] : vector<30x32xf32> to vector<30xf32>
    %4 = vector.shape_cast %3 : vector<30xf32> to vector<30x1xf32>
    %cst_5 = arith.constant 3.200000e+01 : f32
    %5 = vector.broadcast %cst_5 : f32 to vector<30x1xf32>
    %6 = arith.divf %4, %5 : vector<30x1xf32>
    %7 = vector.broadcast %6 : vector<30x1xf32> to vector<30x32xf32>
    %8 = arith.subf %0, %7 : vector<30x32xf32>
    %9 = arith.mulf %8, %8 : vector<30x32xf32>
    %cst_6 = arith.constant dense<0.000000e+00> : vector<30xf32>
    %10 = vector.multi_reduction <add>, %9, %cst_6 [1] : vector<30x32xf32> to vector<30xf32>
    %11 = vector.shape_cast %10 : vector<30xf32> to vector<30x1xf32>
    %cst_7 = arith.constant 3.200000e+01 : f32
    %12 = vector.broadcast %cst_7 : f32 to vector<30x1xf32>
    %13 = arith.divf %11, %12 : vector<30x1xf32>
    %cst_8 = arith.constant 9.99999974E-6 : f32
    %14 = vector.broadcast %cst_8 : f32 to vector<30x1xf32>
    %15 = arith.addf %13, %14 : vector<30x1xf32>
    %16 = math.rsqrt %15 : vector<30x1xf32>
    %17 = vector.broadcast %16 : vector<30x1xf32> to vector<30x32xf32>
    %18 = arith.mulf %8, %17 : vector<30x32xf32>
    %19 = vector.broadcast %1 : vector<1x32xf32> to vector<30x32xf32>
    %20 = arith.mulf %18, %19 : vector<30x32xf32>
    %21 = vector.broadcast %2 : vector<1x32xf32> to vector<30x32xf32>
    %22 = arith.addf %20, %21 : vector<30x32xf32>
    %23 = arith.truncf %22 : vector<30x32xf32> to vector<30x32xbf16>
    %c0_9 = arith.constant 0 : index
    %c0_10 = arith.constant 0 : index
    %24 = vector.load %arg3[%c0_9, %c0_10] : memref<32x32xbf16, #tpu.memory_space<vmem>>, vector<32x32xbf16>
    %cst_11 = arith.constant dense<0.000000e+00> : vector<30x32xf32>
    %25 = tpu.matmul %23, %24, %cst_11 {dimension_numbers = #tpu.dot_dimension_numbers<[1], [0], [0], [1], [0, 0, 1, 1], [], []>} : vector<30x32xbf16>, vector<32x32xbf16>, vector<30x32xf32> -> vector<30x32xf32>
    %c0_12 = arith.constant 0 : index
    %c0_13 = arith.constant 0 : index
    %26 = vector.load %arg4[%c0_12, %c0_13] : memref<1x32xf32, #tpu.memory_space<vmem>>, vector<1x32xf32>
    %27 = vector.broadcast %26 : vector<1x32xf32> to vector<30x32xf32>
    %28 = arith.addf %25, %27 : vector<30x32xf32>
    %c0_14 = arith.constant 0 : index
    %c0_15 = arith.constant 0 : index
    %29 = vector.load %arg5[%c0_14, %c0_15] : memref<30x32xf32, #tpu.memory_space<vmem>>, vector<30x32xf32>
    tpu.vector_store %arg5[%c0_14, %c0_15], %28 {strides = array<i32>} : memref<30x32xf32, #tpu.memory_space<vmem>>, vector<30x32xf32>,
    return
  }
}

module attributes {stable_mosaic.version = 11 : i64} {
  func.func @_encoder_kernel(%arg0: i32, %arg1: i32, %arg2: memref<1x23x32xf32, #tpu.memory_space<vmem>>, %arg3: memref<8x32x32xbf16, #tpu.memory_space<vmem>>, %arg4: memref<1x32xf32, #tpu.memory_space<vmem>>, %arg5: memref<1x1x32xf32, #tpu.memory_space<vmem>>, %arg6: memref<1x1x32xf32, #tpu.memory_space<vmem>>, %arg7: memref<1x32x96xbf16, #tpu.memory_space<vmem>>, %arg8: memref<1x1x96xf32, #tpu.memory_space<vmem>>, %arg9: memref<1x32x32xbf16, #tpu.memory_space<vmem>>, %arg10: memref<1x1x32xf32, #tpu.memory_space<vmem>>, %arg11: memref<1x1x32xf32, #tpu.memory_space<vmem>>, %arg12: memref<1x1x32xf32, #tpu.memory_space<vmem>>, %arg13: memref<1x32x64xbf16, #tpu.memory_space<vmem>>, %arg14: memref<1x1x64xf32, #tpu.memory_space<vmem>>, %arg15: memref<1x64x32xbf16, #tpu.memory_space<vmem>>, %arg16: memref<1x1x32xf32, #tpu.memory_space<vmem>>, %arg17: memref<1x15x32xf32, #tpu.memory_space<vmem>>) attributes {dimension_semantics = [#tpu.dimension_semantics<parallel>, #tpu.dimension_semantics<arbitrary>], iteration_bounds = array<i64: 2, 2>, scalar_prefetch = 0 : i64, scratch_operands = 0 : i64, tpu.core_type = #tpu.core_type<tc>, window_params = [{transform_indices = @transform_0, window_bounds = array<i64: 1, 23, 32>}, {pipeline_mode = #tpu.pipeline_mode<synchronous>, transform_indices = @transform_1, window_bounds = array<i64: 8, 32, 32>}, {pipeline_mode = #tpu.pipeline_mode<synchronous>, transform_indices = @transform_2, window_bounds = array<i64: 1, 32>}, {transform_indices = @transform_3, window_bounds = array<i64: 1, 1, 32>}, {transform_indices = @transform_4, window_bounds = array<i64: 1, 1, 32>}, {transform_indices = @transform_5, window_bounds = array<i64: 1, 32, 96>}, {transform_indices = @transform_6, window_bounds = array<i64: 1, 1, 96>}, {transform_indices = @transform_7, window_bounds = array<i64: 1, 32, 32>}, {transform_indices = @transform_8, window_bounds = array<i64: 1, 1, 32>}, {transform_indices = @transform_9, window_bounds = array<i64: 1, 1, 32>}, {transform_indices = @transform_10, window_bounds = array<i64: 1, 1, 32>}, {transform_indices = @transform_11, window_bounds = array<i64: 1, 32, 64>}, {transform_indices = @transform_12, window_bounds = array<i64: 1, 1, 64>}, {transform_indices = @transform_13, window_bounds = array<i64: 1, 64, 32>}, {transform_indices = @transform_14, window_bounds = array<i64: 1, 1, 32>}, {transform_indices = @transform_15, window_bounds = array<i64: 1, 15, 32>}]} {
    %c0_i32 = arith.constant 0 : i32
    %0 = arith.cmpi eq, %arg1, %c0_i32 : i32
    %1 = arith.extui %0 : i1 to i32
    %c0_i32_0 = arith.constant 0 : i32
    %2 = arith.cmpi ne, %1, %c0_i32_0 : i32
    scf.if %2 {
      %c0_74 = arith.constant 0 : index
      %c0_75 = arith.constant 0 : index
      %c0_76 = arith.constant 0 : index
      %175 = vector.load %arg2[%c0_74, %c0_75, %c0_76] : memref<1x23x32xf32, #tpu.memory_space<vmem>>, vector<1x23x32xf32>
      %176 = vector.shape_cast %175 : vector<1x23x32xf32> to vector<23x32xf32>
      %cst_77 = arith.constant 0.000000e+00 : f32
      %177 = vector.broadcast %cst_77 : f32 to vector<15x32xf32>
      %178 = vector.extract_strided_slice %176 {offsets = [0, 0], sizes = [15, 32], strides = [1, 1]} : vector<23x32xf32> to vector<15x32xf32>
      %179 = arith.truncf %178 : vector<15x32xf32> to vector<15x32xbf16>
      %c0_78 = arith.constant 0 : index
      %c0_79 = arith.constant 0 : index
      %c0_80 = arith.constant 0 : index
      %180 = vector.load %arg3[%c0_78, %c0_79, %c0_80] : memref<8x32x32xbf16, #tpu.memory_space<vmem>>, vector<1x32x32xbf16>
      %181 = vector.shape_cast %180 : vector<1x32x32xbf16> to vector<32x32xbf16>
      %cst_81 = arith.constant dense<0.000000e+00> : vector<15x32xf32>
      %182 = tpu.matmul %179, %181, %cst_81 {dimension_numbers = #tpu.dot_dimension_numbers<[1], [0], [0], [1], [0, 0, 1, 1], [], []>} : vector<15x32xbf16>, vector<32x32xbf16>, vector<15x32xf32> -> vector<15x32xf32>
      %183 = arith.addf %177, %182 : vector<15x32xf32>
      %184 = vector.extract_strided_slice %176 {offsets = [1, 0], sizes = [15, 32], strides = [1, 1]} : vector<23x32xf32> to vector<15x32xf32>
      %185 = arith.truncf %184 : vector<15x32xf32> to vector<15x32xbf16>
      %c1 = arith.constant 1 : index
      %c0_82 = arith.constant 0 : index
      %c0_83 = arith.constant 0 : index
      %186 = vector.load %arg3[%c1, %c0_82, %c0_83] : memref<8x32x32xbf16, #tpu.memory_space<vmem>>, vector<1x32x32xbf16>
      %187 = vector.shape_cast %186 : vector<1x32x32xbf16> to vector<32x32xbf16>
      %cst_84 = arith.constant dense<0.000000e+00> : vector<15x32xf32>
      %188 = tpu.matmul %185, %187, %cst_84 {dimension_numbers = #tpu.dot_dimension_numbers<[1], [0], [0], [1], [0, 0, 1, 1], [], []>} : vector<15x32xbf16>, vector<32x32xbf16>, vector<15x32xf32> -> vector<15x32xf32>
      %189 = arith.addf %183, %188 : vector<15x32xf32>
      %190 = vector.extract_strided_slice %176 {offsets = [2, 0], sizes = [15, 32], strides = [1, 1]} : vector<23x32xf32> to vector<15x32xf32>
      %191 = arith.truncf %190 : vector<15x32xf32> to vector<15x32xbf16>
      %c2 = arith.constant 2 : index
      %c0_85 = arith.constant 0 : index
      %c0_86 = arith.constant 0 : index
      %192 = vector.load %arg3[%c2, %c0_85, %c0_86] : memref<8x32x32xbf16, #tpu.memory_space<vmem>>, vector<1x32x32xbf16>
      %193 = vector.shape_cast %192 : vector<1x32x32xbf16> to vector<32x32xbf16>
      %cst_87 = arith.constant dense<0.000000e+00> : vector<15x32xf32>
      %194 = tpu.matmul %191, %193, %cst_87 {dimension_numbers = #tpu.dot_dimension_numbers<[1], [0], [0], [1], [0, 0, 1, 1], [], []>} : vector<15x32xbf16>, vector<32x32xbf16>, vector<15x32xf32> -> vector<15x32xf32>
      %195 = arith.addf %189, %194 : vector<15x32xf32>
      %196 = vector.extract_strided_slice %176 {offsets = [3, 0], sizes = [15, 32], strides = [1, 1]} : vector<23x32xf32> to vector<15x32xf32>
      %197 = arith.truncf %196 : vector<15x32xf32> to vector<15x32xbf16>
      %c3 = arith.constant 3 : index
      %c0_88 = arith.constant 0 : index
      %c0_89 = arith.constant 0 : index
      %198 = vector.load %arg3[%c3, %c0_88, %c0_89] : memref<8x32x32xbf16, #tpu.memory_space<vmem>>, vector<1x32x32xbf16>
      %199 = vector.shape_cast %198 : vector<1x32x32xbf16> to vector<32x32xbf16>
      %cst_90 = arith.constant dense<0.000000e+00> : vector<15x32xf32>
      %200 = tpu.matmul %197, %199, %cst_90 {dimension_numbers = #tpu.dot_dimension_numbers<[1], [0], [0], [1], [0, 0, 1, 1], [], []>} : vector<15x32xbf16>, vector<32x32xbf16>, vector<15x32xf32> -> vector<15x32xf32>
      %201 = arith.addf %195, %200 : vector<15x32xf32>
      %202 = vector.extract_strided_slice %176 {offsets = [4, 0], sizes = [15, 32], strides = [1, 1]} : vector<23x32xf32> to vector<15x32xf32>
      %203 = arith.truncf %202 : vector<15x32xf32> to vector<15x32xbf16>
      %c4 = arith.constant 4 : index
      %c0_91 = arith.constant 0 : index
      %c0_92 = arith.constant 0 : index
      %204 = vector.load %arg3[%c4, %c0_91, %c0_92] : memref<8x32x32xbf16, #tpu.memory_space<vmem>>, vector<1x32x32xbf16>
      %205 = vector.shape_cast %204 : vector<1x32x32xbf16> to vector<32x32xbf16>
      %cst_93 = arith.constant dense<0.000000e+00> : vector<15x32xf32>
      %206 = tpu.matmul %203, %205, %cst_93 {dimension_numbers = #tpu.dot_dimension_numbers<[1], [0], [0], [1], [0, 0, 1, 1], [], []>} : vector<15x32xbf16>, vector<32x32xbf16>, vector<15x32xf32> -> vector<15x32xf32>
      %207 = arith.addf %201, %206 : vector<15x32xf32>
      %208 = vector.extract_strided_slice %176 {offsets = [5, 0], sizes = [15, 32], strides = [1, 1]} : vector<23x32xf32> to vector<15x32xf32>
      %209 = arith.truncf %208 : vector<15x32xf32> to vector<15x32xbf16>
      %c5 = arith.constant 5 : index
      %c0_94 = arith.constant 0 : index
      %c0_95 = arith.constant 0 : index
      %210 = vector.load %arg3[%c5, %c0_94, %c0_95] : memref<8x32x32xbf16, #tpu.memory_space<vmem>>, vector<1x32x32xbf16>
      %211 = vector.shape_cast %210 : vector<1x32x32xbf16> to vector<32x32xbf16>
      %cst_96 = arith.constant dense<0.000000e+00> : vector<15x32xf32>
      %212 = tpu.matmul %209, %211, %cst_96 {dimension_numbers = #tpu.dot_dimension_numbers<[1], [0], [0], [1], [0, 0, 1, 1], [], []>} : vector<15x32xbf16>, vector<32x32xbf16>, vector<15x32xf32> -> vector<15x32xf32>
      %213 = arith.addf %207, %212 : vector<15x32xf32>
      %214 = vector.extract_strided_slice %176 {offsets = [6, 0], sizes = [15, 32], strides = [1, 1]} : vector<23x32xf32> to vector<15x32xf32>
      %215 = arith.truncf %214 : vector<15x32xf32> to vector<15x32xbf16>
      %c6 = arith.constant 6 : index
      %c0_97 = arith.constant 0 : index
      %c0_98 = arith.constant 0 : index
      %216 = vector.load %arg3[%c6, %c0_97, %c0_98] : memref<8x32x32xbf16, #tpu.memory_space<vmem>>, vector<1x32x32xbf16>
      %217 = vector.shape_cast %216 : vector<1x32x32xbf16> to vector<32x32xbf16>
      %cst_99 = arith.constant dense<0.000000e+00> : vector<15x32xf32>
      %218 = tpu.matmul %215, %217, %cst_99 {dimension_numbers = #tpu.dot_dimension_numbers<[1], [0], [0], [1], [0, 0, 1, 1], [], []>} : vector<15x32xbf16>, vector<32x32xbf16>, vector<15x32xf32> -> vector<15x32xf32>
      %219 = arith.addf %213, %218 : vector<15x32xf32>
      %220 = vector.extract_strided_slice %176 {offsets = [7, 0], sizes = [15, 32], strides = [1, 1]} : vector<23x32xf32> to vector<15x32xf32>
      %221 = arith.truncf %220 : vector<15x32xf32> to vector<15x32xbf16>
      %c7 = arith.constant 7 : index
      %c0_100 = arith.constant 0 : index
      %c0_101 = arith.constant 0 : index
      %222 = vector.load %arg3[%c7, %c0_100, %c0_101] : memref<8x32x32xbf16, #tpu.memory_space<vmem>>, vector<1x32x32xbf16>
      %223 = vector.shape_cast %222 : vector<1x32x32xbf16> to vector<32x32xbf16>
      %cst_102 = arith.constant dense<0.000000e+00> : vector<15x32xf32>
      %224 = tpu.matmul %221, %223, %cst_102 {dimension_numbers = #tpu.dot_dimension_numbers<[1], [0], [0], [1], [0, 0, 1, 1], [], []>} : vector<15x32xbf16>, vector<32x32xbf16>, vector<15x32xf32> -> vector<15x32xf32>
      %225 = arith.addf %219, %224 : vector<15x32xf32>
      %c0_103 = arith.constant 0 : index
      %c0_104 = arith.constant 0 : index
      %226 = vector.load %arg4[%c0_103, %c0_104] : memref<1x32xf32, #tpu.memory_space<vmem>>, vector<1x32xf32>
      %227 = vector.broadcast %226 : vector<1x32xf32> to vector<15x32xf32>
      %228 = arith.addf %225, %227 : vector<15x32xf32>
      %229 = vector.extract_strided_slice %176 {offsets = [4, 0], sizes = [15, 32], strides = [1, 1]} : vector<23x32xf32> to vector<15x32xf32>
      %cst_105 = arith.constant 5.000000e-01 : f32
      %230 = vector.broadcast %cst_105 : f32 to vector<15x32xf32>
      %231 = arith.mulf %230, %228 : vector<15x32xf32>
      %cst_106 = arith.constant 0.707106769 : f32
      %232 = vector.broadcast %cst_106 : f32 to vector<15x32xf32>
      %233 = arith.mulf %228, %232 : vector<15x32xf32>
      %234 = math.erf %233 : vector<15x32xf32>
      %cst_107 = arith.constant 1.000000e+00 : f32
      %235 = vector.broadcast %cst_107 : f32 to vector<15x32xf32>
      %236 = arith.addf %235, %234 : vector<15x32xf32>
      %237 = arith.mulf %231, %236 : vector<15x32xf32>
      %238 = arith.addf %229, %237 : vector<15x32xf32>
      %c0_108 = arith.constant 0 : index
      %c0_109 = arith.constant 0 : index
      %c0_110 = arith.constant 0 : index
      %239 = vector.load %arg17[%c0_108, %c0_109, %c0_110] : memref<1x15x32xf32, #tpu.memory_space<vmem>>, vector<1x15x32xf32>
      %240 = vector.shape_cast %239 : vector<1x15x32xf32> to vector<15x32xf32>
      %241 = vector.shape_cast %238 : vector<15x32xf32> to vector<1x15x32xf32>
      tpu.vector_store %arg17[%c0_108, %c0_109, %c0_110], %241 {strides = array<i32>} : memref<1x15x32xf32, #tpu.memory_space<vmem>>, vector<1x15x32xf32>,
    } else {
    }
    %c0 = arith.constant 0 : index
    %c0_1 = arith.constant 0 : index
    %c0_2 = arith.constant 0 : index
    %3 = vector.load %arg17[%c0, %c0_1, %c0_2] : memref<1x15x32xf32, #tpu.memory_space<vmem>>, vector<1x15x32xf32>
    %4 = vector.shape_cast %3 : vector<1x15x32xf32> to vector<15x32xf32>
    %c0_3 = arith.constant 0 : index
    %c0_4 = arith.constant 0 : index
    %c0_5 = arith.constant 0 : index
    %5 = vector.load %arg5[%c0_3, %c0_4, %c0_5] : memref<1x1x32xf32, #tpu.memory_space<vmem>>, vector<1x1x32xf32>
    %6 = vector.shape_cast %5 : vector<1x1x32xf32> to vector<1x32xf32>
    %c0_6 = arith.constant 0 : index
    %c0_7 = arith.constant 0 : index
    %c0_8 = arith.constant 0 : index
    %7 = vector.load %arg6[%c0_6, %c0_7, %c0_8] : memref<1x1x32xf32, #tpu.memory_space<vmem>>, vector<1x1x32xf32>
    %8 = vector.shape_cast %7 : vector<1x1x32xf32> to vector<1x32xf32>
    %cst = arith.constant dense<0.000000e+00> : vector<15xf32>
    %9 = vector.multi_reduction <add>, %4, %cst [1] : vector<15x32xf32> to vector<15xf32>
    %10 = vector.shape_cast %9 : vector<15xf32> to vector<15x1xf32>
    %cst_9 = arith.constant 3.200000e+01 : f32
    %11 = vector.broadcast %cst_9 : f32 to vector<15x1xf32>
    %12 = arith.divf %10, %11 : vector<15x1xf32>
    %13 = vector.broadcast %12 : vector<15x1xf32> to vector<15x32xf32>
    %14 = arith.subf %4, %13 : vector<15x32xf32>
    %15 = arith.mulf %14, %14 : vector<15x32xf32>
    %cst_10 = arith.constant dense<0.000000e+00> : vector<15xf32>
    %16 = vector.multi_reduction <add>, %15, %cst_10 [1] : vector<15x32xf32> to vector<15xf32>
    %17 = vector.shape_cast %16 : vector<15xf32> to vector<15x1xf32>
    %cst_11 = arith.constant 3.200000e+01 : f32
    %18 = vector.broadcast %cst_11 : f32 to vector<15x1xf32>
    %19 = arith.divf %17, %18 : vector<15x1xf32>
    %cst_12 = arith.constant 9.99999974E-6 : f32
    %20 = vector.broadcast %cst_12 : f32 to vector<15x1xf32>
    %21 = arith.addf %19, %20 : vector<15x1xf32>
    %22 = math.rsqrt %21 : vector<15x1xf32>
    %23 = vector.broadcast %22 : vector<15x1xf32> to vector<15x32xf32>
    %24 = arith.mulf %14, %23 : vector<15x32xf32>
    %25 = vector.broadcast %6 : vector<1x32xf32> to vector<15x32xf32>
    %26 = arith.mulf %24, %25 : vector<15x32xf32>
    %27 = vector.broadcast %8 : vector<1x32xf32> to vector<15x32xf32>
    %28 = arith.addf %26, %27 : vector<15x32xf32>
    %29 = arith.truncf %28 : vector<15x32xf32> to vector<15x32xbf16>
    %c0_13 = arith.constant 0 : index
    %c0_14 = arith.constant 0 : index
    %c0_15 = arith.constant 0 : index
    %30 = vector.load %arg7[%c0_13, %c0_14, %c0_15] : memref<1x32x96xbf16, #tpu.memory_space<vmem>>, vector<1x32x96xbf16>
    %31 = vector.shape_cast %30 : vector<1x32x96xbf16> to vector<32x96xbf16>
    %cst_16 = arith.constant dense<0.000000e+00> : vector<15x96xf32>
    %32 = tpu.matmul %29, %31, %cst_16 {dimension_numbers = #tpu.dot_dimension_numbers<[1], [0], [0], [1], [0, 0, 1, 1], [], []>} : vector<15x32xbf16>, vector<32x96xbf16>, vector<15x96xf32> -> vector<15x96xf32>
    %c0_17 = arith.constant 0 : index
    %c0_18 = arith.constant 0 : index
    %c0_19 = arith.constant 0 : index
    %33 = vector.load %arg8[%c0_17, %c0_18, %c0_19] : memref<1x1x96xf32, #tpu.memory_space<vmem>>, vector<1x1x96xf32>
    %34 = vector.shape_cast %33 : vector<1x1x96xf32> to vector<1x96xf32>
    %35 = vector.broadcast %34 : vector<1x96xf32> to vector<15x96xf32>
    %36 = arith.addf %32, %35 : vector<15x96xf32>
    %37 = vector.extract_strided_slice %36 {offsets = [0, 0], sizes = [15, 8], strides = [1, 1]} : vector<15x96xf32> to vector<15x8xf32>
    %38 = vector.extract_strided_slice %36 {offsets = [0, 32], sizes = [15, 8], strides = [1, 1]} : vector<15x96xf32> to vector<15x8xf32>
    %39 = vector.extract_strided_slice %36 {offsets = [0, 64], sizes = [15, 8], strides = [1, 1]} : vector<15x96xf32> to vector<15x8xf32>
    %40 = arith.truncf %37 : vector<15x8xf32> to vector<15x8xbf16>
    %41 = arith.truncf %38 : vector<15x8xf32> to vector<15x8xbf16>
    %cst_20 = arith.constant dense<0.000000e+00> : vector<15x15xf32>
    %42 = tpu.matmul %40, %41, %cst_20 {dimension_numbers = #tpu.dot_dimension_numbers<[1], [1], [0], [0], [0, 0, 1, 0], [], []>} : vector<15x8xbf16>, vector<15x8xbf16>, vector<15x15xf32> -> vector<15x15xf32>
    %cst_21 = arith.constant dense<0xFF800000> : vector<15xf32>
    %43 = vector.multi_reduction <maximumf>, %42, %cst_21 [1] : vector<15x15xf32> to vector<15xf32>
    %44 = vector.shape_cast %43 : vector<15xf32> to vector<15x1xf32>
    %45 = vector.broadcast %44 : vector<15x1xf32> to vector<15x15xf32>
    %46 = arith.subf %42, %45 : vector<15x15xf32>
    %47 = math.exp %46 : vector<15x15xf32>
    %cst_22 = arith.constant dense<0.000000e+00> : vector<15xf32>
    %48 = vector.multi_reduction <add>, %47, %cst_22 [1] : vector<15x15xf32> to vector<15xf32>
    %49 = vector.shape_cast %48 : vector<15xf32> to vector<15x1xf32>
    %50 = tpu.reciprocal %49 {approx = true} : vector<15x1xf32> -> vector<15x1xf32>
    %51 = vector.broadcast %50 : vector<15x1xf32> to vector<15x15xf32>
    %52 = arith.mulf %47, %51 : vector<15x15xf32>
    %53 = arith.truncf %52 : vector<15x15xf32> to vector<15x15xbf16>
    %54 = arith.truncf %39 : vector<15x8xf32> to vector<15x8xbf16>
    %cst_23 = arith.constant dense<0.000000e+00> : vector<15x8xf32>
    %55 = tpu.matmul %53, %54, %cst_23 {dimension_numbers = #tpu.dot_dimension_numbers<[1], [0], [0], [1], [0, 0, 1, 1], [], []>} : vector<15x15xbf16>, vector<15x8xbf16>, vector<15x8xf32> -> vector<15x8xf32>
    %56 = vector.extract_strided_slice %36 {offsets = [0, 8], sizes = [15, 8], strides = [1, 1]} : vector<15x96xf32> to vector<15x8xf32>
    %57 = vector.extract_strided_slice %36 {offsets = [0, 40], sizes = [15, 8], strides = [1, 1]} : vector<15x96xf32> to vector<15x8xf32>
    %58 = vector.extract_strided_slice %36 {offsets = [0, 72], sizes = [15, 8], strides = [1, 1]} : vector<15x96xf32> to vector<15x8xf32>
    %59 = arith.truncf %56 : vector<15x8xf32> to vector<15x8xbf16>
    %60 = arith.truncf %57 : vector<15x8xf32> to vector<15x8xbf16>
    %cst_24 = arith.constant dense<0.000000e+00> : vector<15x15xf32>
    %61 = tpu.matmul %59, %60, %cst_24 {dimension_numbers = #tpu.dot_dimension_numbers<[1], [1], [0], [0], [0, 0, 1, 0], [], []>} : vector<15x8xbf16>, vector<15x8xbf16>, vector<15x15xf32> -> vector<15x15xf32>
    %cst_25 = arith.constant dense<0xFF800000> : vector<15xf32>
    %62 = vector.multi_reduction <maximumf>, %61, %cst_25 [1] : vector<15x15xf32> to vector<15xf32>
    %63 = vector.shape_cast %62 : vector<15xf32> to vector<15x1xf32>
    %64 = vector.broadcast %63 : vector<15x1xf32> to vector<15x15xf32>
    %65 = arith.subf %61, %64 : vector<15x15xf32>
    %66 = math.exp %65 : vector<15x15xf32>
    %cst_26 = arith.constant dense<0.000000e+00> : vector<15xf32>
    %67 = vector.multi_reduction <add>, %66, %cst_26 [1] : vector<15x15xf32> to vector<15xf32>
    %68 = vector.shape_cast %67 : vector<15xf32> to vector<15x1xf32>
    %69 = tpu.reciprocal %68 {approx = true} : vector<15x1xf32> -> vector<15x1xf32>
    %70 = vector.broadcast %69 : vector<15x1xf32> to vector<15x15xf32>
    %71 = arith.mulf %66, %70 : vector<15x15xf32>
    %72 = arith.truncf %71 : vector<15x15xf32> to vector<15x15xbf16>
    %73 = arith.truncf %58 : vector<15x8xf32> to vector<15x8xbf16>
    %cst_27 = arith.constant dense<0.000000e+00> : vector<15x8xf32>
    %74 = tpu.matmul %72, %73, %cst_27 {dimension_numbers = #tpu.dot_dimension_numbers<[1], [0], [0], [1], [0, 0, 1, 1], [], []>} : vector<15x15xbf16>, vector<15x8xbf16>, vector<15x8xf32> -> vector<15x8xf32>
    %75 = vector.extract_strided_slice %36 {offsets = [0, 16], sizes = [15, 8], strides = [1, 1]} : vector<15x96xf32> to vector<15x8xf32>
    %76 = vector.extract_strided_slice %36 {offsets = [0, 48], sizes = [15, 8], strides = [1, 1]} : vector<15x96xf32> to vector<15x8xf32>
    %77 = vector.extract_strided_slice %36 {offsets = [0, 80], sizes = [15, 8], strides = [1, 1]} : vector<15x96xf32> to vector<15x8xf32>
    %78 = arith.truncf %75 : vector<15x8xf32> to vector<15x8xbf16>
    %79 = arith.truncf %76 : vector<15x8xf32> to vector<15x8xbf16>
    %cst_28 = arith.constant dense<0.000000e+00> : vector<15x15xf32>
    %80 = tpu.matmul %78, %79, %cst_28 {dimension_numbers = #tpu.dot_dimension_numbers<[1], [1], [0], [0], [0, 0, 1, 0], [], []>} : vector<15x8xbf16>, vector<15x8xbf16>, vector<15x15xf32> -> vector<15x15xf32>
    %cst_29 = arith.constant dense<0xFF800000> : vector<15xf32>
    %81 = vector.multi_reduction <maximumf>, %80, %cst_29 [1] : vector<15x15xf32> to vector<15xf32>
    %82 = vector.shape_cast %81 : vector<15xf32> to vector<15x1xf32>
    %83 = vector.broadcast %82 : vector<15x1xf32> to vector<15x15xf32>
    %84 = arith.subf %80, %83 : vector<15x15xf32>
    %85 = math.exp %84 : vector<15x15xf32>
    %cst_30 = arith.constant dense<0.000000e+00> : vector<15xf32>
    %86 = vector.multi_reduction <add>, %85, %cst_30 [1] : vector<15x15xf32> to vector<15xf32>
    %87 = vector.shape_cast %86 : vector<15xf32> to vector<15x1xf32>
    %88 = tpu.reciprocal %87 {approx = true} : vector<15x1xf32> -> vector<15x1xf32>
    %89 = vector.broadcast %88 : vector<15x1xf32> to vector<15x15xf32>
    %90 = arith.mulf %85, %89 : vector<15x15xf32>
    %91 = arith.truncf %90 : vector<15x15xf32> to vector<15x15xbf16>
    %92 = arith.truncf %77 : vector<15x8xf32> to vector<15x8xbf16>
    %cst_31 = arith.constant dense<0.000000e+00> : vector<15x8xf32>
    %93 = tpu.matmul %91, %92, %cst_31 {dimension_numbers = #tpu.dot_dimension_numbers<[1], [0], [0], [1], [0, 0, 1, 1], [], []>} : vector<15x15xbf16>, vector<15x8xbf16>, vector<15x8xf32> -> vector<15x8xf32>
    %94 = vector.extract_strided_slice %36 {offsets = [0, 24], sizes = [15, 8], strides = [1, 1]} : vector<15x96xf32> to vector<15x8xf32>
    %95 = vector.extract_strided_slice %36 {offsets = [0, 56], sizes = [15, 8], strides = [1, 1]} : vector<15x96xf32> to vector<15x8xf32>
    %96 = vector.extract_strided_slice %36 {offsets = [0, 88], sizes = [15, 8], strides = [1, 1]} : vector<15x96xf32> to vector<15x8xf32>
    %97 = arith.truncf %94 : vector<15x8xf32> to vector<15x8xbf16>
    %98 = arith.truncf %95 : vector<15x8xf32> to vector<15x8xbf16>
    %cst_32 = arith.constant dense<0.000000e+00> : vector<15x15xf32>
    %99 = tpu.matmul %97, %98, %cst_32 {dimension_numbers = #tpu.dot_dimension_numbers<[1], [1], [0], [0], [0, 0, 1, 0], [], []>} : vector<15x8xbf16>, vector<15x8xbf16>, vector<15x15xf32> -> vector<15x15xf32>
    %cst_33 = arith.constant dense<0xFF800000> : vector<15xf32>
    %100 = vector.multi_reduction <maximumf>, %99, %cst_33 [1] : vector<15x15xf32> to vector<15xf32>
    %101 = vector.shape_cast %100 : vector<15xf32> to vector<15x1xf32>
    %102 = vector.broadcast %101 : vector<15x1xf32> to vector<15x15xf32>
    %103 = arith.subf %99, %102 : vector<15x15xf32>
    %104 = math.exp %103 : vector<15x15xf32>
    %cst_34 = arith.constant dense<0.000000e+00> : vector<15xf32>
    %105 = vector.multi_reduction <add>, %104, %cst_34 [1] : vector<15x15xf32> to vector<15xf32>
    %106 = vector.shape_cast %105 : vector<15xf32> to vector<15x1xf32>
    %107 = tpu.reciprocal %106 {approx = true} : vector<15x1xf32> -> vector<15x1xf32>
    %108 = vector.broadcast %107 : vector<15x1xf32> to vector<15x15xf32>
    %109 = arith.mulf %104, %108 : vector<15x15xf32>
    %110 = arith.truncf %109 : vector<15x15xf32> to vector<15x15xbf16>
    %111 = arith.truncf %96 : vector<15x8xf32> to vector<15x8xbf16>
    %cst_35 = arith.constant dense<0.000000e+00> : vector<15x8xf32>
    %112 = tpu.matmul %110, %111, %cst_35 {dimension_numbers = #tpu.dot_dimension_numbers<[1], [0], [0], [1], [0, 0, 1, 1], [], []>} : vector<15x15xbf16>, vector<15x8xbf16>, vector<15x8xf32> -> vector<15x8xf32>
    %113 = tpu.concatenate %55, %74, %93, %112 in 1 : vector<15x8xf32>, vector<15x8xf32>, vector<15x8xf32>, vector<15x8xf32> -> vector<15x32xf32>
    %114 = arith.truncf %113 : vector<15x32xf32> to vector<15x32xbf16>
    %c0_36 = arith.constant 0 : index
    %c0_37 = arith.constant 0 : index
    %c0_38 = arith.constant 0 : index
    %115 = vector.load %arg9[%c0_36, %c0_37, %c0_38] : memref<1x32x32xbf16, #tpu.memory_space<vmem>>, vector<1x32x32xbf16>
    %116 = vector.shape_cast %115 : vector<1x32x32xbf16> to vector<32x32xbf16>
    %cst_39 = arith.constant dense<0.000000e+00> : vector<15x32xf32>
    %117 = tpu.matmul %114, %116, %cst_39 {dimension_numbers = #tpu.dot_dimension_numbers<[1], [0], [0], [1], [0, 0, 1, 1], [], []>} : vector<15x32xbf16>, vector<32x32xbf16>, vector<15x32xf32> -> vector<15x32xf32>
    %c0_40 = arith.constant 0 : index
    %c0_41 = arith.constant 0 : index
    %c0_42 = arith.constant 0 : index
    %118 = vector.load %arg10[%c0_40, %c0_41, %c0_42] : memref<1x1x32xf32, #tpu.memory_space<vmem>>, vector<1x1x32xf32>
    %119 = vector.shape_cast %118 : vector<1x1x32xf32> to vector<1x32xf32>
    %120 = vector.broadcast %119 : vector<1x32xf32> to vector<15x32xf32>
    %121 = arith.addf %117, %120 : vector<15x32xf32>
    %122 = arith.addf %4, %121 : vector<15x32xf32>
    %c0_43 = arith.constant 0 : index
    %c0_44 = arith.constant 0 : index
    %c0_45 = arith.constant 0 : index
    %123 = vector.load %arg11[%c0_43, %c0_44, %c0_45] : memref<1x1x32xf32, #tpu.memory_space<vmem>>, vector<1x1x32xf32>
    %124 = vector.shape_cast %123 : vector<1x1x32xf32> to vector<1x32xf32>
    %c0_46 = arith.constant 0 : index
    %c0_47 = arith.constant 0 : index
    %c0_48 = arith.constant 0 : index
    %125 = vector.load %arg12[%c0_46, %c0_47, %c0_48] : memref<1x1x32xf32, #tpu.memory_space<vmem>>, vector<1x1x32xf32>
    %126 = vector.shape_cast %125 : vector<1x1x32xf32> to vector<1x32xf32>
    %cst_49 = arith.constant dense<0.000000e+00> : vector<15xf32>
    %127 = vector.multi_reduction <add>, %122, %cst_49 [1] : vector<15x32xf32> to vector<15xf32>
    %128 = vector.shape_cast %127 : vector<15xf32> to vector<15x1xf32>
    %cst_50 = arith.constant 3.200000e+01 : f32
    %129 = vector.broadcast %cst_50 : f32 to vector<15x1xf32>
    %130 = arith.divf %128, %129 : vector<15x1xf32>
    %131 = vector.broadcast %130 : vector<15x1xf32> to vector<15x32xf32>
    %132 = arith.subf %122, %131 : vector<15x32xf32>
    %133 = arith.mulf %132, %132 : vector<15x32xf32>
    %cst_51 = arith.constant dense<0.000000e+00> : vector<15xf32>
    %134 = vector.multi_reduction <add>, %133, %cst_51 [1] : vector<15x32xf32> to vector<15xf32>
    %135 = vector.shape_cast %134 : vector<15xf32> to vector<15x1xf32>
    %cst_52 = arith.constant 3.200000e+01 : f32
    %136 = vector.broadcast %cst_52 : f32 to vector<15x1xf32>
    %137 = arith.divf %135, %136 : vector<15x1xf32>
    %cst_53 = arith.constant 9.99999974E-6 : f32
    %138 = vector.broadcast %cst_53 : f32 to vector<15x1xf32>
    %139 = arith.addf %137, %138 : vector<15x1xf32>
    %140 = math.rsqrt %139 : vector<15x1xf32>
    %141 = vector.broadcast %140 : vector<15x1xf32> to vector<15x32xf32>
    %142 = arith.mulf %132, %141 : vector<15x32xf32>
    %143 = vector.broadcast %124 : vector<1x32xf32> to vector<15x32xf32>
    %144 = arith.mulf %142, %143 : vector<15x32xf32>
    %145 = vector.broadcast %126 : vector<1x32xf32> to vector<15x32xf32>
    %146 = arith.addf %144, %145 : vector<15x32xf32>
    %147 = arith.truncf %146 : vector<15x32xf32> to vector<15x32xbf16>
    %c0_54 = arith.constant 0 : index
    %c0_55 = arith.constant 0 : index
    %c0_56 = arith.constant 0 : index
    %148 = vector.load %arg13[%c0_54, %c0_55, %c0_56] : memref<1x32x64xbf16, #tpu.memory_space<vmem>>, vector<1x32x64xbf16>
    %149 = vector.shape_cast %148 : vector<1x32x64xbf16> to vector<32x64xbf16>
    %cst_57 = arith.constant dense<0.000000e+00> : vector<15x64xf32>
    %150 = tpu.matmul %147, %149, %cst_57 {dimension_numbers = #tpu.dot_dimension_numbers<[1], [0], [0], [1], [0, 0, 1, 1], [], []>} : vector<15x32xbf16>, vector<32x64xbf16>, vector<15x64xf32> -> vector<15x64xf32>
    %c0_58 = arith.constant 0 : index
    %c0_59 = arith.constant 0 : index
    %c0_60 = arith.constant 0 : index
    %151 = vector.load %arg14[%c0_58, %c0_59, %c0_60] : memref<1x1x64xf32, #tpu.memory_space<vmem>>, vector<1x1x64xf32>
    %152 = vector.shape_cast %151 : vector<1x1x64xf32> to vector<1x64xf32>
    %153 = vector.broadcast %152 : vector<1x64xf32> to vector<15x64xf32>
    %154 = arith.addf %150, %153 : vector<15x64xf32>
    %cst_61 = arith.constant 5.000000e-01 : f32
    %155 = vector.broadcast %cst_61 : f32 to vector<15x64xf32>
    %156 = arith.mulf %155, %154 : vector<15x64xf32>
    %cst_62 = arith.constant 0.707106769 : f32
    %157 = vector.broadcast %cst_62 : f32 to vector<15x64xf32>
    %158 = arith.mulf %154, %157 : vector<15x64xf32>
    %159 = math.erf %158 : vector<15x64xf32>
    %cst_63 = arith.constant 1.000000e+00 : f32
    %160 = vector.broadcast %cst_63 : f32 to vector<15x64xf32>
    %161 = arith.addf %160, %159 : vector<15x64xf32>
    %162 = arith.mulf %156, %161 : vector<15x64xf32>
    %163 = arith.truncf %162 : vector<15x64xf32> to vector<15x64xbf16>
    %c0_64 = arith.constant 0 : index
    %c0_65 = arith.constant 0 : index
    %c0_66 = arith.constant 0 : index
    %164 = vector.load %arg15[%c0_64, %c0_65, %c0_66] : memref<1x64x32xbf16, #tpu.memory_space<vmem>>, vector<1x64x32xbf16>
    %165 = vector.shape_cast %164 : vector<1x64x32xbf16> to vector<64x32xbf16>
    %cst_67 = arith.constant dense<0.000000e+00> : vector<15x32xf32>
    %166 = tpu.matmul %163, %165, %cst_67 {dimension_numbers = #tpu.dot_dimension_numbers<[1], [0], [0], [1], [0, 0, 1, 1], [], []>} : vector<15x64xbf16>, vector<64x32xbf16>, vector<15x32xf32> -> vector<15x32xf32>
    %167 = arith.addf %122, %166 : vector<15x32xf32>
    %c0_68 = arith.constant 0 : index
    %c0_69 = arith.constant 0 : index
    %c0_70 = arith.constant 0 : index
    %168 = vector.load %arg16[%c0_68, %c0_69, %c0_70] : memref<1x1x32xf32, #tpu.memory_space<vmem>>, vector<1x1x32xf32>
    %169 = vector.shape_cast %168 : vector<1x1x32xf32> to vector<1x32xf32>
    %170 = vector.broadcast %169 : vector<1x32xf32> to vector<15x32xf32>
    %171 = arith.addf %167, %170 : vector<15x32xf32>
    %c0_71 = arith.constant 0 : index
    %c0_72 = arith.constant 0 : index
    %c0_73 = arith.constant 0 : index
    %172 = vector.load %arg17[%c0_71, %c0_72, %c0_73] : memref<1x15x32xf32, #tpu.memory_space<vmem>>, vector<1x15x32xf32>
    %173 = vector.shape_cast %172 : vector<1x15x32xf32> to vector<15x32xf32>
    %174 = vector.shape_cast %171 : vector<15x32xf32> to vector<1x15x32xf32>
    tpu.vector_store %arg17[%c0_71, %c0_72, %c0_73], %174 {strides = array<i32>} : memref<1x15x32xf32, #tpu.memory_space<vmem>>, vector<1x15x32xf32>,
    return
  }
  func.func @transform_0(%arg0: i32, %arg1: i32) -> (i32, i32, i32) {
    %c0_i32 = arith.constant 0 : i32
    %c0_i32_0 = arith.constant 0 : i32
    %c0_i32_1 = arith.constant 0 : i32
    return %arg0, %c0_i32, %c0_i32_0 : i32, i32, i32
  }
  func.func @transform_1(%arg0: i32, %arg1: i32) -> (i32, i32, i32) {
    %c0_i32 = arith.constant 0 : i32
    %c0_i32_0 = arith.constant 0 : i32
    %c0_i32_1 = arith.constant 0 : i32
    %c0_i32_2 = arith.constant 0 : i32
    return %c0_i32, %c0_i32_0, %c0_i32_1 : i32, i32, i32
  }
  func.func @transform_2(%arg0: i32, %arg1: i32) -> (i32, i32) {
    %c0_i32 = arith.constant 0 : i32
    %c0_i32_0 = arith.constant 0 : i32
    %c0_i32_1 = arith.constant 0 : i32
    return %c0_i32, %c0_i32_0 : i32, i32
  }
  func.func @transform_3(%arg0: i32, %arg1: i32) -> (i32, i32, i32) {
    %c0_i32 = arith.constant 0 : i32
    %c0_i32_0 = arith.constant 0 : i32
    %c0_i32_1 = arith.constant 0 : i32
    return %arg1, %c0_i32, %c0_i32_0 : i32, i32, i32
  }
  func.func @transform_4(%arg0: i32, %arg1: i32) -> (i32, i32, i32) {
    %c0_i32 = arith.constant 0 : i32
    %c0_i32_0 = arith.constant 0 : i32
    %c0_i32_1 = arith.constant 0 : i32
    return %arg1, %c0_i32, %c0_i32_0 : i32, i32, i32
  }
  func.func @transform_5(%arg0: i32, %arg1: i32) -> (i32, i32, i32) {
    %c0_i32 = arith.constant 0 : i32
    %c0_i32_0 = arith.constant 0 : i32
    %c0_i32_1 = arith.constant 0 : i32
    return %arg1, %c0_i32, %c0_i32_0 : i32, i32, i32
  }
  func.func @transform_6(%arg0: i32, %arg1: i32) -> (i32, i32, i32) {
    %c0_i32 = arith.constant 0 : i32
    %c0_i32_0 = arith.constant 0 : i32
    %c0_i32_1 = arith.constant 0 : i32
    return %arg1, %c0_i32, %c0_i32_0 : i32, i32, i32
  }
  func.func @transform_7(%arg0: i32, %arg1: i32) -> (i32, i32, i32) {
    %c0_i32 = arith.constant 0 : i32
    %c0_i32_0 = arith.constant 0 : i32
    %c0_i32_1 = arith.constant 0 : i32
    return %arg1, %c0_i32, %c0_i32_0 : i32, i32, i32
  }
  func.func @transform_8(%arg0: i32, %arg1: i32) -> (i32, i32, i32) {
    %c0_i32 = arith.constant 0 : i32
    %c0_i32_0 = arith.constant 0 : i32
    %c0_i32_1 = arith.constant 0 : i32
    return %arg1, %c0_i32, %c0_i32_0 : i32, i32, i32
  }
  func.func @transform_9(%arg0: i32, %arg1: i32) -> (i32, i32, i32) {
    %c0_i32 = arith.constant 0 : i32
    %c0_i32_0 = arith.constant 0 : i32
    %c0_i32_1 = arith.constant 0 : i32
    return %arg1, %c0_i32, %c0_i32_0 : i32, i32, i32
  }
  func.func @transform_10(%arg0: i32, %arg1: i32) -> (i32, i32, i32) {
    %c0_i32 = arith.constant 0 : i32
    %c0_i32_0 = arith.constant 0 : i32
    %c0_i32_1 = arith.constant 0 : i32
    return %arg1, %c0_i32, %c0_i32_0 : i32, i32, i32
  }
  func.func @transform_11(%arg0: i32, %arg1: i32) -> (i32, i32, i32) {
    %c0_i32 = arith.constant 0 : i32
    %c0_i32_0 = arith.constant 0 : i32
    %c0_i32_1 = arith.constant 0 : i32
    return %arg1, %c0_i32, %c0_i32_0 : i32, i32, i32
  }
  func.func @transform_12(%arg0: i32, %arg1: i32) -> (i32, i32, i32) {
    %c0_i32 = arith.constant 0 : i32
    %c0_i32_0 = arith.constant 0 : i32
    %c0_i32_1 = arith.constant 0 : i32
    return %arg1, %c0_i32, %c0_i32_0 : i32, i32, i32
  }
  func.func @transform_13(%arg0: i32, %arg1: i32) -> (i32, i32, i32) {
    %c0_i32 = arith.constant 0 : i32
    %c0_i32_0 = arith.constant 0 : i32
    %c0_i32_1 = arith.constant 0 : i32
    return %arg1, %c0_i32, %c0_i32_0 : i32, i32, i32
  }
  func.func @transform_14(%arg0: i32, %arg1: i32) -> (i32, i32, i32) {
    %c0_i32 = arith.constant 0 : i32
    %c0_i32_0 = arith.constant 0 : i32
    %c0_i32_1 = arith.constant 0 : i32
    return %arg1, %c0_i32, %c0_i32_0 : i32, i32, i32
  }
  func.func @transform_15(%arg0: i32, %arg1: i32) -> (i32, i32, i32) {
    %c0_i32 = arith.constant 0 : i32
    %c0_i32_0 = arith.constant 0 : i32
    %c0_i32_1 = arith.constant 0 : i32
    return %arg0, %c0_i32, %c0_i32_0 : i32, i32, i32
  }
}

module attributes {stable_mosaic.version = 11 : i64} {
  func.func @_head_kernel(%arg0: memref<2x15x32xf32, #tpu.memory_space<vmem>>, %arg1: memref<1x1x32xf32, #tpu.memory_space<vmem>>, %arg2: memref<1x1x32xf32, #tpu.memory_space<vmem>>, %arg3: memref<32x256xbf16, #tpu.memory_space<vmem>>, %arg4: memref<1x256xf32, #tpu.memory_space<vmem>>, %arg5: memref<256x10xbf16, #tpu.memory_space<vmem>>, %arg6: memref<1x10xf32, #tpu.memory_space<vmem>>, %arg7: memref<2x10xf32, #tpu.memory_space<vmem>>) attributes {dimension_semantics = [], scalar_prefetch = 0 : i64, scratch_operands = 0 : i64, tpu.core_type = #tpu.core_type<tc>} {
    %c0 = arith.constant 0 : index
    %c0_0 = arith.constant 0 : index
    %c0_1 = arith.constant 0 : index
    %0 = vector.load %arg0[%c0, %c0_0, %c0_1] : memref<2x15x32xf32, #tpu.memory_space<vmem>>, vector<2x15x32xf32>
    %c0_2 = arith.constant 0 : index
    %c0_3 = arith.constant 0 : index
    %c0_4 = arith.constant 0 : index
    %1 = vector.load %arg1[%c0_2, %c0_3, %c0_4] : memref<1x1x32xf32, #tpu.memory_space<vmem>>, vector<1x1x32xf32>
    %c0_5 = arith.constant 0 : index
    %c0_6 = arith.constant 0 : index
    %c0_7 = arith.constant 0 : index
    %2 = vector.load %arg2[%c0_5, %c0_6, %c0_7] : memref<1x1x32xf32, #tpu.memory_space<vmem>>, vector<1x1x32xf32>
    %cst = arith.constant dense<0.000000e+00> : vector<2x15xf32>
    %3 = vector.multi_reduction <add>, %0, %cst [2] : vector<2x15x32xf32> to vector<2x15xf32>
    %4 = vector.shape_cast %3 : vector<2x15xf32> to vector<2x15x1xf32>
    %cst_8 = arith.constant 3.200000e+01 : f32
    %5 = vector.broadcast %cst_8 : f32 to vector<2x15x1xf32>
    %6 = arith.divf %4, %5 : vector<2x15x1xf32>
    %7 = vector.broadcast %6 : vector<2x15x1xf32> to vector<2x15x32xf32>
    %8 = arith.subf %0, %7 : vector<2x15x32xf32>
    %9 = arith.mulf %8, %8 : vector<2x15x32xf32>
    %cst_9 = arith.constant dense<0.000000e+00> : vector<2x15xf32>
    %10 = vector.multi_reduction <add>, %9, %cst_9 [2] : vector<2x15x32xf32> to vector<2x15xf32>
    %11 = vector.shape_cast %10 : vector<2x15xf32> to vector<2x15x1xf32>
    %cst_10 = arith.constant 3.200000e+01 : f32
    %12 = vector.broadcast %cst_10 : f32 to vector<2x15x1xf32>
    %13 = arith.divf %11, %12 : vector<2x15x1xf32>
    %cst_11 = arith.constant 9.99999974E-6 : f32
    %14 = vector.broadcast %cst_11 : f32 to vector<2x15x1xf32>
    %15 = arith.addf %13, %14 : vector<2x15x1xf32>
    %16 = math.rsqrt %15 : vector<2x15x1xf32>
    %17 = vector.broadcast %16 : vector<2x15x1xf32> to vector<2x15x32xf32>
    %18 = arith.mulf %8, %17 : vector<2x15x32xf32>
    %19 = vector.broadcast %1 : vector<1x1x32xf32> to vector<2x15x32xf32>
    %20 = arith.mulf %18, %19 : vector<2x15x32xf32>
    %21 = vector.broadcast %2 : vector<1x1x32xf32> to vector<2x15x32xf32>
    %22 = arith.addf %20, %21 : vector<2x15x32xf32>
    %cst_12 = arith.constant dense<0.000000e+00> : vector<2x32xf32>
    %23 = vector.multi_reduction <add>, %22, %cst_12 [1] : vector<2x15x32xf32> to vector<2x32xf32>
    %cst_13 = arith.constant 1.500000e+01 : f32
    %24 = vector.broadcast %cst_13 : f32 to vector<2x32xf32>
    %25 = arith.divf %23, %24 : vector<2x32xf32>
    %26 = arith.truncf %25 : vector<2x32xf32> to vector<2x32xbf16>
    %c0_14 = arith.constant 0 : index
    %c0_15 = arith.constant 0 : index
    %27 = vector.load %arg3[%c0_14, %c0_15] : memref<32x256xbf16, #tpu.memory_space<vmem>>, vector<32x256xbf16>
    %cst_16 = arith.constant dense<0.000000e+00> : vector<2x256xf32>
    %28 = tpu.matmul %26, %27, %cst_16 {dimension_numbers = #tpu.dot_dimension_numbers<[1], [0], [0], [1], [0, 0, 1, 1], [], []>} : vector<2x32xbf16>, vector<32x256xbf16>, vector<2x256xf32> -> vector<2x256xf32>
    %c0_17 = arith.constant 0 : index
    %c0_18 = arith.constant 0 : index
    %29 = vector.load %arg4[%c0_17, %c0_18] : memref<1x256xf32, #tpu.memory_space<vmem>>, vector<1x256xf32>
    %30 = vector.broadcast %29 : vector<1x256xf32> to vector<2x256xf32>
    %31 = arith.addf %28, %30 : vector<2x256xf32>
    %32 = arith.truncf %31 : vector<2x256xf32> to vector<2x256xbf16>
    %c0_19 = arith.constant 0 : index
    %c0_20 = arith.constant 0 : index
    %33 = vector.load %arg5[%c0_19, %c0_20] : memref<256x10xbf16, #tpu.memory_space<vmem>>, vector<256x10xbf16>
    %cst_21 = arith.constant dense<0.000000e+00> : vector<2x10xf32>
    %34 = tpu.matmul %32, %33, %cst_21 {dimension_numbers = #tpu.dot_dimension_numbers<[1], [0], [0], [1], [0, 0, 1, 1], [], []>} : vector<2x256xbf16>, vector<256x10xbf16>, vector<2x10xf32> -> vector<2x10xf32>
    %c0_22 = arith.constant 0 : index
    %c0_23 = arith.constant 0 : index
    %35 = vector.load %arg6[%c0_22, %c0_23] : memref<1x10xf32, #tpu.memory_space<vmem>>, vector<1x10xf32>
    %36 = vector.broadcast %35 : vector<1x10xf32> to vector<2x10xf32>
    %37 = arith.addf %34, %36 : vector<2x10xf32>
    %c0_24 = arith.constant 0 : index
    %c0_25 = arith.constant 0 : index
    %38 = vector.load %arg7[%c0_24, %c0_25] : memref<2x10xf32, #tpu.memory_space<vmem>>, vector<2x10xf32>
    tpu.vector_store %arg7[%c0_24, %c0_25], %37 {strides = array<i32>} : memref<2x10xf32, #tpu.memory_space<vmem>>, vector<2x10xf32>,
    return
  }
}

</mosaic_0001>

<llo_original>
// kernel: _lambda_.5
$region0: #{_lambda_.5}
  #allocation0 [shape = 'u32[]', space=smem, size = 0x4, offset = 0x4, fixed_abs, tag = 'smem constant byte address 0x4 - core index']
  #allocation1 [shape = 'u32[144,128]{1,0:T(1,128)}', space=vmem, size = 0x12000, scoped, tag = 'internal scratch']
  %s0 = inlined_call_operand.vmem [shape: f32[2,32,16], index: 0, kind: input, shape index: {}]
  %s1 = inlined_call_operand.vmem [shape: bf16[4,8,32], index: 1, kind: input, shape index: {}]
  %s2 = inlined_call_operand.vmem [shape: f32[1,32], index: 2, kind: input, shape index: {}]
  %s3 = inlined_call_operand.vmem [shape: f32[1,32], index: 3, kind: input, shape index: {}]
  %s4 = inlined_call_operand.vmem [shape: f32[1,32], index: 4, kind: input, shape index: {}]
  %s5 = inlined_call_operand.vmem [shape: f32[2,31,32], index: 5, kind: output, shape index: {}]
  %s6 = sld [smem:[#allocation0]]
  $region53: #{_lambda_.5} parent=0
    _
  %s8 = ssub.s32 1, %s6
  %s9 = scalar_select 0, %s8, %s6
  loop: start=0, step=1, limit=4
  $region2: #{_lambda_.5} parent=0 // loop_pre_header
    _
  $region3: #{_lambda_.5} parent=0 // loop_header
    %s11 = sphi 0, %s15
    %p12 = scmp.ge.s32.totalorder %s11, 4
    %s21 = sphi 0, %s23
    %s24 = sphi 0, %s21
    %s25 = sphi 0, %s24
    %s41 = sphi 0, %s25
    %s45 = sphi 0, %s45
    %s47 = sphi 0, %s45
    %s48 = sphi 0, %s47
    %s62 = sphi 0, %s48
    %s66 = sphi 0, %s66
    %s68 = sphi 0, %s66
    %s69 = sphi 0, %s68
    %s83 = sphi 0, %s69
    %s87 = sphi 0, %s87
    %s89 = sphi 0, %s87
    %s90 = sphi 0, %s89
    %s104 = sphi 0, %s90
    %s108 = sphi 0, %s108
    %s110 = sphi 0, %s108
    %s111 = sphi 0, %s110
    %s125 = sphi 0, %s111
    %s131 = sphi 0, %s133
    %s134 = sphi 0, %s131
    %s135 = sphi 0, %s134
    %s151 = sphi 0, %s135
  $region4: #{_lambda_.5} parent=0 // loop_header_branch
    %14 = sbr.rel (%p12) target = $region8
  $region5: #{_lambda_.5} parent=0 // loop_body
    %s16 = ssub.s32 %s11, 1
    %s17 = ssub.s32 %s11, 2
    %s18 = sadd.s32 %s11, 1
    %s19 = ssub.s32 %s11, %s18
    %p20 = scmp.eq.s32.totalorder %s19, 0
    %s22 = sadd.s32 %s21, 1
    %s23 = scalar_select %p20, %s21, %s22
    %p26 = pneg %p20
    %p27 = scmp.eq.s32.totalorder %s11, 1
    %p28 = por %p26, %p27
    %p29 = scmp.ne.s32.totalorder %s21, %s24
    %p30 = scmp.eq.s32.totalorder %s11, 0
    %p31 = por %p29, %p30
    %p32 = scmp.ne.s32.totalorder %s21, %s24
    %p33 = scmp.eq.s32.totalorder %s16, 1
    %p34 = por %p32, %p33
    %p35 = scmp.ne.s32.totalorder %s24, %s25
    %p36 = scmp.eq.s32.totalorder %s16, 0
    %p37 = por %p35, %p36
    %p38 = scmp.ne.s32.totalorder %s24, %s25
    %p39 = scmp.eq.s32.totalorder %s17, 1
    %p40 = por %p38, %p39
    %p42 = scmp.ne.s32.totalorder %s25, %s41
    %p43 = scmp.eq.s32.totalorder %s17, 0
    %p44 = por %p42, %p43
    %s46 = sadd.s32 %s45, 1
    %p49 = scmp.eq.s32.totalorder %s11, 1
    %p50 = scmp.ne.s32.totalorder %s45, %s47
    %p51 = scmp.eq.s32.totalorder %s11, 0
    %p52 = por %p50, %p51
    %p53 = scmp.ne.s32.totalorder %s45, %s47
    %p54 = scmp.eq.s32.totalorder %s16, 1
    %p55 = por %p53, %p54
    %p56 = scmp.ne.s32.totalorder %s47, %s48
    %p57 = scmp.eq.s32.totalorder %s16, 0
    %p58 = por %p56, %p57
    %p59 = scmp.ne.s32.totalorder %s47, %s48
    %p60 = scmp.eq.s32.totalorder %s17, 1
    %p61 = por %p59, %p60
    %p63 = scmp.ne.s32.totalorder %s48, %s62
    %p64 = scmp.eq.s32.totalorder %s17, 0
    %p65 = por %p63, %p64
    %s67 = sadd.s32 %s66, 1
    %p70 = scmp.eq.s32.totalorder %s11, 1
    %p71 = scmp.ne.s32.totalorder %s66, %s68
    %p72 = scmp.eq.s32.totalorder %s11, 0
    %p73 = por %p71, %p72
    %p74 = scmp.ne.s32.totalorder %s66, %s68
    %p75 = scmp.eq.s32.totalorder %s16, 1
    %p76 = por %p74, %p75
    %p77 = scmp.ne.s32.totalorder %s68, %s69
    %p78 = scmp.eq.s32.totalorder %s16, 0
    %p79 = por %p77, %p78
    %p80 = scmp.ne.s32.totalorder %s68, %s69
    %p81 = scmp.eq.s32.totalorder %s17, 1
    %p82 = por %p80, %p81
    %p84 = scmp.ne.s32.totalorder %s69, %s83
    %p85 = scmp.eq.s32.totalorder %s17, 0
    %p86 = por %p84, %p85
    %s88 = sadd.s32 %s87, 1
    %p91 = scmp.eq.s32.totalorder %s11, 1
    %p92 = scmp.ne.s32.totalorder %s87, %s89
    %p93 = scmp.eq.s32.totalorder %s11, 0
    %p94 = por %p92, %p93
    %p95 = scmp.ne.s32.totalorder %s87, %s89
    %p96 = scmp.eq.s32.totalorder %s16, 1
    %p97 = por %p95, %p96
    %p98 = scmp.ne.s32.totalorder %s89, %s90
    %p99 = scmp.eq.s32.totalorder %s16, 0
    %p100 = por %p98, %p99
    %p101 = scmp.ne.s32.totalorder %s89, %s90
    %p102 = scmp.eq.s32.totalorder %s17, 1
    %p103 = por %p101, %p102
    %p105 = scmp.ne.s32.totalorder %s90, %s104
    %p106 = scmp.eq.s32.totalorder %s17, 0
    %p107 = por %p105, %p106
    %s109 = sadd.s32 %s108, 1
    %p112 = scmp.eq.s32.totalorder %s11, 1
    %p113 = scmp.ne.s32.totalorder %s108, %s110
    %p114 = scmp.eq.s32.totalorder %s11, 0
    %p115 = por %p113, %p114
    %p116 = scmp.ne.s32.totalorder %s108, %s110
    %p117 = scmp.eq.s32.totalorder %s16, 1
    %p118 = por %p116, %p117
    %p119 = scmp.ne.s32.totalorder %s110, %s111
    %p120 = scmp.eq.s32.totalorder %s16, 0
    %p121 = por %p119, %p120
    %p122 = scmp.ne.s32.totalorder %s110, %s111
    %p123 = scmp.eq.s32.totalorder %s17, 1
    %p124 = por %p122, %p123
    %p126 = scmp.ne.s32.totalorder %s111, %s125
    %p127 = scmp.eq.s32.totalorder %s17, 0
    %p128 = por %p126, %p127
    %s129 = ssub.s32 %s11, %s18
    %p130 = scmp.eq.s32.totalorder %s129, 0
    %s132 = sadd.s32 %s131, 1
    %s133 = scalar_select %p130, %s131, %s132
    %p136 = pneg %p130
    %p137 = scmp.eq.s32.totalorder %s11, 1
    %p138 = por %p136, %p137
    %p139 = scmp.ne.s32.totalorder %s131, %s134
    %p140 = scmp.eq.s32.totalorder %s11, 0
    %p141 = por %p139, %p140
    %p142 = scmp.ne.s32.totalorder %s131, %s134
    %p143 = scmp.eq.s32.totalorder %s16, 1
    %p144 = por %p142, %p143
    %p145 = scmp.ne.s32.totalorder %s134, %s135
    %p146 = scmp.eq.s32.totalorder %s16, 0
    %p147 = por %p145, %p146
    %p148 = scmp.ne.s32.totalorder %s134, %s135
    %p149 = scmp.eq.s32.totalorder %s17, 1
    %p150 = por %p148, %p149
    %p152 = scmp.ne.s32.totalorder %s135, %s151
    %p153 = scmp.eq.s32.totalorder %s17, 0
    %p154 = por %p152, %p153
    %p155 = scmp.le.s32.totalorder 1, %s11
    %p156 = scmp.lt.s32.totalorder %s11, 3
    %p157 = pnand %p155, %p156
    %p158 = pneg %p157
    // Predicated region
    $region9: #{_lambda_.5} parent=5 // pred_check
      _
    $region10: #{_lambda_.5} parent=5 // pred_check_branch
      %160 = sbr.rel (%p157) target = $region12
    $region11: #{_lambda_.5} parent=5 // pred_region
      %s161 = ssub.s32 %s11, 1
      // Predicated region
      $region13: #{_lambda_.5} parent=11 // pred_check
        %p162 = pneg %p58
      $region14: #{_lambda_.5} parent=11 // pred_check_branch
        %164 = sbr.rel (%p162) target = $region16
      $region15: #{_lambda_.5} parent=11 // pred_region
        _
      $region16: #{_lambda_.5} parent=11 // pred_fallthru
        _
      // Predicated region
      $region17: #{_lambda_.5} parent=11 // pred_check
        %p165 = pneg %p79
      $region18: #{_lambda_.5} parent=11 // pred_check_branch
        %167 = sbr.rel (%p165) target = $region20
      $region19: #{_lambda_.5} parent=11 // pred_region
        _
      $region20: #{_lambda_.5} parent=11 // pred_fallthru
        _
      // Predicated region
      $region21: #{_lambda_.5} parent=11 // pred_check
        %p168 = pneg %p100
      $region22: #{_lambda_.5} parent=11 // pred_check_branch
        %170 = sbr.rel (%p168) target = $region24
      $region23: #{_lambda_.5} parent=11 // pred_region
        _
      $region24: #{_lambda_.5} parent=11 // pred_fallthru
        _
      // Predicated region
      $region25: #{_lambda_.5} parent=11 // pred_check
        %p171 = pneg %p121
      $region26: #{_lambda_.5} parent=11 // pred_check_branch
        %173 = sbr.rel (%p171) target = $region28
      $region27: #{_lambda_.5} parent=11 // pred_region
        _
      $region28: #{_lambda_.5} parent=11 // pred_fallthru
        _
    $region12: #{_lambda_.5} parent=5 // pred_fallthru
      _
    %p174 = scmp.lt.s32.totalorder %s11, 2
    // Predicated region
    $region29: #{_lambda_.5} parent=5 // pred_check
      %p175 = pneg %p174
    $region30: #{_lambda_.5} parent=5 // pred_check_branch
      %177 = sbr.rel (%p175) target = $region32
    $region31: #{_lambda_.5} parent=5 // pred_region
      // Predicated region
      $region33: #{_lambda_.5} parent=31 // pred_check
        %p178 = pneg %p31
      $region34: #{_lambda_.5} parent=31 // pred_check_branch
        %180 = sbr.rel (%p178) target = $region36
      $region35: #{_lambda_.5} parent=31 // pred_region
        %p181 = scmp.lt.s32.totalorder %s11, 1
        %s182 = scalar_select %p181, %s11, 1
        %s183 = smul.addr %s182, 4
        %s184 = smul.addr %s183, 8
        %s185 = scalar_lea.vmem %s0, %s184
      $region36: #{_lambda_.5} parent=31 // pred_fallthru
        _
    $region32: #{_lambda_.5} parent=5 // pred_fallthru
      _
    %p186 = scmp.le.s32.totalorder 1, %s11
    %p187 = scmp.lt.s32.totalorder %s11, 3
    %p188 = pnand %p186, %p187
    %p189 = pneg %p188
    // Predicated region
    $region37: #{_lambda_.5} parent=5 // pred_check
      _
    $region38: #{_lambda_.5} parent=5 // pred_check_branch
      %191 = sbr.rel (%p188) target = $region40
    $region39: #{_lambda_.5} parent=5 // pred_region
      %s192 = ssub.s32 %s11, 1
      %p193 = scmp.lt.s32.totalorder %s16, 1
      %s194 = scalar_select %p193, %s16, 1
      %s195 = smul.addr %s194, 4
      %s196 = smul.addr %s195, 8
      %s197 = scalar_lea.vmem %s0, %s196
      %p198 = pneg %p37
      %p199 = pneg %p34
      %p200 = pneg %p58
      %p201 = pneg %p55
      %p202 = pneg %p79
      %p203 = pneg %p76
      %p204 = pneg %p100
      %p205 = pneg %p97
      %p206 = pneg %p121
      %p207 = pneg %p118
      %p208 = pneg %p147
      %p209 = pneg %p144
      %p210 = scmp.lt.s32.totalorder %s16, 1
      %s211 = scalar_select %p210, %s16, 1
      %s212 = smul.addr %s211, 4
      %s213 = smul.addr %s212, 8
      %s214 = scalar_lea.vmem %s5, %s213
      %p215 = scmp.lt.s32.totalorder %s16, 1
      %s216 = scalar_select %p215, %s16, 1
      %s217 = smul.addr %s216, 4
      %s218 = smul.addr %s217, 8
      %s219 = scalar_lea.vmem %s0, %s218
      %p220 = scmp.lt.s32.totalorder %s16, 1
      %s221 = scalar_select %p220, %s16, 1
      %s222 = smul.addr %s221, 4
      %s223 = smul.addr %s222, 8
      %s224 = scalar_lea.vmem %s5, %s223
      %v226 = vld [vmem:[%s219] sm:$0xff]
      %v227 = vld [vmem:[%s219 + $0x8] sm:$0xff]
      %v228 = vld [vmem:[%s219 + $0x10] sm:$0xff]
      %v229 = vld [vmem:[%s219 + $0x18] sm:$0xff]
      %v230 = vpack.c.bf16 %v227, %v226
      %v231 = vpack.c.bf16 %v229, %v228
      %v232 = vld [vmem:[%s1] sm:$0xf]
      %s233 = scalar_lea.vmem %s1, 4
      %v234 = vld [vmem:[%s233] sm:$0xf]
      %237 = vrot.lane.b32.xlu0 %v230, 120
      %v238 = vpop.permute.xlu0 %237
      %239 = vrot.lane.b32.xlu0 %v231, 120
      %v240 = vpop.permute.xlu0 %239
      %vm241 = vcmask 64512
      %v243 = vsel %vm241, %v238, 0
      %v246 = vsel %vm241, %v240, 0
      %vm248 = vcmask 1043456
      %v250 = vsel %vm248, %v234, 0
      %252 = vmatprep.subr.bf16.mxu0 0
      %253 = vmatpush1.bf16.msra.mxu0 0
      %254 = vmatprep.subr.bf16.mxu0 0
      %255 = vmatpush1.bf16.msra.mxu0 0
      %256 = vmatprep.subr.bf16.mxu0 0
      %257 = vmatpush1.bf16.msra.mxu0 0
      %258 = vmatprep.subr.bf16.mxu0 0
      %259 = vmatpush1.bf16.msra.mxu0 0
      %260 = vmatprep.subr.bf16.mxu0 0
      %261 = vmatpush1.bf16.msra.mxu0 0
      %262 = vmatprep.subr.bf16.mxu0 0
      %263 = vmatpush1.bf16.msra.mxu0 0
      %264 = vmatprep.subr.bf16.mxu0 0
      %265 = vmatpush1.bf16.msra.mxu0 0
      %266 = vmatprep.subr.bf16.mxu0 0
      %267 = vmatpush1.bf16.msra.mxu0 %v250
      %268 = vmatprep.subr.bf16.mxu0 0
      %269 = vmatpush2.bf16.msra.mxu0 0
      %270 = vmatprep.subr.bf16.mxu0 0
      %271 = vmatpush2.bf16.msra.mxu0 0
      %272 = vmatprep.subr.bf16.mxu0 0
      %273 = vmatpush2.bf16.msra.mxu0 0
      %274 = vmatprep.subr.bf16.mxu0 0
      %275 = vmatpush2.bf16.msra.mxu0 0
      %276 = vmatprep.subr.bf16.mxu0 0
      %277 = vmatpush2.bf16.msra.mxu0 0
      %278 = vmatprep.subr.bf16.mxu0 0
      %279 = vmatpush2.bf16.msra.mxu0 0
      %280 = vmatprep.subr.bf16.mxu0 0
      %281 = vmatpush2.bf16.msra.mxu0 0
      %282 = vmatprep.subr.bf16.mxu0 0
      %283 = vmatpush2.bf16.msra.mxu0 0
      %284 = vmatprep.mubr.bf16.mxu0 0
      %285 = vmatmul.mubr.bf16.gmra.mxu0 %v243
      %v286 = vpop.f32.mrf.mxu0
      %v287 = vadd.f32 0.0, %v286
      %v288 = vpop.f32.mrf.mxu0
      %v289 = vpop.f32.mrf.mxu0
      %v290 = vadd.f32 0.0, %v289
      %v291 = vpop.f32.mrf.mxu0
      %292 = vmatprep.mubr.bf16.mxu0 0
      %293 = vmatmul.mubr.bf16.gmra.mxu0 %v246
      %v294 = vpop.f32.mrf.mxu0
      %v295 = vadd.f32 0.0, %v294
      %v296 = vpop.f32.mrf.mxu0
      %v297 = vpop.f32.mrf.mxu0
      %v298 = vadd.f32 0.0, %v297
      %v299 = vpop.f32.mrf.mxu0
      %300 = vdwg.mxu0
      %v302 = vsel %vm241, %v230, 0
      %v305 = vsel %vm241, %v231, 0
      %v308 = vsel %vm248, %v232, 0
      %310 = vmatprep.subr.bf16.mxu0 0
      %311 = vmatpush1.bf16.msra.mxu0 0
      %312 = vmatprep.subr.bf16.mxu0 0
      %313 = vmatpush1.bf16.msra.mxu0 0
      %314 = vmatprep.subr.bf16.mxu0 0
      %315 = vmatpush1.bf16.msra.mxu0 0
      %316 = vmatprep.subr.bf16.mxu0 0
      %317 = vmatpush1.bf16.msra.mxu0 0
      %318 = vmatprep.subr.bf16.mxu0 0
      %319 = vmatpush1.bf16.msra.mxu0 0
      %320 = vmatprep.subr.bf16.mxu0 0
      %321 = vmatpush1.bf16.msra.mxu0 0
      %322 = vmatprep.subr.bf16.mxu0 0
      %323 = vmatpush1.bf16.msra.mxu0 0
      %324 = vmatprep.subr.bf16.mxu0 0
      %325 = vmatpush1.bf16.msra.mxu0 %v308
      %326 = vmatprep.subr.bf16.mxu0 0
      %327 = vmatpush2.bf16.msra.mxu0 0
      %328 = vmatprep.subr.bf16.mxu0 0
      %329 = vmatpush2.bf16.msra.mxu0 0
      %330 = vmatprep.subr.bf16.mxu0 0
      %331 = vmatpush2.bf16.msra.mxu0 0
      %332 = vmatprep.subr.bf16.mxu0 0
      %333 = vmatpush2.bf16.msra.mxu0 0
      %334 = vmatprep.subr.bf16.mxu0 0
      %335 = vmatpush2.bf16.msra.mxu0 0
      %336 = vmatprep.subr.bf16.mxu0 0
      %337 = vmatpush2.bf16.msra.mxu0 0
      %338 = vmatprep.subr.bf16.mxu0 0
      %339 = vmatpush2.bf16.msra.mxu0 0
      %340 = vmatprep.subr.bf16.mxu0 0
      %341 = vmatpush2.bf16.msra.mxu0 0
      %342 = vmatprep.mubr.bf16.mxu0 0
      %343 = vmatmul.mubr.bf16.gmra.mxu0 %v302
      %v344 = vpop.f32.mrf.mxu0
      %v345 = vadd.f32 %v287, %v344
      %v346 = vpop.f32.mrf.mxu0
      %v347 = vpop.f32.mrf.mxu0
      %v348 = vadd.f32 %v290, %v347
      %v349 = vpop.f32.mrf.mxu0
      %350 = vmatprep.mubr.bf16.mxu0 0
      %351 = vmatmul.mubr.bf16.gmra.mxu0 %v305
      %v352 = vpop.f32.mrf.mxu0
      %v353 = vadd.f32 %v295, %v352
      %v354 = vpop.f32.mrf.mxu0
      %v355 = vpop.f32.mrf.mxu0
      %v356 = vadd.f32 %v298, %v355
      %v357 = vpop.f32.mrf.mxu0
      %358 = vdwg.mxu0
      %s359 = scalar_lea.vmem %s1, 8
      %v360 = vld [vmem:[%s359] sm:$0xf]
      %vm361 = vsmask.f32 7424
      %v362 = vshrl.u32 %v230, 16
      %v364 = vshll.u32 %v230, 16
      %v366 = vrot.slane %v364, 1
      %v367 = vor.u32 %v362, %v366
      %v368 = vshll.u32 %v231, 16
      %v370 = vrot.slane %v368, 1
      %v371 = vsel %vm361, %v367, %v370
      %v372 = vshrl.u32 %v231, 16
      %v374 = vor.u32 %v372, %v370
      %v376 = vsel %vm241, %v371, 0
      %v379 = vsel %vm241, %v374, 0
      %v382 = vsel %vm248, %v360, 0
      %384 = vmatprep.subr.bf16.mxu0 0
      %385 = vmatpush1.bf16.msra.mxu0 0
      %386 = vmatprep.subr.bf16.mxu0 0
      %387 = vmatpush1.bf16.msra.mxu0 0
      %388 = vmatprep.subr.bf16.mxu0 0
      %389 = vmatpush1.bf16.msra.mxu0 0
      %390 = vmatprep.subr.bf16.mxu0 0
      %391 = vmatpush1.bf16.msra.mxu0 0
      %392 = vmatprep.subr.bf16.mxu0 0
      %393 = vmatpush1.bf16.msra.mxu0 0
      %394 = vmatprep.subr.bf16.mxu0 0
      %395 = vmatpush1.bf16.msra.mxu0 0
      %396 = vmatprep.subr.bf16.mxu0 0
      %397 = vmatpush1.bf16.msra.mxu0 0
      %398 = vmatprep.subr.bf16.mxu0 0
      %399 = vmatpush1.bf16.msra.mxu0 %v382
      %400 = vmatprep.subr.bf16.mxu0 0
      %401 = vmatpush2.bf16.msra.mxu0 0
      %402 = vmatprep.subr.bf16.mxu0 0
      %403 = vmatpush2.bf16.msra.mxu0 0
      %404 = vmatprep.subr.bf16.mxu0 0
      %405 = vmatpush2.bf16.msra.mxu0 0
      %406 = vmatprep.subr.bf16.mxu0 0
      %407 = vmatpush2.bf16.msra.mxu0 0
      %408 = vmatprep.subr.bf16.mxu0 0
      %409 = vmatpush2.bf16.msra.mxu0 0
      %410 = vmatprep.subr.bf16.mxu0 0
      %411 = vmatpush2.bf16.msra.mxu0 0
      %412 = vmatprep.subr.bf16.mxu0 0
      %413 = vmatpush2.bf16.msra.mxu0 0
      %414 = vmatprep.subr.bf16.mxu0 0
      %415 = vmatpush2.bf16.msra.mxu0 0
      %416 = vmatprep.mubr.bf16.mxu0 0
      %417 = vmatmul.mubr.bf16.gmra.mxu0 %v376
      %v418 = vpop.f32.mrf.mxu0
      %v419 = vadd.f32 0.0, %v418
      %v420 = vpop.f32.mrf.mxu0
      %v421 = vpop.f32.mrf.mxu0
      %v422 = vadd.f32 0.0, %v421
      %v423 = vpop.f32.mrf.mxu0
      %424 = vmatprep.mubr.bf16.mxu0 0
      %425 = vmatmul.mubr.bf16.gmra.mxu0 %v379
      %v426 = vpop.f32.mrf.mxu0
      %v427 = vadd.f32 0.0, %v426
      %v428 = vpop.f32.mrf.mxu0
      %v429 = vpop.f32.mrf.mxu0
      %v430 = vadd.f32 0.0, %v429
      %v431 = vpop.f32.mrf.mxu0
      %432 = vdwg.mxu0
      %v433 = vadd.f32 %v345, %v419
      %v434 = vadd.f32 %v348, %v422
      %v435 = vadd.f32 %v353, %v427
      %v436 = vadd.f32 %v356, %v430
      %s437 = scalar_lea.vmem %s1, 12
      %v438 = vld [vmem:[%s437] sm:$0xf]
      %439 = vrot.lane.b32.xlu0 %v371, 120
      %v440 = vpop.permute.xlu0 %439
      %441 = vrot.lane.b32.xlu0 %v374, 120
      %v442 = vpop.permute.xlu0 %441
      %v444 = vsel %vm241, %v440, 0
      %v447 = vsel %vm241, %v442, 0
      %v450 = vsel %vm248, %v438, 0
      %452 = vmatprep.subr.bf16.mxu0 0
      %453 = vmatpush1.bf16.msra.mxu0 0
      %454 = vmatprep.subr.bf16.mxu0 0
      %455 = vmatpush1.bf16.msra.mxu0 0
      %456 = vmatprep.subr.bf16.mxu0 0
      %457 = vmatpush1.bf16.msra.mxu0 0
      %458 = vmatprep.subr.bf16.mxu0 0
      %459 = vmatpush1.bf16.msra.mxu0 0
      %460 = vmatprep.subr.bf16.mxu0 0
      %461 = vmatpush1.bf16.msra.mxu0 0
      %462 = vmatprep.subr.bf16.mxu0 0
      %463 = vmatpush1.bf16.msra.mxu0 0
      %464 = vmatprep.subr.bf16.mxu0 0
      %465 = vmatpush1.bf16.msra.mxu0 0
      %466 = vmatprep.subr.bf16.mxu0 0
      %467 = vmatpush1.bf16.msra.mxu0 %v450
      %468 = vmatprep.subr.bf16.mxu0 0
      %469 = vmatpush2.bf16.msra.mxu0 0
      %470 = vmatprep.subr.bf16.mxu0 0
      %471 = vmatpush2.bf16.msra.mxu0 0
      %472 = vmatprep.subr.bf16.mxu0 0
      %473 = vmatpush2.bf16.msra.mxu0 0
      %474 = vmatprep.subr.bf16.mxu0 0
      %475 = vmatpush2.bf16.msra.mxu0 0
      %476 = vmatprep.subr.bf16.mxu0 0
      %477 = vmatpush2.bf16.msra.mxu0 0
      %478 = vmatprep.subr.bf16.mxu0 0
      %479 = vmatpush2.bf16.msra.mxu0 0
      %480 = vmatprep.subr.bf16.mxu0 0
      %481 = vmatpush2.bf16.msra.mxu0 0
      %482 = vmatprep.subr.bf16.mxu0 0
      %483 = vmatpush2.bf16.msra.mxu0 0
      %484 = vmatprep.mubr.bf16.mxu0 0
      %485 = vmatmul.mubr.bf16.gmra.mxu0 %v444
      %v486 = vpop.f32.mrf.mxu0
      %v487 = vadd.f32 0.0, %v486
      %v488 = vpop.f32.mrf.mxu0
      %v489 = vpop.f32.mrf.mxu0
      %v490 = vadd.f32 0.0, %v489
      %v491 = vpop.f32.mrf.mxu0
      %492 = vmatprep.mubr.bf16.mxu0 0
      %493 = vmatmul.mubr.bf16.gmra.mxu0 %v447
      %v494 = vpop.f32.mrf.mxu0
      %v495 = vadd.f32 0.0, %v494
      %v496 = vpop.f32.mrf.mxu0
      %v497 = vpop.f32.mrf.mxu0
      %v498 = vadd.f32 0.0, %v497
      %v499 = vpop.f32.mrf.mxu0
      %500 = vdwg.mxu0
      %v501 = vadd.f32 %v433, %v487
      %v502 = vadd.f32 %v434, %v490
      %v503 = vadd.f32 %v435, %v495
      %v504 = vadd.f32 %v436, %v498
      %v505 = vld [vmem:[%s2] sm:$0x1]
      %v507 = vlaneseq
      %v508 = vshrl.u32 %v507, 7
      %v509 = vsub.s32 0, %v508
      %v510 = vrot.slane %v505, %v509
      %v512 = vadd.f32 %v501, %v510
      %v513 = vadd.f32 %v502, %v510
      %v514 = vadd.f32 %v503, %v510
      %v515 = vadd.f32 %v504, %v510
      %v516 = vld [vmem:[%s3] sm:$0x1]
      %v517 = vld [vmem:[%s4] sm:$0x1]
      %vm518 = vcmask 261120
      %v519 = vsel %vm518, %v512, 0.0
      %520 = vadd.xlane.f32.xlu0 %v519
      %v521 = vpop.xlane.xlu0 %520
      %v522 = vsel %vm518, %v513, 0.0
      %523 = vadd.xlane.f32.xlu0 %v522
      %v524 = vpop.xlane.xlu0 %523
      %v525 = vsel %vm518, %v514, 0.0
      %526 = vadd.xlane.f32.xlu0 %v525
      %v527 = vpop.xlane.xlu0 %526
      %vm528 = vcmask 260096
      %v529 = vsel %vm528, %v515, 0.0
      %530 = vadd.xlane.f32.xlu0 %v529
      %v531 = vpop.xlane.xlu0 %530
      %v532 = vrcp.pop 32.0
      %v533 = vmul.f32 %v521, %v532
      %v534 = vmul.f32 %v524, %v532
      %v535 = vmul.f32 %v527, %v532
      %v536 = vmul.f32 %v531, %v532
      %v537 = vsub.f32 %v512, %v533
      %v538 = vsub.f32 %v513, %v534
      %v539 = vsub.f32 %v514, %v535
      %v540 = vsub.f32 %v515, %v536
      %v541 = vmul.f32 %v537, %v537
      %v542 = vmul.f32 %v538, %v538
      %v543 = vmul.f32 %v539, %v539
      %v544 = vmul.f32 %v540, %v540
      %v545 = vsel %vm518, %v541, 0.0
      %546 = vadd.xlane.f32.xlu0 %v545
      %v547 = vpop.xlane.xlu0 %546
      %v548 = vsel %vm518, %v542, 0.0
      %549 = vadd.xlane.f32.xlu0 %v548
      %v550 = vpop.xlane.xlu0 %549
      %v551 = vsel %vm518, %v543, 0.0
      %552 = vadd.xlane.f32.xlu0 %v551
      %v553 = vpop.xlane.xlu0 %552
      %v554 = vsel %vm528, %v544, 0.0
      %555 = vadd.xlane.f32.xlu0 %v554
      %v556 = vpop.xlane.xlu0 %555
      %v557 = vmul.f32 %v547, %v532
      %v558 = vmul.f32 %v550, %v532
      %v559 = vmul.f32 %v553, %v532
      %v560 = vmul.f32 %v556, %v532
      %v561 = vadd.f32 %v557, 1e-05
      %v562 = vadd.f32 %v558, 1e-05
      %v563 = vadd.f32 %v559, 1e-05
      %v564 = vadd.f32 %v560, 1e-05
      %v565 = vrsqrt.pop %v561
      %v566 = vrsqrt.pop %v562
      %v567 = vrsqrt.pop %v563
      %v568 = vrsqrt.pop %v564
      %v569 = vmul.f32 %v537, %v565
      %v570 = vmul.f32 %v538, %v566
      %v571 = vmul.f32 %v539, %v567
      %v572 = vmul.f32 %v540, %v568
      %v574 = vlaneseq
      %v575 = vshrl.u32 %v574, 7
      %v576 = vsub.s32 0, %v575
      %v577 = vrot.slane %v516, %v576
      %v579 = vmul.f32 %v569, %v577
      %v580 = vmul.f32 %v570, %v577
      %v581 = vmul.f32 %v571, %v577
      %v582 = vmul.f32 %v572, %v577
      %v584 = vlaneseq
      %v585 = vshrl.u32 %v584, 7
      %v586 = vsub.s32 0, %v585
      %v587 = vrot.slane %v517, %v586
      %v589 = vadd.f32 %v579, %v587
      %v590 = vadd.f32 %v580, %v587
      %v591 = vadd.f32 %v581, %v587
      %v592 = vadd.f32 %v582, %v587
      %v593 = vmul.f32 %v589, 0.5
      %v594 = vmul.f32 %v590, 0.5
      %v595 = vmul.f32 %v591, 0.5
      %v596 = vmul.f32 %v592, 0.5
      %v597 = vmul.f32 %v589, 0.70710677
      %v598 = vmul.f32 %v590, 0.70710677
      %v599 = vmul.f32 %v591, 0.70710677
      %v600 = vmul.f32 %v592, 0.70710677
      %v601 = verf.f32.pop %v597
      %v602 = verf.f32.pop %v598
      %v603 = verf.f32.pop %v599
      %v604 = verf.f32.pop %v600
      %v605 = vadd.f32 %v601, 1.0
      %v606 = vadd.f32 %v602, 1.0
      %v607 = vadd.f32 %v603, 1.0
      %v608 = vadd.f32 %v604, 1.0
      %v609 = vmul.f32 %v593, %v605
      %v610 = vmul.f32 %v594, %v606
      %v611 = vmul.f32 %v595, %v607
      %v612 = vmul.f32 %v596, %v608
      %613 = vst.msk [vmem:[%s224] sm:$0xff] %vm518, %v609
      %614 = vst.msk [vmem:[%s224 + $0x8] sm:$0xff] %vm518, %v610
      %615 = vst.msk [vmem:[%s224 + $0x10] sm:$0xff] %vm518, %v611
      %616 = vst.msk [vmem:[%s224 + $0x18] sm:$0x7f] %vm528, %v612
      %p617 = scmp.lt.s32.totalorder %s16, 1
      %s618 = scalar_select %p617, %s16, 1
      %s619 = smul.addr %s618, 4
      %s620 = smul.addr %s619, 8
      %s621 = scalar_lea.vmem %s5, %s620
      // Predicated region
      $region41: #{_lambda_.5} parent=39 // pred_check
        %p622 = pneg %p144
      $region42: #{_lambda_.5} parent=39 // pred_check_branch
        %624 = sbr.rel (%p622) target = $region44
      $region43: #{_lambda_.5} parent=39 // pred_region
        _
      $region44: #{_lambda_.5} parent=39 // pred_fallthru
        _
    $region40: #{_lambda_.5} parent=5 // pred_fallthru
      _
    %p625 = scmp.le.s32.totalorder 2, %s11
    // Predicated region
    $region45: #{_lambda_.5} parent=5 // pred_check
      %p626 = pneg %p625
    $region46: #{_lambda_.5} parent=5 // pred_check_branch
      %628 = sbr.rel (%p626) target = $region48
    $region47: #{_lambda_.5} parent=5 // pred_region
      %s629 = ssub.s32 %s11, 2
      // Predicated region
      $region49: #{_lambda_.5} parent=47 // pred_check
        %p630 = pneg %p150
      $region50: #{_lambda_.5} parent=47 // pred_check_branch
        %632 = sbr.rel (%p630) target = $region52
      $region51: #{_lambda_.5} parent=47 // pred_region
        %p633 = scmp.lt.s32.totalorder %s17, 1
        %s634 = scalar_select %p633, %s17, 1
        %s635 = smul.addr %s634, 4
        %s636 = smul.addr %s635, 8
        %s637 = scalar_lea.vmem %s5, %s636
      $region52: #{_lambda_.5} parent=47 // pred_fallthru
        _
    $region48: #{_lambda_.5} parent=5 // pred_fallthru
      _
  $region6: #{_lambda_.5} parent=0 // loop_footer
    %s15 = sadd.s32 1, %s11
  $region7: #{_lambda_.5} parent=0 // loop_footer_branch
    %10 = sbr.rel target = $region3
  $region8: #{_lambda_.5} parent=0 // loop_exit
    _

// kernel: _lambda_.6
$region0: #{_lambda_.6}
  #allocation0 [shape = 'u32[]', space=smem, size = 0x4, offset = 0x4, fixed_abs, tag = 'smem constant byte address 0x4 - core index']
  #allocation1 [shape = 'u32[144,128]{1,0:T(1,128)}', space=vmem, size = 0x12000, scoped, tag = 'internal scratch']
  %s0 = inlined_call_operand.vmem [shape: f32[2,16,64], index: 0, kind: input, shape index: {}]
  %s1 = inlined_call_operand.vmem [shape: bf16[2,32,32], index: 1, kind: input, shape index: {}]
  %s2 = inlined_call_operand.vmem [shape: f32[1,32], index: 2, kind: input, shape index: {}]
  %s3 = inlined_call_operand.vmem [shape: f32[1,32], index: 3, kind: input, shape index: {}]
  %s4 = inlined_call_operand.vmem [shape: f32[1,32], index: 4, kind: input, shape index: {}]
  %s5 = inlined_call_operand.vmem [shape: f32[2,15,32], index: 5, kind: output, shape index: {}]
  %s6 = sld [smem:[#allocation0]]
  $region53: #{_lambda_.6} parent=0
    _
  %s8 = ssub.s32 1, %s6
  %s9 = scalar_select 0, %s8, %s6
  loop: start=0, step=1, limit=4
  $region2: #{_lambda_.6} parent=0 // loop_pre_header
    _
  $region3: #{_lambda_.6} parent=0 // loop_header
    %s11 = sphi 0, %s15
    %p12 = scmp.ge.s32.totalorder %s11, 4
    %s21 = sphi 0, %s23
    %s24 = sphi 0, %s21
    %s25 = sphi 0, %s24
    %s41 = sphi 0, %s25
    %s45 = sphi 0, %s45
    %s47 = sphi 0, %s45
    %s48 = sphi 0, %s47
    %s62 = sphi 0, %s48
    %s66 = sphi 0, %s66
    %s68 = sphi 0, %s66
    %s69 = sphi 0, %s68
    %s83 = sphi 0, %s69
    %s87 = sphi 0, %s87
    %s89 = sphi 0, %s87
    %s90 = sphi 0, %s89
    %s104 = sphi 0, %s90
    %s108 = sphi 0, %s108
    %s110 = sphi 0, %s108
    %s111 = sphi 0, %s110
    %s125 = sphi 0, %s111
    %s131 = sphi 0, %s133
    %s134 = sphi 0, %s131
    %s135 = sphi 0, %s134
    %s151 = sphi 0, %s135
  $region4: #{_lambda_.6} parent=0 // loop_header_branch
    %14 = sbr.rel (%p12) target = $region8
  $region5: #{_lambda_.6} parent=0 // loop_body
    %s16 = ssub.s32 %s11, 1
    %s17 = ssub.s32 %s11, 2
    %s18 = sadd.s32 %s11, 1
    %s19 = ssub.s32 %s11, %s18
    %p20 = scmp.eq.s32.totalorder %s19, 0
    %s22 = sadd.s32 %s21, 1
    %s23 = scalar_select %p20, %s21, %s22
    %p26 = pneg %p20
    %p27 = scmp.eq.s32.totalorder %s11, 1
    %p28 = por %p26, %p27
    %p29 = scmp.ne.s32.totalorder %s21, %s24
    %p30 = scmp.eq.s32.totalorder %s11, 0
    %p31 = por %p29, %p30
    %p32 = scmp.ne.s32.totalorder %s21, %s24
    %p33 = scmp.eq.s32.totalorder %s16, 1
    %p34 = por %p32, %p33
    %p35 = scmp.ne.s32.totalorder %s24, %s25
    %p36 = scmp.eq.s32.totalorder %s16, 0
    %p37 = por %p35, %p36
    %p38 = scmp.ne.s32.totalorder %s24, %s25
    %p39 = scmp.eq.s32.totalorder %s17, 1
    %p40 = por %p38, %p39
    %p42 = scmp.ne.s32.totalorder %s25, %s41
    %p43 = scmp.eq.s32.totalorder %s17, 0
    %p44 = por %p42, %p43
    %s46 = sadd.s32 %s45, 1
    %p49 = scmp.eq.s32.totalorder %s11, 1
    %p50 = scmp.ne.s32.totalorder %s45, %s47
    %p51 = scmp.eq.s32.totalorder %s11, 0
    %p52 = por %p50, %p51
    %p53 = scmp.ne.s32.totalorder %s45, %s47
    %p54 = scmp.eq.s32.totalorder %s16, 1
    %p55 = por %p53, %p54
    %p56 = scmp.ne.s32.totalorder %s47, %s48
    %p57 = scmp.eq.s32.totalorder %s16, 0
    %p58 = por %p56, %p57
    %p59 = scmp.ne.s32.totalorder %s47, %s48
    %p60 = scmp.eq.s32.totalorder %s17, 1
    %p61 = por %p59, %p60
    %p63 = scmp.ne.s32.totalorder %s48, %s62
    %p64 = scmp.eq.s32.totalorder %s17, 0
    %p65 = por %p63, %p64
    %s67 = sadd.s32 %s66, 1
    %p70 = scmp.eq.s32.totalorder %s11, 1
    %p71 = scmp.ne.s32.totalorder %s66, %s68
    %p72 = scmp.eq.s32.totalorder %s11, 0
    %p73 = por %p71, %p72
    %p74 = scmp.ne.s32.totalorder %s66, %s68
    %p75 = scmp.eq.s32.totalorder %s16, 1
    %p76 = por %p74, %p75
    %p77 = scmp.ne.s32.totalorder %s68, %s69
    %p78 = scmp.eq.s32.totalorder %s16, 0
    %p79 = por %p77, %p78
    %p80 = scmp.ne.s32.totalorder %s68, %s69
    %p81 = scmp.eq.s32.totalorder %s17, 1
    %p82 = por %p80, %p81
    %p84 = scmp.ne.s32.totalorder %s69, %s83
    %p85 = scmp.eq.s32.totalorder %s17, 0
    %p86 = por %p84, %p85
    %s88 = sadd.s32 %s87, 1
    %p91 = scmp.eq.s32.totalorder %s11, 1
    %p92 = scmp.ne.s32.totalorder %s87, %s89
    %p93 = scmp.eq.s32.totalorder %s11, 0
    %p94 = por %p92, %p93
    %p95 = scmp.ne.s32.totalorder %s87, %s89
    %p96 = scmp.eq.s32.totalorder %s16, 1
    %p97 = por %p95, %p96
    %p98 = scmp.ne.s32.totalorder %s89, %s90
    %p99 = scmp.eq.s32.totalorder %s16, 0
    %p100 = por %p98, %p99
    %p101 = scmp.ne.s32.totalorder %s89, %s90
    %p102 = scmp.eq.s32.totalorder %s17, 1
    %p103 = por %p101, %p102
    %p105 = scmp.ne.s32.totalorder %s90, %s104
    %p106 = scmp.eq.s32.totalorder %s17, 0
    %p107 = por %p105, %p106
    %s109 = sadd.s32 %s108, 1
    %p112 = scmp.eq.s32.totalorder %s11, 1
    %p113 = scmp.ne.s32.totalorder %s108, %s110
    %p114 = scmp.eq.s32.totalorder %s11, 0
    %p115 = por %p113, %p114
    %p116 = scmp.ne.s32.totalorder %s108, %s110
    %p117 = scmp.eq.s32.totalorder %s16, 1
    %p118 = por %p116, %p117
    %p119 = scmp.ne.s32.totalorder %s110, %s111
    %p120 = scmp.eq.s32.totalorder %s16, 0
    %p121 = por %p119, %p120
    %p122 = scmp.ne.s32.totalorder %s110, %s111
    %p123 = scmp.eq.s32.totalorder %s17, 1
    %p124 = por %p122, %p123
    %p126 = scmp.ne.s32.totalorder %s111, %s125
    %p127 = scmp.eq.s32.totalorder %s17, 0
    %p128 = por %p126, %p127
    %s129 = ssub.s32 %s11, %s18
    %p130 = scmp.eq.s32.totalorder %s129, 0
    %s132 = sadd.s32 %s131, 1
    %s133 = scalar_select %p130, %s131, %s132
    %p136 = pneg %p130
    %p137 = scmp.eq.s32.totalorder %s11, 1
    %p138 = por %p136, %p137
    %p139 = scmp.ne.s32.totalorder %s131, %s134
    %p140 = scmp.eq.s32.totalorder %s11, 0
    %p141 = por %p139, %p140
    %p142 = scmp.ne.s32.totalorder %s131, %s134
    %p143 = scmp.eq.s32.totalorder %s16, 1
    %p144 = por %p142, %p143
    %p145 = scmp.ne.s32.totalorder %s134, %s135
    %p146 = scmp.eq.s32.totalorder %s16, 0
    %p147 = por %p145, %p146
    %p148 = scmp.ne.s32.totalorder %s134, %s135
    %p149 = scmp.eq.s32.totalorder %s17, 1
    %p150 = por %p148, %p149
    %p152 = scmp.ne.s32.totalorder %s135, %s151
    %p153 = scmp.eq.s32.totalorder %s17, 0
    %p154 = por %p152, %p153
    %p155 = scmp.le.s32.totalorder 1, %s11
    %p156 = scmp.lt.s32.totalorder %s11, 3
    %p157 = pnand %p155, %p156
    %p158 = pneg %p157
    // Predicated region
    $region9: #{_lambda_.6} parent=5 // pred_check
      _
    $region10: #{_lambda_.6} parent=5 // pred_check_branch
      %160 = sbr.rel (%p157) target = $region12
    $region11: #{_lambda_.6} parent=5 // pred_region
      %s161 = ssub.s32 %s11, 1
      // Predicated region
      $region13: #{_lambda_.6} parent=11 // pred_check
        %p162 = pneg %p58
      $region14: #{_lambda_.6} parent=11 // pred_check_branch
        %164 = sbr.rel (%p162) target = $region16
      $region15: #{_lambda_.6} parent=11 // pred_region
        _
      $region16: #{_lambda_.6} parent=11 // pred_fallthru
        _
      // Predicated region
      $region17: #{_lambda_.6} parent=11 // pred_check
        %p165 = pneg %p79
      $region18: #{_lambda_.6} parent=11 // pred_check_branch
        %167 = sbr.rel (%p165) target = $region20
      $region19: #{_lambda_.6} parent=11 // pred_region
        _
      $region20: #{_lambda_.6} parent=11 // pred_fallthru
        _
      // Predicated region
      $region21: #{_lambda_.6} parent=11 // pred_check
        %p168 = pneg %p100
      $region22: #{_lambda_.6} parent=11 // pred_check_branch
        %170 = sbr.rel (%p168) target = $region24
      $region23: #{_lambda_.6} parent=11 // pred_region
        _
      $region24: #{_lambda_.6} parent=11 // pred_fallthru
        _
      // Predicated region
      $region25: #{_lambda_.6} parent=11 // pred_check
        %p171 = pneg %p121
      $region26: #{_lambda_.6} parent=11 // pred_check_branch
        %173 = sbr.rel (%p171) target = $region28
      $region27: #{_lambda_.6} parent=11 // pred_region
        _
      $region28: #{_lambda_.6} parent=11 // pred_fallthru
        _
    $region12: #{_lambda_.6} parent=5 // pred_fallthru
      _
    %p174 = scmp.lt.s32.totalorder %s11, 2
    // Predicated region
    $region29: #{_lambda_.6} parent=5 // pred_check
      %p175 = pneg %p174
    $region30: #{_lambda_.6} parent=5 // pred_check_branch
      %177 = sbr.rel (%p175) target = $region32
    $region31: #{_lambda_.6} parent=5 // pred_region
      // Predicated region
      $region33: #{_lambda_.6} parent=31 // pred_check
        %p178 = pneg %p31
      $region34: #{_lambda_.6} parent=31 // pred_check_branch
        %180 = sbr.rel (%p178) target = $region36
      $region35: #{_lambda_.6} parent=31 // pred_region
        %p181 = scmp.lt.s32.totalorder %s11, 1
        %s182 = scalar_select %p181, %s11, 1
        %s183 = smul.addr %s182, 2
        %s184 = smul.addr %s183, 8
        %s185 = scalar_lea.vmem %s0, %s184
      $region36: #{_lambda_.6} parent=31 // pred_fallthru
        _
    $region32: #{_lambda_.6} parent=5 // pred_fallthru
      _
    %p186 = scmp.le.s32.totalorder 1, %s11
    %p187 = scmp.lt.s32.totalorder %s11, 3
    %p188 = pnand %p186, %p187
    %p189 = pneg %p188
    // Predicated region
    $region37: #{_lambda_.6} parent=5 // pred_check
      _
    $region38: #{_lambda_.6} parent=5 // pred_check_branch
      %191 = sbr.rel (%p188) target = $region40
    $region39: #{_lambda_.6} parent=5 // pred_region
      %s192 = ssub.s32 %s11, 1
      %p193 = scmp.lt.s32.totalorder %s16, 1
      %s194 = scalar_select %p193, %s16, 1
      %s195 = smul.addr %s194, 2
      %s196 = smul.addr %s195, 8
      %s197 = scalar_lea.vmem %s0, %s196
      %p198 = pneg %p37
      %p199 = pneg %p34
      %p200 = pneg %p58
      %p201 = pneg %p55
      %p202 = pneg %p79
      %p203 = pneg %p76
      %p204 = pneg %p100
      %p205 = pneg %p97
      %p206 = pneg %p121
      %p207 = pneg %p118
      %p208 = pneg %p147
      %p209 = pneg %p144
      %p210 = scmp.lt.s32.totalorder %s16, 1
      %s211 = scalar_select %p210, %s16, 1
      %s212 = smul.addr %s211, 2
      %s213 = smul.addr %s212, 8
      %s214 = scalar_lea.vmem %s5, %s213
      %p215 = scmp.lt.s32.totalorder %s16, 1
      %s216 = scalar_select %p215, %s16, 1
      %s217 = smul.addr %s216, 2
      %s218 = smul.addr %s217, 8
      %s219 = scalar_lea.vmem %s0, %s218
      %p220 = scmp.lt.s32.totalorder %s16, 1
      %s221 = scalar_select %p220, %s16, 1
      %s222 = smul.addr %s221, 2
      %s223 = smul.addr %s222, 8
      %s224 = scalar_lea.vmem %s5, %s223
      %v226 = vld [vmem:[%s219] sm:$0xff]
      %v227 = vld [vmem:[%s219 + $0x8] sm:$0xff]
      %v228 = vpack.c.bf16 %v227, %v226
      %v229 = vld [vmem:[%s1] sm:$0xf]
      %v230 = vld [vmem:[%s1 + $0x4] sm:$0xf]
      %v231 = vld [vmem:[%s1 + $0x8] sm:$0xf]
      %v232 = vld [vmem:[%s1 + $0xc] sm:$0xf]
      %s233 = scalar_lea.vmem %s1, 16
      %v234 = vld [vmem:[%s233] sm:$0xf]
      %v235 = vld [vmem:[%s233 + $0x4] sm:$0xf]
      %v236 = vld [vmem:[%s233 + $0x8] sm:$0xf]
      %v237 = vld [vmem:[%s233 + $0xc] sm:$0xf]
      %239 = vrot.lane.b32.xlu0 %v228, 96
      %v240 = vpop.permute.xlu0 %239
      %v245 = vunpack.c.l.b16 %v234
      %v246 = vunpack.c.l.b16 %v235
      %v247 = vunpack.c.l.b16 %v236
      %v248 = vunpack.c.l.b16 %v237
      %v249 = vpack.c.b16 %v246, %v245
      %v250 = vpack.c.b16 %v248, %v247
      %vm253 = vcmask 261120
      %v255 = vsel %vm253, %v240, 0
      %257 = vmatprep.subr.bf16.mxu0 0
      %258 = vmatpush1.bf16.msra.mxu0 0
      %259 = vmatprep.subr.bf16.mxu0 0
      %260 = vmatpush1.bf16.msra.mxu0 0
      %261 = vmatprep.subr.bf16.mxu0 0
      %262 = vmatpush1.bf16.msra.mxu0 0
      %263 = vmatprep.subr.bf16.mxu0 0
      %264 = vmatpush1.bf16.msra.mxu0 0
      %265 = vmatprep.subr.bf16.mxu0 0
      %266 = vmatpush1.bf16.msra.mxu0 0
      %267 = vmatprep.subr.bf16.mxu0 0
      %268 = vmatpush1.bf16.msra.mxu0 0
      %269 = vmatprep.subr.bf16.mxu0 0
      %270 = vmatpush1.bf16.msra.mxu0 %v250
      %271 = vmatprep.subr.bf16.mxu0 0
      %272 = vmatpush1.bf16.msra.mxu0 %v249
      %273 = vmatprep.subr.bf16.mxu0 0
      %274 = vmatpush2.bf16.msra.mxu0 0
      %275 = vmatprep.subr.bf16.mxu0 0
      %276 = vmatpush2.bf16.msra.mxu0 0
      %277 = vmatprep.subr.bf16.mxu0 0
      %278 = vmatpush2.bf16.msra.mxu0 0
      %279 = vmatprep.subr.bf16.mxu0 0
      %280 = vmatpush2.bf16.msra.mxu0 0
      %281 = vmatprep.subr.bf16.mxu0 0
      %282 = vmatpush2.bf16.msra.mxu0 0
      %283 = vmatprep.subr.bf16.mxu0 0
      %284 = vmatpush2.bf16.msra.mxu0 0
      %285 = vmatprep.subr.bf16.mxu0 0
      %286 = vmatpush2.bf16.msra.mxu0 0
      %287 = vmatprep.subr.bf16.mxu0 0
      %288 = vmatpush2.bf16.msra.mxu0 0
      %289 = vmatprep.mubr.bf16.mxu0 0
      %290 = vmatmul.mubr.bf16.gmra.mxu0 %v255
      %v291 = vpop.f32.mrf.mxu0
      %v292 = vadd.f32 0.0, %v291
      %v293 = vpop.f32.mrf.mxu0
      %v294 = vpop.f32.mrf.mxu0
      %v295 = vadd.f32 0.0, %v294
      %v296 = vpop.f32.mrf.mxu0
      %297 = vdwg.mxu0
      %v302 = vunpack.c.l.b16 %v229
      %v303 = vunpack.c.l.b16 %v230
      %v304 = vunpack.c.l.b16 %v231
      %v305 = vunpack.c.l.b16 %v232
      %v306 = vpack.c.b16 %v303, %v302
      %v307 = vpack.c.b16 %v305, %v304
      %v311 = vsel %vm253, %v228, 0
      %313 = vmatprep.subr.bf16.mxu0 0
      %314 = vmatpush1.bf16.msra.mxu0 0
      %315 = vmatprep.subr.bf16.mxu0 0
      %316 = vmatpush1.bf16.msra.mxu0 0
      %317 = vmatprep.subr.bf16.mxu0 0
      %318 = vmatpush1.bf16.msra.mxu0 0
      %319 = vmatprep.subr.bf16.mxu0 0
      %320 = vmatpush1.bf16.msra.mxu0 0
      %321 = vmatprep.subr.bf16.mxu0 0
      %322 = vmatpush1.bf16.msra.mxu0 0
      %323 = vmatprep.subr.bf16.mxu0 0
      %324 = vmatpush1.bf16.msra.mxu0 0
      %325 = vmatprep.subr.bf16.mxu0 0
      %326 = vmatpush1.bf16.msra.mxu0 %v307
      %327 = vmatprep.subr.bf16.mxu0 0
      %328 = vmatpush1.bf16.msra.mxu0 %v306
      %329 = vmatprep.subr.bf16.mxu0 0
      %330 = vmatpush2.bf16.msra.mxu0 0
      %331 = vmatprep.subr.bf16.mxu0 0
      %332 = vmatpush2.bf16.msra.mxu0 0
      %333 = vmatprep.subr.bf16.mxu0 0
      %334 = vmatpush2.bf16.msra.mxu0 0
      %335 = vmatprep.subr.bf16.mxu0 0
      %336 = vmatpush2.bf16.msra.mxu0 0
      %337 = vmatprep.subr.bf16.mxu0 0
      %338 = vmatpush2.bf16.msra.mxu0 0
      %339 = vmatprep.subr.bf16.mxu0 0
      %340 = vmatpush2.bf16.msra.mxu0 0
      %341 = vmatprep.subr.bf16.mxu0 0
      %342 = vmatpush2.bf16.msra.mxu0 0
      %343 = vmatprep.subr.bf16.mxu0 0
      %344 = vmatpush2.bf16.msra.mxu0 0
      %345 = vmatprep.mubr.bf16.mxu0 0
      %346 = vmatmul.mubr.bf16.gmra.mxu0 %v311
      %v347 = vpop.f32.mrf.mxu0
      %v348 = vadd.f32 %v292, %v347
      %v349 = vpop.f32.mrf.mxu0
      %v350 = vpop.f32.mrf.mxu0
      %v351 = vadd.f32 %v295, %v350
      %v352 = vpop.f32.mrf.mxu0
      %353 = vdwg.mxu0
      %v354 = vld [vmem:[%s2] sm:$0x1]
      %v356 = vlaneseq
      %v357 = vshrl.u32 %v356, 7
      %v358 = vsub.s32 0, %v357
      %v359 = vrot.slane %v354, %v358
      %v361 = vadd.f32 %v348, %v359
      %v362 = vadd.f32 %v351, %v359
      %v363 = vld [vmem:[%s3] sm:$0x1]
      %v364 = vld [vmem:[%s4] sm:$0x1]
      %v365 = vsel %vm253, %v361, 0.0
      %366 = vadd.xlane.f32.xlu0 %v365
      %v367 = vpop.xlane.xlu0 %366
      %vm368 = vcmask 260096
      %v369 = vsel %vm368, %v362, 0.0
      %370 = vadd.xlane.f32.xlu0 %v369
      %v371 = vpop.xlane.xlu0 %370
      %v372 = vrcp.pop 32.0
      %v373 = vmul.f32 %v367, %v372
      %v374 = vmul.f32 %v371, %v372
      %v375 = vsub.f32 %v361, %v373
      %v376 = vsub.f32 %v362, %v374
      %v377 = vmul.f32 %v375, %v375
      %v378 = vmul.f32 %v376, %v376
      %v379 = vsel %vm253, %v377, 0.0
      %380 = vadd.xlane.f32.xlu0 %v379
      %v381 = vpop.xlane.xlu0 %380
      %v382 = vsel %vm368, %v378, 0.0
      %383 = vadd.xlane.f32.xlu0 %v382
      %v384 = vpop.xlane.xlu0 %383
      %v385 = vmul.f32 %v381, %v372
      %v386 = vmul.f32 %v384, %v372
      %v387 = vadd.f32 %v385, 1e-05
      %v388 = vadd.f32 %v386, 1e-05
      %v389 = vrsqrt.pop %v387
      %v390 = vrsqrt.pop %v388
      %v391 = vmul.f32 %v375, %v389
      %v392 = vmul.f32 %v376, %v390
      %v394 = vlaneseq
      %v395 = vshrl.u32 %v394, 7
      %v396 = vsub.s32 0, %v395
      %v397 = vrot.slane %v363, %v396
      %v399 = vmul.f32 %v391, %v397
      %v400 = vmul.f32 %v392, %v397
      %v402 = vlaneseq
      %v403 = vshrl.u32 %v402, 7
      %v404 = vsub.s32 0, %v403
      %v405 = vrot.slane %v364, %v404
      %v407 = vadd.f32 %v399, %v405
      %v408 = vadd.f32 %v400, %v405
      %v409 = vmul.f32 %v407, 0.5
      %v410 = vmul.f32 %v408, 0.5
      %v411 = vmul.f32 %v407, 0.70710677
      %v412 = vmul.f32 %v408, 0.70710677
      %v413 = verf.f32.pop %v411
      %v414 = verf.f32.pop %v412
      %v415 = vadd.f32 %v413, 1.0
      %v416 = vadd.f32 %v414, 1.0
      %v417 = vmul.f32 %v409, %v415
      %v418 = vmul.f32 %v410, %v416
      %419 = vst.msk [vmem:[%s224] sm:$0xff] %vm253, %v417
      %420 = vst.msk [vmem:[%s224 + $0x8] sm:$0x7f] %vm368, %v418
      %p421 = scmp.lt.s32.totalorder %s16, 1
      %s422 = scalar_select %p421, %s16, 1
      %s423 = smul.addr %s422, 2
      %s424 = smul.addr %s423, 8
      %s425 = scalar_lea.vmem %s5, %s424
      // Predicated region
      $region41: #{_lambda_.6} parent=39 // pred_check
        %p426 = pneg %p144
      $region42: #{_lambda_.6} parent=39 // pred_check_branch
        %428 = sbr.rel (%p426) target = $region44
      $region43: #{_lambda_.6} parent=39 // pred_region
        _
      $region44: #{_lambda_.6} parent=39 // pred_fallthru
        _
    $region40: #{_lambda_.6} parent=5 // pred_fallthru
      _
    %p429 = scmp.le.s32.totalorder 2, %s11
    // Predicated region
    $region45: #{_lambda_.6} parent=5 // pred_check
      %p430 = pneg %p429
    $region46: #{_lambda_.6} parent=5 // pred_check_branch
      %432 = sbr.rel (%p430) target = $region48
    $region47: #{_lambda_.6} parent=5 // pred_region
      %s433 = ssub.s32 %s11, 2
      // Predicated region
      $region49: #{_lambda_.6} parent=47 // pred_check
        %p434 = pneg %p150
      $region50: #{_lambda_.6} parent=47 // pred_check_branch
        %436 = sbr.rel (%p434) target = $region52
      $region51: #{_lambda_.6} parent=47 // pred_region
        %p437 = scmp.lt.s32.totalorder %s17, 1
        %s438 = scalar_select %p437, %s17, 1
        %s439 = smul.addr %s438, 2
        %s440 = smul.addr %s439, 8
        %s441 = scalar_lea.vmem %s5, %s440
      $region52: #{_lambda_.6} parent=47 // pred_fallthru
        _
    $region48: #{_lambda_.6} parent=5 // pred_fallthru
      _
  $region6: #{_lambda_.6} parent=0 // loop_footer
    %s15 = sadd.s32 1, %s11
  $region7: #{_lambda_.6} parent=0 // loop_footer_branch
    %10 = sbr.rel target = $region3
  $region8: #{_lambda_.6} parent=0 // loop_exit
    _

// kernel: _lambda_.7
$region0: #{_lambda_.7}
  #allocation0 [shape = 'u32[]', space=smem, size = 0x4, offset = 0x4, fixed_abs, tag = 'smem constant byte address 0x4 - core index']
  #allocation1 [shape = 'u32[144,128]{1,0:T(1,128)}', space=vmem, size = 0x12000, scoped, tag = 'internal scratch']
  %s0 = inlined_call_operand.vmem [shape: f32[30,32], index: 0, kind: input, shape index: {}]
  %s1 = inlined_call_operand.vmem [shape: f32[1,32], index: 1, kind: input, shape index: {}]
  %s2 = inlined_call_operand.vmem [shape: f32[1,32], index: 2, kind: input, shape index: {}]
  %s3 = inlined_call_operand.vmem [shape: bf16[32,32], index: 3, kind: input, shape index: {}]
  %s4 = inlined_call_operand.vmem [shape: f32[1,32], index: 4, kind: input, shape index: {}]
  %s5 = inlined_call_operand.vmem [shape: f32[30,32], index: 5, kind: output, shape index: {}]
  %s6 = sld [smem:[#allocation0]]
  $region30: #{_lambda_.7} parent=0
    _
  %s8 = ssub.s32 1, %s6
  %s9 = scalar_select 0, %s8, %s6
  // Predicated region
  $region2: #{_lambda_.7} parent=0 // pred_check
    _
  $region3: #{_lambda_.7} parent=0 // pred_check_branch
    %11 = sbr.rel (0) target = $region5
  $region4: #{_lambda_.7} parent=0 // pred_region
    _
  $region5: #{_lambda_.7} parent=0 // pred_fallthru
    _
  // Predicated region
  $region6: #{_lambda_.7} parent=0 // pred_check
    _
  $region7: #{_lambda_.7} parent=0 // pred_check_branch
    %13 = sbr.rel (0) target = $region9
  $region8: #{_lambda_.7} parent=0 // pred_region
    _
  $region9: #{_lambda_.7} parent=0 // pred_fallthru
    _
  // Predicated region
  $region10: #{_lambda_.7} parent=0 // pred_check
    _
  $region11: #{_lambda_.7} parent=0 // pred_check_branch
    %15 = sbr.rel (0) target = $region13
  $region12: #{_lambda_.7} parent=0 // pred_region
    _
  $region13: #{_lambda_.7} parent=0 // pred_fallthru
    _
  // Predicated region
  $region14: #{_lambda_.7} parent=0 // pred_check
    _
  $region15: #{_lambda_.7} parent=0 // pred_check_branch
    %17 = sbr.rel (0) target = $region17
  $region16: #{_lambda_.7} parent=0 // pred_region
    _
  $region17: #{_lambda_.7} parent=0 // pred_fallthru
    _
  // Predicated region
  $region18: #{_lambda_.7} parent=0 // pred_check
    _
  $region19: #{_lambda_.7} parent=0 // pred_check_branch
    %19 = sbr.rel (0) target = $region21
  $region20: #{_lambda_.7} parent=0 // pred_region
    _
  $region21: #{_lambda_.7} parent=0 // pred_fallthru
    _
  %v21 = vld [vmem:[%s0] sm:$0xff]
  %v22 = vld [vmem:[%s0 + $0x8] sm:$0xff]
  %v23 = vld [vmem:[%s0 + $0x10] sm:$0xff]
  %v24 = vld [vmem:[%s0 + $0x18] sm:$0x3f]
  %v25 = vld [vmem:[%s1] sm:$0x1]
  %v26 = vld [vmem:[%s2] sm:$0x1]
  %vm27 = vcmask 261120
  %v28 = vsel %vm27, %v21, 0.0
  %29 = vadd.xlane.f32.xlu0 %v28
  %v30 = vpop.xlane.xlu0 %29
  %v31 = vsel %vm27, %v22, 0.0
  %32 = vadd.xlane.f32.xlu0 %v31
  %v33 = vpop.xlane.xlu0 %32
  %v34 = vsel %vm27, %v23, 0.0
  %35 = vadd.xlane.f32.xlu0 %v34
  %v36 = vpop.xlane.xlu0 %35
  %vm37 = vcmask 259072
  %v38 = vsel %vm37, %v24, 0.0
  %39 = vadd.xlane.f32.xlu0 %v38
  %v40 = vpop.xlane.xlu0 %39
  %v41 = vrcp.pop 32.0
  %v42 = vmul.f32 %v30, %v41
  %v43 = vmul.f32 %v33, %v41
  %v44 = vmul.f32 %v36, %v41
  %v45 = vmul.f32 %v40, %v41
  %v46 = vsub.f32 %v21, %v42
  %v47 = vsub.f32 %v22, %v43
  %v48 = vsub.f32 %v23, %v44
  %v49 = vsub.f32 %v24, %v45
  %v50 = vmul.f32 %v46, %v46
  %v51 = vmul.f32 %v47, %v47
  %v52 = vmul.f32 %v48, %v48
  %v53 = vmul.f32 %v49, %v49
  %v54 = vsel %vm27, %v50, 0.0
  %55 = vadd.xlane.f32.xlu0 %v54
  %v56 = vpop.xlane.xlu0 %55
  %v57 = vsel %vm27, %v51, 0.0
  %58 = vadd.xlane.f32.xlu0 %v57
  %v59 = vpop.xlane.xlu0 %58
  %v60 = vsel %vm27, %v52, 0.0
  %61 = vadd.xlane.f32.xlu0 %v60
  %v62 = vpop.xlane.xlu0 %61
  %v63 = vsel %vm37, %v53, 0.0
  %64 = vadd.xlane.f32.xlu0 %v63
  %v65 = vpop.xlane.xlu0 %64
  %v66 = vmul.f32 %v56, %v41
  %v67 = vmul.f32 %v59, %v41
  %v68 = vmul.f32 %v62, %v41
  %v69 = vmul.f32 %v65, %v41
  %v70 = vadd.f32 %v66, 1e-05
  %v71 = vadd.f32 %v67, 1e-05
  %v72 = vadd.f32 %v68, 1e-05
  %v73 = vadd.f32 %v69, 1e-05
  %v74 = vrsqrt.pop %v70
  %v75 = vrsqrt.pop %v71
  %v76 = vrsqrt.pop %v72
  %v77 = vrsqrt.pop %v73
  %v78 = vmul.f32 %v46, %v74
  %v79 = vmul.f32 %v47, %v75
  %v80 = vmul.f32 %v48, %v76
  %v81 = vmul.f32 %v49, %v77
  %v83 = vlaneseq
  %v84 = vshrl.u32 %v83, 7
  %v85 = vsub.s32 0, %v84
  %v86 = vrot.slane %v25, %v85
  %v88 = vmul.f32 %v78, %v86
  %v89 = vmul.f32 %v79, %v86
  %v90 = vmul.f32 %v80, %v86
  %v91 = vmul.f32 %v81, %v86
  %v93 = vlaneseq
  %v94 = vshrl.u32 %v93, 7
  %v95 = vsub.s32 0, %v94
  %v96 = vrot.slane %v26, %v95
  %v98 = vadd.f32 %v88, %v96
  %v99 = vadd.f32 %v89, %v96
  %v100 = vadd.f32 %v90, %v96
  %v101 = vadd.f32 %v91, %v96
  %v102 = vpack.c.bf16 %v99, %v98
  %v103 = vpack.c.bf16 %v101, %v100
  %v104 = vld [vmem:[%s3] sm:$0xf]
  %v105 = vld [vmem:[%s3 + $0x4] sm:$0xf]
  %v106 = vld [vmem:[%s3 + $0x8] sm:$0xf]
  %v107 = vld [vmem:[%s3 + $0xc] sm:$0xf]
  %v108 = vld [vmem:[%s4] sm:$0x1]
  %v110 = vlaneseq
  %v111 = vshrl.u32 %v110, 7
  %v112 = vsub.s32 0, %v111
  %v113 = vrot.slane %v108, %v112
  %v119 = vunpack.c.l.b16 %v104
  %v120 = vunpack.c.l.b16 %v105
  %v121 = vunpack.c.l.b16 %v106
  %v122 = vunpack.c.l.b16 %v107
  %v123 = vpack.c.b16 %v120, %v119
  %v124 = vpack.c.b16 %v122, %v121
  %v128 = vsel %vm27, %v102, 0
  %v131 = vsel %vm27, %v103, 0
  %133 = vmatprep.subr.bf16.mxu0 0
  %134 = vmatpush1.bf16.msra.mxu0 0
  %135 = vmatprep.subr.bf16.mxu0 0
  %136 = vmatpush1.bf16.msra.mxu0 0
  %137 = vmatprep.subr.bf16.mxu0 0
  %138 = vmatpush1.bf16.msra.mxu0 0
  %139 = vmatprep.subr.bf16.mxu0 0
  %140 = vmatpush1.bf16.msra.mxu0 0
  %141 = vmatprep.subr.bf16.mxu0 0
  %142 = vmatpush1.bf16.msra.mxu0 0
  %143 = vmatprep.subr.bf16.mxu0 0
  %144 = vmatpush1.bf16.msra.mxu0 0
  %145 = vmatprep.subr.bf16.mxu0 0
  %146 = vmatpush1.bf16.msra.mxu0 %v124
  %147 = vmatprep.subr.bf16.mxu0 0
  %148 = vmatpush1.bf16.msra.mxu0 %v123
  %149 = vmatprep.subr.bf16.mxu0 0
  %150 = vmatpush2.bf16.msra.mxu0 0
  %151 = vmatprep.subr.bf16.mxu0 0
  %152 = vmatpush2.bf16.msra.mxu0 0
  %153 = vmatprep.subr.bf16.mxu0 0
  %154 = vmatpush2.bf16.msra.mxu0 0
  %155 = vmatprep.subr.bf16.mxu0 0
  %156 = vmatpush2.bf16.msra.mxu0 0
  %157 = vmatprep.subr.bf16.mxu0 0
  %158 = vmatpush2.bf16.msra.mxu0 0
  %159 = vmatprep.subr.bf16.mxu0 0
  %160 = vmatpush2.bf16.msra.mxu0 0
  %161 = vmatprep.subr.bf16.mxu0 0
  %162 = vmatpush2.bf16.msra.mxu0 0
  %163 = vmatprep.subr.bf16.mxu0 0
  %164 = vmatpush2.bf16.msra.mxu0 0
  %165 = vmatprep.mubr.bf16.mxu0 0
  %166 = vmatmul.mubr.bf16.gmra.mxu0 %v128
  %v167 = vpop.f32.mrf.mxu0
  %v168 = vadd.f32 %v113, %v167
  %v169 = vpop.f32.mrf.mxu0
  %v170 = vpop.f32.mrf.mxu0
  %v171 = vadd.f32 %v113, %v170
  %v172 = vpop.f32.mrf.mxu0
  %173 = vmatprep.mubr.bf16.mxu0 0
  %174 = vmatmul.mubr.bf16.gmra.mxu0 %v131
  %v175 = vpop.f32.mrf.mxu0
  %v176 = vadd.f32 %v113, %v175
  %v177 = vpop.f32.mrf.mxu0
  %v178 = vpop.f32.mrf.mxu0
  %v179 = vadd.f32 %v113, %v178
  %v180 = vpop.f32.mrf.mxu0
  %181 = vdwg.mxu0
  %182 = vst.msk [vmem:[%s5] sm:$0xff] %vm27, %v168
  %183 = vst.msk [vmem:[%s5 + $0x8] sm:$0xff] %vm27, %v171
  %184 = vst.msk [vmem:[%s5 + $0x10] sm:$0xff] %vm27, %v176
  %185 = vst.msk [vmem:[%s5 + $0x18] sm:$0x3f] %vm37, %v179
  // Predicated region
  $region22: #{_lambda_.7} parent=0 // pred_check
    _
  $region23: #{_lambda_.7} parent=0 // pred_check_branch
    %187 = sbr.rel (0) target = $region25
  $region24: #{_lambda_.7} parent=0 // pred_region
    _
  $region25: #{_lambda_.7} parent=0 // pred_fallthru
    _
  // Predicated region
  $region26: #{_lambda_.7} parent=0 // pred_check
    _
  $region27: #{_lambda_.7} parent=0 // pred_check_branch
    %189 = sbr.rel (0) target = $region29
  $region28: #{_lambda_.7} parent=0 // pred_region
    _
  $region29: #{_lambda_.7} parent=0 // pred_fallthru
    _

// kernel: _lambda_.9
$region0: #{_lambda_.9}
  #allocation0 [shape = 'u32[]', space=smem, size = 0x4, offset = 0x4, fixed_abs, tag = 'smem constant byte address 0x4 - core index']
  #allocation1 [shape = 'u32[144,128]{1,0:T(1,128)}', space=vmem, size = 0x12000, scoped, tag = 'internal scratch']
  %s0 = inlined_call_operand.vmem [shape: f32[2,15,32], index: 0, kind: input, shape index: {}]
  %s1 = inlined_call_operand.vmem [shape: f32[1,1,32], index: 1, kind: input, shape index: {}]
  %s2 = inlined_call_operand.vmem [shape: f32[1,1,32], index: 2, kind: input, shape index: {}]
  %s3 = inlined_call_operand.vmem [shape: bf16[32,256], index: 3, kind: input, shape index: {}]
  %s4 = inlined_call_operand.vmem [shape: f32[1,256], index: 4, kind: input, shape index: {}]
  %s5 = inlined_call_operand.vmem [shape: bf16[256,10], index: 5, kind: input, shape index: {}]
  %s6 = inlined_call_operand.vmem [shape: f32[1,10], index: 6, kind: input, shape index: {}]
  %s7 = inlined_call_operand.hbm [shape: f32[2,10], index: 7, kind: output, shape index: {}]
  %s8 = sld [smem:[#allocation0]]
  $region38: #{_lambda_.9} parent=0
    _
  %s10 = ssub.s32 1, %s8
  %s11 = scalar_select 0, %s10, %s8
  $region1: #{_lambda_.9} parent=0
    #allocation2 [shape = 'u8[1024]{0}', space=vmem, size = 0x400, scoped, tag = 'output window, operand 0, single buffered']
    #allocation3 [shape = 's32[1]{0}', space=sflag, size = 0x4, scoped, tag = 'scoped memory for _lambda_.9']
    %12 = vsyncpa [#allocation3], 0
    // Predicated region
    $region2: #{_lambda_.9} parent=1 // pred_check
      _
    $region3: #{_lambda_.9} parent=1 // pred_check_branch
      %14 = sbr.rel (0) target = $region5
    $region4: #{_lambda_.9} parent=1 // pred_region
      _
    $region5: #{_lambda_.9} parent=1 // pred_fallthru
      _
    // Predicated region
    $region6: #{_lambda_.9} parent=1 // pred_check
      _
    $region7: #{_lambda_.9} parent=1 // pred_check_branch
      %16 = sbr.rel (0) target = $region9
    $region8: #{_lambda_.9} parent=1 // pred_region
      _
    $region9: #{_lambda_.9} parent=1 // pred_fallthru
      _
    // Predicated region
    $region10: #{_lambda_.9} parent=1 // pred_check
      _
    $region11: #{_lambda_.9} parent=1 // pred_check_branch
      %18 = sbr.rel (0) target = $region13
    $region12: #{_lambda_.9} parent=1 // pred_region
      _
    $region13: #{_lambda_.9} parent=1 // pred_fallthru
      _
    // Predicated region
    $region14: #{_lambda_.9} parent=1 // pred_check
      _
    $region15: #{_lambda_.9} parent=1 // pred_check_branch
      %20 = sbr.rel (0) target = $region17
    $region16: #{_lambda_.9} parent=1 // pred_region
      _
    $region17: #{_lambda_.9} parent=1 // pred_fallthru
      _
    // Predicated region
    $region18: #{_lambda_.9} parent=1 // pred_check
      _
    $region19: #{_lambda_.9} parent=1 // pred_check_branch
      %22 = sbr.rel (0) target = $region21
    $region20: #{_lambda_.9} parent=1 // pred_region
      _
    $region21: #{_lambda_.9} parent=1 // pred_fallthru
      _
    // Predicated region
    $region22: #{_lambda_.9} parent=1 // pred_check
      _
    $region23: #{_lambda_.9} parent=1 // pred_check_branch
      %24 = sbr.rel (0) target = $region25
    $region24: #{_lambda_.9} parent=1 // pred_region
      _
    $region25: #{_lambda_.9} parent=1 // pred_fallthru
      _
    // Predicated region
    $region26: #{_lambda_.9} parent=1 // pred_check
      _
    $region27: #{_lambda_.9} parent=1 // pred_check_branch
      %26 = sbr.rel (0) target = $region29
    $region28: #{_lambda_.9} parent=1 // pred_region
      _
    $region29: #{_lambda_.9} parent=1 // pred_fallthru
      _
    %v28 = vld [vmem:[%s0] sm:$0xff]
    %v29 = vld [vmem:[%s0 + $0x8] sm:$0x7f]
    %v30 = vld [vmem:[%s0 + $0x10] sm:$0xff]
    %v31 = vld [vmem:[%s0 + $0x18] sm:$0x7f]
    %v32 = vld [vmem:[%s1] sm:$0x1]
    %v33 = vld [vmem:[%s2] sm:$0x1]
    %vm34 = vcmask 261120
    %v35 = vsel %vm34, %v28, 0.0
    %36 = vadd.xlane.f32.xlu0 %v35
    %v37 = vpop.xlane.xlu0 %36
    %vm38 = vcmask 260096
    %v39 = vsel %vm38, %v29, 0.0
    %40 = vadd.xlane.f32.xlu0 %v39
    %v41 = vpop.xlane.xlu0 %40
    %v42 = vsel %vm34, %v30, 0.0
    %43 = vadd.xlane.f32.xlu0 %v42
    %v44 = vpop.xlane.xlu0 %43
    %v45 = vsel %vm38, %v31, 0.0
    %46 = vadd.xlane.f32.xlu0 %v45
    %v47 = vpop.xlane.xlu0 %46
    %v48 = vrcp.pop 32.0
    %v49 = vmul.f32 %v37, %v48
    %v50 = vmul.f32 %v41, %v48
    %v51 = vmul.f32 %v44, %v48
    %v52 = vmul.f32 %v47, %v48
    %v53 = vsub.f32 %v28, %v49
    %v54 = vsub.f32 %v29, %v50
    %v55 = vsub.f32 %v30, %v51
    %v56 = vsub.f32 %v31, %v52
    %v57 = vmul.f32 %v53, %v53
    %v58 = vmul.f32 %v54, %v54
    %v59 = vmul.f32 %v55, %v55
    %v60 = vmul.f32 %v56, %v56
    %v61 = vsel %vm34, %v57, 0.0
    %62 = vadd.xlane.f32.xlu0 %v61
    %v63 = vpop.xlane.xlu0 %62
    %v64 = vsel %vm38, %v58, 0.0
    %65 = vadd.xlane.f32.xlu0 %v64
    %v66 = vpop.xlane.xlu0 %65
    %v67 = vsel %vm34, %v59, 0.0
    %68 = vadd.xlane.f32.xlu0 %v67
    %v69 = vpop.xlane.xlu0 %68
    %v70 = vsel %vm38, %v60, 0.0
    %71 = vadd.xlane.f32.xlu0 %v70
    %v72 = vpop.xlane.xlu0 %71
    %v73 = vmul.f32 %v63, %v48
    %v74 = vmul.f32 %v66, %v48
    %v75 = vmul.f32 %v69, %v48
    %v76 = vmul.f32 %v72, %v48
    %v77 = vadd.f32 %v73, 1e-05
    %v78 = vadd.f32 %v74, 1e-05
    %v79 = vadd.f32 %v75, 1e-05
    %v80 = vadd.f32 %v76, 1e-05
    %v81 = vrsqrt.pop %v77
    %v82 = vrsqrt.pop %v78
    %v83 = vrsqrt.pop %v79
    %v84 = vrsqrt.pop %v80
    %v85 = vmul.f32 %v53, %v81
    %v86 = vmul.f32 %v54, %v82
    %v87 = vmul.f32 %v55, %v83
    %v88 = vmul.f32 %v56, %v84
    %v90 = vlaneseq
    %v91 = vshrl.u32 %v90, 7
    %v92 = vsub.s32 0, %v91
    %v93 = vrot.slane %v32, %v92
    %v95 = vmul.f32 %v85, %v93
    %v96 = vmul.f32 %v86, %v93
    %v97 = vmul.f32 %v87, %v93
    %v98 = vmul.f32 %v88, %v93
    %v100 = vlaneseq
    %v101 = vshrl.u32 %v100, 7
    %v102 = vsub.s32 0, %v101
    %v103 = vrot.slane %v33, %v102
    %v105 = vadd.f32 %v95, %v103
    %v106 = vadd.f32 %v96, %v103
    %v107 = vadd.f32 %v97, %v103
    %v108 = vadd.f32 %v98, %v103
    %v109 = vsel %vm34, %v105, 0.0
    %v110 = vsel %vm38, %v106, 0.0
    %v111 = vadd.f32 %v109, %v110
    %v112 = vrot.slane %v111, 4
    %v113 = vadd.f32 %v111, %v112
    %v114 = vrot.slane %v113, 2
    %v115 = vadd.f32 %v113, %v114
    %v116 = vrot.slane %v115, 1
    %v117 = vadd.f32 %v115, %v116
    %v118 = vsel %vm34, %v107, 0.0
    %v119 = vsel %vm38, %v108, 0.0
    %v120 = vadd.f32 %v118, %v119
    %v121 = vrot.slane %v120, 4
    %v122 = vadd.f32 %v120, %v121
    %v123 = vrot.slane %v122, 2
    %v124 = vadd.f32 %v122, %v123
    %v125 = vrot.slane %v124, 1
    %v126 = vadd.f32 %v124, %v125
    %v127 = vrcp.pop 15.0
    %v128 = vmul.f32 %v117, %v127
    %v129 = vmul.f32 %v126, %v127
    %v130 = vpack.c.bf16 %v128, %v128
    %v131 = vpack.c.bf16 %v129, %v129
    %v132 = vld [vmem:[%s3] sm:$0xff]
    %v133 = vld [vmem:[%s3 + $0x8] sm:$0xff]
    %v134 = vld [vmem:[%s3 + $0x10] sm:$0xff]
    %v135 = vld [vmem:[%s3 + $0x18] sm:$0xff]
    %v136 = vld [vmem:[%s4] sm:$0x3]
    %v138 = vlaneseq
    %v139 = vshrl.u32 %v138, 7
    %v140 = vsub.s32 0, %v139
    %v141 = vrot.slane %v136, %v140
    %v142 = vlaneseq
    %v143 = vshrl.u32 %v142, 7
    %v144 = vsub.s32 1, %v143
    %v145 = vrot.slane %v136, %v144
    %v150 = vunpack.c.l.b16 %v130
    %v151 = vunpack.c.l.b16 %v131
    %vm152 = vcmask 1041409
    %v153 = vsel %vm152, %v151, %v150
    %v154 = vpack.c.b16 %v153, %v153
    %v159 = vunpack.c.l.b16 %v132
    %v160 = vunpack.c.h.b16 %v132
    %v161 = vunpack.c.l.b16 %v133
    %v162 = vunpack.c.h.b16 %v133
    %v163 = vunpack.c.l.b16 %v134
    %v164 = vunpack.c.h.b16 %v134
    %v165 = vunpack.c.l.b16 %v135
    %v166 = vunpack.c.h.b16 %v135
    %v167 = vpack.c.b16 %v161, %v159
    %v168 = vpack.c.b16 %v162, %v160
    %v169 = vpack.c.b16 %v165, %v163
    %v170 = vpack.c.b16 %v166, %v164
    %v176 = vsel %vm34, %v154, 0
    %178 = vmatprep.subr.bf16.mxu0 0
    %179 = vmatpush1.bf16.msra.mxu0 0
    %180 = vmatprep.subr.bf16.mxu0 0
    %181 = vmatpush1.bf16.msra.mxu0 0
    %182 = vmatprep.subr.bf16.mxu0 0
    %183 = vmatpush1.bf16.msra.mxu0 0
    %184 = vmatprep.subr.bf16.mxu0 0
    %185 = vmatpush1.bf16.msra.mxu0 0
    %186 = vmatprep.subr.bf16.mxu0 0
    %187 = vmatpush1.bf16.msra.mxu0 0
    %188 = vmatprep.subr.bf16.mxu0 0
    %189 = vmatpush1.bf16.msra.mxu0 0
    %190 = vmatprep.subr.bf16.mxu0 %v170
    %191 = vmatpush1.bf16.msra.mxu0 %v169
    %192 = vmatprep.subr.bf16.mxu0 %v168
    %193 = vmatpush1.bf16.msra.mxu0 %v167
    %194 = vmatprep.subr.bf16.mxu0 0
    %195 = vmatpush2.bf16.msra.mxu0 0
    %196 = vmatprep.subr.bf16.mxu0 0
    %197 = vmatpush2.bf16.msra.mxu0 0
    %198 = vmatprep.subr.bf16.mxu0 0
    %199 = vmatpush2.bf16.msra.mxu0 0
    %200 = vmatprep.subr.bf16.mxu0 0
    %201 = vmatpush2.bf16.msra.mxu0 0
    %202 = vmatprep.subr.bf16.mxu0 0
    %203 = vmatpush2.bf16.msra.mxu0 0
    %204 = vmatprep.subr.bf16.mxu0 0
    %205 = vmatpush2.bf16.msra.mxu0 0
    %206 = vmatprep.subr.bf16.mxu0 0
    %207 = vmatpush2.bf16.msra.mxu0 0
    %208 = vmatprep.subr.bf16.mxu0 0
    %209 = vmatpush2.bf16.msra.mxu0 0
    %210 = vmatprep.mubr.bf16.mxu0 0
    %211 = vmatmul.mubr.bf16.gmra.mxu0 %v176
    %v212 = vpop.f32.mrf.mxu0
    %v213 = vadd.f32 %v141, %v212
    %v214 = vpop.f32.mrf.mxu0
    %v215 = vadd.f32 %v145, %v214
    %v216 = vpop.f32.mrf.mxu0
    %v217 = vpop.f32.mrf.mxu0
    %218 = vdwg.mxu0
    %v219 = vpack.c.bf16 %v213, %v213
    %v220 = vpack.c.bf16 %v215, %v215
    %v221 = vld [vmem:[%s5] sm:$0xf]
    %v222 = vld [vmem:[%s5 + $0x4] sm:$0xf]
    %v223 = vld [vmem:[%s5 + $0x8] sm:$0xf]
    %v224 = vld [vmem:[%s5 + $0xc] sm:$0xf]
    %v225 = vld [vmem:[%s5 + $0x10] sm:$0xf]
    %v226 = vld [vmem:[%s5 + $0x14] sm:$0xf]
    %v227 = vld [vmem:[%s5 + $0x18] sm:$0xf]
    %v228 = vld [vmem:[%s5 + $0x1c] sm:$0xf]
    %v229 = vld [vmem:[%s5 + $0x20] sm:$0xf]
    %v230 = vld [vmem:[%s5 + $0x24] sm:$0xf]
    %v231 = vld [vmem:[%s5 + $0x28] sm:$0xf]
    %v232 = vld [vmem:[%s5 + $0x2c] sm:$0xf]
    %v233 = vld [vmem:[%s5 + $0x30] sm:$0xf]
    %v234 = vld [vmem:[%s5 + $0x34] sm:$0xf]
    %v235 = vld [vmem:[%s5 + $0x38] sm:$0xf]
    %v236 = vld [vmem:[%s5 + $0x3c] sm:$0xf]
    %v237 = vld [vmem:[%s5 + $0x40] sm:$0xf]
    %v238 = vld [vmem:[%s5 + $0x44] sm:$0xf]
    %v239 = vld [vmem:[%s5 + $0x48] sm:$0xf]
    %v240 = vld [vmem:[%s5 + $0x4c] sm:$0xf]
    %v241 = vld [vmem:[%s5 + $0x50] sm:$0xf]
    %v242 = vld [vmem:[%s5 + $0x54] sm:$0xf]
    %v243 = vld [vmem:[%s5 + $0x58] sm:$0xf]
    %v244 = vld [vmem:[%s5 + $0x5c] sm:$0xf]
    %v245 = vld [vmem:[%s5 + $0x60] sm:$0xf]
    %v246 = vld [vmem:[%s5 + $0x64] sm:$0xf]
    %v247 = vld [vmem:[%s5 + $0x68] sm:$0xf]
    %v248 = vld [vmem:[%s5 + $0x6c] sm:$0xf]
    %v249 = vld [vmem:[%s5 + $0x70] sm:$0xf]
    %v250 = vld [vmem:[%s5 + $0x74] sm:$0xf]
    %v251 = vld [vmem:[%s5 + $0x78] sm:$0xf]
    %v252 = vld [vmem:[%s5 + $0x7c] sm:$0xf]
    %v253 = vld [vmem:[%s6] sm:$0x1]
    %v255 = vlaneseq
    %v256 = vshrl.u32 %v255, 7
    %v257 = vsub.s32 0, %v256
    %v258 = vrot.slane %v253, %v257
    %v292 = vunpack.c.l.b16 %v221
    %v293 = vunpack.c.l.b16 %v222
    %v294 = vunpack.c.l.b16 %v223
    %v295 = vunpack.c.l.b16 %v224
    %v296 = vunpack.c.l.b16 %v225
    %v297 = vunpack.c.l.b16 %v226
    %v298 = vunpack.c.l.b16 %v227
    %v299 = vunpack.c.l.b16 %v228
    %v300 = vunpack.c.l.b16 %v229
    %v301 = vunpack.c.l.b16 %v230
    %v302 = vunpack.c.l.b16 %v231
    %v303 = vunpack.c.l.b16 %v232
    %v304 = vunpack.c.l.b16 %v233
    %v305 = vunpack.c.l.b16 %v234
    %v306 = vunpack.c.l.b16 %v235
    %v307 = vunpack.c.l.b16 %v236
    %v308 = vunpack.c.l.b16 %v237
    %v309 = vunpack.c.l.b16 %v238
    %v310 = vunpack.c.l.b16 %v239
    %v311 = vunpack.c.l.b16 %v240
    %v312 = vunpack.c.l.b16 %v241
    %v313 = vunpack.c.l.b16 %v242
    %v314 = vunpack.c.l.b16 %v243
    %v315 = vunpack.c.l.b16 %v244
    %v316 = vunpack.c.l.b16 %v245
    %v317 = vunpack.c.l.b16 %v246
    %v318 = vunpack.c.l.b16 %v247
    %v319 = vunpack.c.l.b16 %v248
    %v320 = vunpack.c.l.b16 %v249
    %v321 = vunpack.c.l.b16 %v250
    %v322 = vunpack.c.l.b16 %v251
    %v323 = vunpack.c.l.b16 %v252
    %v324 = vpack.c.b16 %v293, %v292
    %v325 = vpack.c.b16 %v295, %v294
    %v326 = vpack.c.b16 %v297, %v296
    %v327 = vpack.c.b16 %v299, %v298
    %v328 = vpack.c.b16 %v301, %v300
    %v329 = vpack.c.b16 %v303, %v302
    %v330 = vpack.c.b16 %v305, %v304
    %v331 = vpack.c.b16 %v307, %v306
    %v332 = vpack.c.b16 %v309, %v308
    %v333 = vpack.c.b16 %v311, %v310
    %v334 = vpack.c.b16 %v313, %v312
    %v335 = vpack.c.b16 %v315, %v314
    %v336 = vpack.c.b16 %v317, %v316
    %v337 = vpack.c.b16 %v319, %v318
    %v338 = vpack.c.b16 %v321, %v320
    %v339 = vpack.c.b16 %v323, %v322
    %356 = vmatprep.subr.bf16.mxu0 0
    %357 = vmatpush1.bf16.msra.mxu0 %v331
    %358 = vmatprep.subr.bf16.mxu0 0
    %359 = vmatpush1.bf16.msra.mxu0 %v330
    %360 = vmatprep.subr.bf16.mxu0 0
    %361 = vmatpush1.bf16.msra.mxu0 %v329
    %362 = vmatprep.subr.bf16.mxu0 0
    %363 = vmatpush1.bf16.msra.mxu0 %v328
    %364 = vmatprep.subr.bf16.mxu0 0
    %365 = vmatpush1.bf16.msra.mxu0 %v327
    %366 = vmatprep.subr.bf16.mxu0 0
    %367 = vmatpush1.bf16.msra.mxu0 %v326
    %368 = vmatprep.subr.bf16.mxu0 0
    %369 = vmatpush1.bf16.msra.mxu0 %v325
    %370 = vmatprep.subr.bf16.mxu0 0
    %371 = vmatpush1.bf16.msra.mxu0 %v324
    %372 = vmatprep.subr.bf16.mxu0 0
    %373 = vmatpush2.bf16.msra.mxu0 %v339
    %374 = vmatprep.subr.bf16.mxu0 0
    %375 = vmatpush2.bf16.msra.mxu0 %v338
    %376 = vmatprep.subr.bf16.mxu0 0
    %377 = vmatpush2.bf16.msra.mxu0 %v337
    %378 = vmatprep.subr.bf16.mxu0 0
    %379 = vmatpush2.bf16.msra.mxu0 %v336
    %380 = vmatprep.subr.bf16.mxu0 0
    %381 = vmatpush2.bf16.msra.mxu0 %v335
    %382 = vmatprep.subr.bf16.mxu0 0
    %383 = vmatpush2.bf16.msra.mxu0 %v334
    %384 = vmatprep.subr.bf16.mxu0 0
    %385 = vmatpush2.bf16.msra.mxu0 %v333
    %386 = vmatprep.subr.bf16.mxu0 0
    %387 = vmatpush2.bf16.msra.mxu0 %v332
    %388 = vmatprep.mubr.bf16.mxu0 %v220
    %389 = vmatmul.mubr.bf16.gmra.mxu0 %v219
    %v390 = vpop.f32.mrf.mxu0
    %v391 = vadd.f32 %v258, %v390
    %v392 = vpop.f32.mrf.mxu0
    %v393 = vpop.f32.mrf.mxu0
    %v394 = vpop.f32.mrf.mxu0
    %395 = vdwg.mxu0
    %vm396 = vcmask 74752
    %397 = vst.msk [vmem:[#allocation2] sm:$0x3] %vm396, %v391
    // Predicated region
    $region30: #{_lambda_.9} parent=1 // pred_check
      _
    $region31: #{_lambda_.9} parent=1 // pred_check_branch
      %399 = sbr.rel (0) target = $region33
    $region32: #{_lambda_.9} parent=1 // pred_region
      %s401 = ssub.s32 32, 32
      %402 = vsyncadd [#allocation3], %s401
      %s404 = sshll.u32 [#allocation2], 4
      %s405 = int_to_ptr.vmem [resolvable:$true] %s404
      %407 = dma.vmem_to_hbm [thread:$0]  %s405, 32, %s7, [#allocation3]
    $region33: #{_lambda_.9} parent=1 // pred_fallthru
      _
    // Predicated region
    $region34: #{_lambda_.9} parent=1 // pred_check
      _
    $region35: #{_lambda_.9} parent=1 // pred_check_branch
      %409 = sbr.rel (0) target = $region37
    $region36: #{_lambda_.9} parent=1 // pred_region
      %410 = dma.done [#allocation3], 32
    $region37: #{_lambda_.9} parent=1 // pred_fallthru
      _
    %411 = vsyncpa [#allocation3], 1

// kernel: _lambda_.8
$region0: #{_lambda_.8}
  #allocation0 [shape = 'u32[]', space=smem, size = 0x4, offset = 0x4, fixed_abs, tag = 'smem constant byte address 0x4 - core index']
  #allocation1 [shape = 'u32[144,128]{1,0:T(1,128)}', space=vmem, size = 0x12000, scoped, tag = 'internal scratch']
  %s0 = inlined_call_operand.vmem [shape: f32[2,23,32], index: 0, kind: input, shape index: {}]
  %s1 = inlined_call_operand.vmem [shape: bf16[8,32,32], index: 1, kind: input, shape index: {}]
  %s2 = inlined_call_operand.vmem [shape: f32[1,32], index: 2, kind: input, shape index: {}]
  %s3 = inlined_call_operand.vmem [shape: f32[2,1,32], index: 3, kind: input, shape index: {}]
  %s4 = inlined_call_operand.vmem [shape: f32[2,1,32], index: 4, kind: input, shape index: {}]
  %s5 = inlined_call_operand.vmem [shape: bf16[2,32,96], index: 5, kind: input, shape index: {}]
  %s6 = inlined_call_operand.vmem [shape: f32[2,1,96], index: 6, kind: input, shape index: {}]
  %s7 = inlined_call_operand.vmem [shape: bf16[2,32,32], index: 7, kind: input, shape index: {}]
  %s8 = inlined_call_operand.vmem [shape: f32[2,1,32], index: 8, kind: input, shape index: {}]
  %s9 = inlined_call_operand.vmem [shape: f32[2,1,32], index: 9, kind: input, shape index: {}]
  %s10 = inlined_call_operand.vmem [shape: f32[2,1,32], index: 10, kind: input, shape index: {}]
  %s11 = inlined_call_operand.vmem [shape: bf16[2,32,64], index: 11, kind: input, shape index: {}]
  %s12 = inlined_call_operand.vmem [shape: f32[2,1,64], index: 12, kind: input, shape index: {}]
  %s13 = inlined_call_operand.vmem [shape: bf16[2,64,32], index: 13, kind: input, shape index: {}]
  %s14 = inlined_call_operand.vmem [shape: f32[2,1,32], index: 14, kind: input, shape index: {}]
  %s15 = inlined_call_operand.vmem [shape: f32[2,15,32], index: 15, kind: output, shape index: {}]
  %s16 = sld [smem:[#allocation0]]
  $region97: #{_lambda_.8} parent=0
    _
  %s18 = ssub.s32 1, %s16
  %s19 = scalar_select 0, %s18, %s16
  loop: start=0, step=1, limit=6
  $region2: #{_lambda_.8} parent=0 // loop_pre_header
    _
  $region3: #{_lambda_.8} parent=0 // loop_header
    %s21 = sphi 0, %s25
    %p22 = scmp.ge.s32.totalorder %s21, 6
    %s28 = sphi 0, %s40
    %s29 = sphi 0, %s36
    %s30 = sphi 0, %s28
    %s31 = sphi 0, %s29
    %s32 = sphi 0, %s30
    %s33 = sphi 0, %s31
    %s43 = sphi 0, %s45
    %s46 = sphi 0, %s43
    %s47 = sphi 0, %s46
    %s63 = sphi 0, %s47
    %s67 = sphi 0, %s67
    %s69 = sphi 0, %s67
    %s70 = sphi 0, %s69
    %s84 = sphi 0, %s70
    %s88 = sphi 0, %s88
    %s90 = sphi 0, %s88
    %s91 = sphi 0, %s90
    %s105 = sphi 0, %s91
    %s111 = sphi 0, %s113
    %s114 = sphi 0, %s111
    %s115 = sphi 0, %s114
    %s131 = sphi 0, %s115
    %s137 = sphi 0, %s139
    %s140 = sphi 0, %s137
    %s141 = sphi 0, %s140
    %s157 = sphi 0, %s141
    %s163 = sphi 0, %s165
    %s166 = sphi 0, %s163
    %s167 = sphi 0, %s166
    %s183 = sphi 0, %s167
    %s189 = sphi 0, %s191
    %s192 = sphi 0, %s189
    %s193 = sphi 0, %s192
    %s209 = sphi 0, %s193
    %s215 = sphi 0, %s217
    %s218 = sphi 0, %s215
    %s219 = sphi 0, %s218
    %s235 = sphi 0, %s219
    %s241 = sphi 0, %s243
    %s244 = sphi 0, %s241
    %s245 = sphi 0, %s244
    %s261 = sphi 0, %s245
    %s267 = sphi 0, %s269
    %s270 = sphi 0, %s267
    %s271 = sphi 0, %s270
    %s287 = sphi 0, %s271
    %s293 = sphi 0, %s295
    %s296 = sphi 0, %s293
    %s297 = sphi 0, %s296
    %s313 = sphi 0, %s297
    %s319 = sphi 0, %s321
    %s322 = sphi 0, %s319
    %s323 = sphi 0, %s322
    %s339 = sphi 0, %s323
    %s345 = sphi 0, %s347
    %s348 = sphi 0, %s345
    %s349 = sphi 0, %s348
    %s365 = sphi 0, %s349
    %s371 = sphi 0, %s373
    %s374 = sphi 0, %s371
    %s375 = sphi 0, %s374
    %s391 = sphi 0, %s375
    %s397 = sphi 0, %s399
    %s400 = sphi 0, %s397
    %s401 = sphi 0, %s400
    %s417 = sphi 0, %s401
    %s423 = sphi 0, %s425
    %s426 = sphi 0, %s423
    %s427 = sphi 0, %s426
    %s443 = sphi 0, %s427
  $region4: #{_lambda_.8} parent=0 // loop_header_branch
    %24 = sbr.rel (%p22) target = $region8
  $region5: #{_lambda_.8} parent=0 // loop_body
    %s26 = ssub.s32 %s21, 1
    %s27 = ssub.s32 %s21, 2
    %s34 = sadd.s32 1, %s29
    %p35 = scmp.ge.s32.totalorder %s34, 2
    %s36 = scalar_select %p35, 0, %s34
    %s37 = sadd.s32 1, %s28
    %s38 = scalar_select %p35, %s37, %s28
    %p39 = scmp.ge.s32.totalorder %s38, 2
    %s40 = scalar_select %p39, 0, %s38
    %s41 = ssub.s32 %s28, %s40
    %p42 = scmp.eq.s32.totalorder %s41, 0
    %s44 = sadd.s32 %s43, 1
    %s45 = scalar_select %p42, %s43, %s44
    %p48 = pneg %p42
    %p49 = scmp.eq.s32.totalorder %s21, 3
    %p50 = por %p48, %p49
    %p51 = scmp.ne.s32.totalorder %s43, %s46
    %p52 = scmp.eq.s32.totalorder %s21, 0
    %p53 = por %p51, %p52
    %p54 = scmp.ne.s32.totalorder %s43, %s46
    %p55 = scmp.eq.s32.totalorder %s26, 3
    %p56 = por %p54, %p55
    %p57 = scmp.ne.s32.totalorder %s46, %s47
    %p58 = scmp.eq.s32.totalorder %s26, 0
    %p59 = por %p57, %p58
    %p60 = scmp.ne.s32.totalorder %s46, %s47
    %p61 = scmp.eq.s32.totalorder %s27, 3
    %p62 = por %p60, %p61
    %p64 = scmp.ne.s32.totalorder %s47, %s63
    %p65 = scmp.eq.s32.totalorder %s27, 0
    %p66 = por %p64, %p65
    %s68 = sadd.s32 %s67, 1
    %p71 = scmp.eq.s32.totalorder %s21, 3
    %p72 = scmp.ne.s32.totalorder %s67, %s69
    %p73 = scmp.eq.s32.totalorder %s21, 0
    %p74 = por %p72, %p73
    %p75 = scmp.ne.s32.totalorder %s67, %s69
    %p76 = scmp.eq.s32.totalorder %s26, 3
    %p77 = por %p75, %p76
    %p78 = scmp.ne.s32.totalorder %s69, %s70
    %p79 = scmp.eq.s32.totalorder %s26, 0
    %p80 = por %p78, %p79
    %p81 = scmp.ne.s32.totalorder %s69, %s70
    %p82 = scmp.eq.s32.totalorder %s27, 3
    %p83 = por %p81, %p82
    %p85 = scmp.ne.s32.totalorder %s70, %s84
    %p86 = scmp.eq.s32.totalorder %s27, 0
    %p87 = por %p85, %p86
    %s89 = sadd.s32 %s88, 1
    %p92 = scmp.eq.s32.totalorder %s21, 3
    %p93 = scmp.ne.s32.totalorder %s88, %s90
    %p94 = scmp.eq.s32.totalorder %s21, 0
    %p95 = por %p93, %p94
    %p96 = scmp.ne.s32.totalorder %s88, %s90
    %p97 = scmp.eq.s32.totalorder %s26, 3
    %p98 = por %p96, %p97
    %p99 = scmp.ne.s32.totalorder %s90, %s91
    %p100 = scmp.eq.s32.totalorder %s26, 0
    %p101 = por %p99, %p100
    %p102 = scmp.ne.s32.totalorder %s90, %s91
    %p103 = scmp.eq.s32.totalorder %s27, 3
    %p104 = por %p102, %p103
    %p106 = scmp.ne.s32.totalorder %s91, %s105
    %p107 = scmp.eq.s32.totalorder %s27, 0
    %p108 = por %p106, %p107
    %s109 = ssub.s32 %s29, %s36
    %p110 = scmp.eq.s32.totalorder %s109, 0
    %s112 = sadd.s32 %s111, 1
    %s113 = scalar_select %p110, %s111, %s112
    %p116 = pneg %p110
    %p117 = scmp.eq.s32.totalorder %s21, 3
    %p118 = por %p116, %p117
    %p119 = scmp.ne.s32.totalorder %s111, %s114
    %p120 = scmp.eq.s32.totalorder %s21, 0
    %p121 = por %p119, %p120
    %p122 = scmp.ne.s32.totalorder %s111, %s114
    %p123 = scmp.eq.s32.totalorder %s26, 3
    %p124 = por %p122, %p123
    %p125 = scmp.ne.s32.totalorder %s114, %s115
    %p126 = scmp.eq.s32.totalorder %s26, 0
    %p127 = por %p125, %p126
    %p128 = scmp.ne.s32.totalorder %s114, %s115
    %p129 = scmp.eq.s32.totalorder %s27, 3
    %p130 = por %p128, %p129
    %p132 = scmp.ne.s32.totalorder %s115, %s131
    %p133 = scmp.eq.s32.totalorder %s27, 0
    %p134 = por %p132, %p133
    %s135 = ssub.s32 %s29, %s36
    %p136 = scmp.eq.s32.totalorder %s135, 0
    %s138 = sadd.s32 %s137, 1
    %s139 = scalar_select %p136, %s137, %s138
    %p142 = pneg %p136
    %p143 = scmp.eq.s32.totalorder %s21, 3
    %p144 = por %p142, %p143
    %p145 = scmp.ne.s32.totalorder %s137, %s140
    %p146 = scmp.eq.s32.totalorder %s21, 0
    %p147 = por %p145, %p146
    %p148 = scmp.ne.s32.totalorder %s137, %s140
    %p149 = scmp.eq.s32.totalorder %s26, 3
    %p150 = por %p148, %p149
    %p151 = scmp.ne.s32.totalorder %s140, %s141
    %p152 = scmp.eq.s32.totalorder %s26, 0
    %p153 = por %p151, %p152
    %p154 = scmp.ne.s32.totalorder %s140, %s141
    %p155 = scmp.eq.s32.totalorder %s27, 3
    %p156 = por %p154, %p155
    %p158 = scmp.ne.s32.totalorder %s141, %s157
    %p159 = scmp.eq.s32.totalorder %s27, 0
    %p160 = por %p158, %p159
    %s161 = ssub.s32 %s29, %s36
    %p162 = scmp.eq.s32.totalorder %s161, 0
    %s164 = sadd.s32 %s163, 1
    %s165 = scalar_select %p162, %s163, %s164
    %p168 = pneg %p162
    %p169 = scmp.eq.s32.totalorder %s21, 3
    %p170 = por %p168, %p169
    %p171 = scmp.ne.s32.totalorder %s163, %s166
    %p172 = scmp.eq.s32.totalorder %s21, 0
    %p173 = por %p171, %p172
    %p174 = scmp.ne.s32.totalorder %s163, %s166
    %p175 = scmp.eq.s32.totalorder %s26, 3
    %p176 = por %p174, %p175
    %p177 = scmp.ne.s32.totalorder %s166, %s167
    %p178 = scmp.eq.s32.totalorder %s26, 0
    %p179 = por %p177, %p178
    %p180 = scmp.ne.s32.totalorder %s166, %s167
    %p181 = scmp.eq.s32.totalorder %s27, 3
    %p182 = por %p180, %p181
    %p184 = scmp.ne.s32.totalorder %s167, %s183
    %p185 = scmp.eq.s32.totalorder %s27, 0
    %p186 = por %p184, %p185
    %s187 = ssub.s32 %s29, %s36
    %p188 = scmp.eq.s32.totalorder %s187, 0
    %s190 = sadd.s32 %s189, 1
    %s191 = scalar_select %p188, %s189, %s190
    %p194 = pneg %p188
    %p195 = scmp.eq.s32.totalorder %s21, 3
    %p196 = por %p194, %p195
    %p197 = scmp.ne.s32.totalorder %s189, %s192
    %p198 = scmp.eq.s32.totalorder %s21, 0
    %p199 = por %p197, %p198
    %p200 = scmp.ne.s32.totalorder %s189, %s192
    %p201 = scmp.eq.s32.totalorder %s26, 3
    %p202 = por %p200, %p201
    %p203 = scmp.ne.s32.totalorder %s192, %s193
    %p204 = scmp.eq.s32.totalorder %s26, 0
    %p205 = por %p203, %p204
    %p206 = scmp.ne.s32.totalorder %s192, %s193
    %p207 = scmp.eq.s32.totalorder %s27, 3
    %p208 = por %p206, %p207
    %p210 = scmp.ne.s32.totalorder %s193, %s209
    %p211 = scmp.eq.s32.totalorder %s27, 0
    %p212 = por %p210, %p211
    %s213 = ssub.s32 %s29, %s36
    %p214 = scmp.eq.s32.totalorder %s213, 0
    %s216 = sadd.s32 %s215, 1
    %s217 = scalar_select %p214, %s215, %s216
    %p220 = pneg %p214
    %p221 = scmp.eq.s32.totalorder %s21, 3
    %p222 = por %p220, %p221
    %p223 = scmp.ne.s32.totalorder %s215, %s218
    %p224 = scmp.eq.s32.totalorder %s21, 0
    %p225 = por %p223, %p224
    %p226 = scmp.ne.s32.totalorder %s215, %s218
    %p227 = scmp.eq.s32.totalorder %s26, 3
    %p228 = por %p226, %p227
    %p229 = scmp.ne.s32.totalorder %s218, %s219
    %p230 = scmp.eq.s32.totalorder %s26, 0
    %p231 = por %p229, %p230
    %p232 = scmp.ne.s32.totalorder %s218, %s219
    %p233 = scmp.eq.s32.totalorder %s27, 3
    %p234 = por %p232, %p233
    %p236 = scmp.ne.s32.totalorder %s219, %s235
    %p237 = scmp.eq.s32.totalorder %s27, 0
    %p238 = por %p236, %p237
    %s239 = ssub.s32 %s29, %s36
    %p240 = scmp.eq.s32.totalorder %s239, 0
    %s242 = sadd.s32 %s241, 1
    %s243 = scalar_select %p240, %s241, %s242
    %p246 = pneg %p240
    %p247 = scmp.eq.s32.totalorder %s21, 3
    %p248 = por %p246, %p247
    %p249 = scmp.ne.s32.totalorder %s241, %s244
    %p250 = scmp.eq.s32.totalorder %s21, 0
    %p251 = por %p249, %p250
    %p252 = scmp.ne.s32.totalorder %s241, %s244
    %p253 = scmp.eq.s32.totalorder %s26, 3
    %p254 = por %p252, %p253
    %p255 = scmp.ne.s32.totalorder %s244, %s245
    %p256 = scmp.eq.s32.totalorder %s26, 0
    %p257 = por %p255, %p256
    %p258 = scmp.ne.s32.totalorder %s244, %s245
    %p259 = scmp.eq.s32.totalorder %s27, 3
    %p260 = por %p258, %p259
    %p262 = scmp.ne.s32.totalorder %s245, %s261
    %p263 = scmp.eq.s32.totalorder %s27, 0
    %p264 = por %p262, %p263
    %s265 = ssub.s32 %s29, %s36
    %p266 = scmp.eq.s32.totalorder %s265, 0
    %s268 = sadd.s32 %s267, 1
    %s269 = scalar_select %p266, %s267, %s268
    %p272 = pneg %p266
    %p273 = scmp.eq.s32.totalorder %s21, 3
    %p274 = por %p272, %p273
    %p275 = scmp.ne.s32.totalorder %s267, %s270
    %p276 = scmp.eq.s32.totalorder %s21, 0
    %p277 = por %p275, %p276
    %p278 = scmp.ne.s32.totalorder %s267, %s270
    %p279 = scmp.eq.s32.totalorder %s26, 3
    %p280 = por %p278, %p279
    %p281 = scmp.ne.s32.totalorder %s270, %s271
    %p282 = scmp.eq.s32.totalorder %s26, 0
    %p283 = por %p281, %p282
    %p284 = scmp.ne.s32.totalorder %s270, %s271
    %p285 = scmp.eq.s32.totalorder %s27, 3
    %p286 = por %p284, %p285
    %p288 = scmp.ne.s32.totalorder %s271, %s287
    %p289 = scmp.eq.s32.totalorder %s27, 0
    %p290 = por %p288, %p289
    %s291 = ssub.s32 %s29, %s36
    %p292 = scmp.eq.s32.totalorder %s291, 0
    %s294 = sadd.s32 %s293, 1
    %s295 = scalar_select %p292, %s293, %s294
    %p298 = pneg %p292
    %p299 = scmp.eq.s32.totalorder %s21, 3
    %p300 = por %p298, %p299
    %p301 = scmp.ne.s32.totalorder %s293, %s296
    %p302 = scmp.eq.s32.totalorder %s21, 0
    %p303 = por %p301, %p302
    %p304 = scmp.ne.s32.totalorder %s293, %s296
    %p305 = scmp.eq.s32.totalorder %s26, 3
    %p306 = por %p304, %p305
    %p307 = scmp.ne.s32.totalorder %s296, %s297
    %p308 = scmp.eq.s32.totalorder %s26, 0
    %p309 = por %p307, %p308
    %p310 = scmp.ne.s32.totalorder %s296, %s297
    %p311 = scmp.eq.s32.totalorder %s27, 3
    %p312 = por %p310, %p311
    %p314 = scmp.ne.s32.totalorder %s297, %s313
    %p315 = scmp.eq.s32.totalorder %s27, 0
    %p316 = por %p314, %p315
    %s317 = ssub.s32 %s29, %s36
    %p318 = scmp.eq.s32.totalorder %s317, 0
    %s320 = sadd.s32 %s319, 1
    %s321 = scalar_select %p318, %s319, %s320
    %p324 = pneg %p318
    %p325 = scmp.eq.s32.totalorder %s21, 3
    %p326 = por %p324, %p325
    %p327 = scmp.ne.s32.totalorder %s319, %s322
    %p328 = scmp.eq.s32.totalorder %s21, 0
    %p329 = por %p327, %p328
    %p330 = scmp.ne.s32.totalorder %s319, %s322
    %p331 = scmp.eq.s32.totalorder %s26, 3
    %p332 = por %p330, %p331
    %p333 = scmp.ne.s32.totalorder %s322, %s323
    %p334 = scmp.eq.s32.totalorder %s26, 0
    %p335 = por %p333, %p334
    %p336 = scmp.ne.s32.totalorder %s322, %s323
    %p337 = scmp.eq.s32.totalorder %s27, 3
    %p338 = por %p336, %p337
    %p340 = scmp.ne.s32.totalorder %s323, %s339
    %p341 = scmp.eq.s32.totalorder %s27, 0
    %p342 = por %p340, %p341
    %s343 = ssub.s32 %s29, %s36
    %p344 = scmp.eq.s32.totalorder %s343, 0
    %s346 = sadd.s32 %s345, 1
    %s347 = scalar_select %p344, %s345, %s346
    %p350 = pneg %p344
    %p351 = scmp.eq.s32.totalorder %s21, 3
    %p352 = por %p350, %p351
    %p353 = scmp.ne.s32.totalorder %s345, %s348
    %p354 = scmp.eq.s32.totalorder %s21, 0
    %p355 = por %p353, %p354
    %p356 = scmp.ne.s32.totalorder %s345, %s348
    %p357 = scmp.eq.s32.totalorder %s26, 3
    %p358 = por %p356, %p357
    %p359 = scmp.ne.s32.totalorder %s348, %s349
    %p360 = scmp.eq.s32.totalorder %s26, 0
    %p361 = por %p359, %p360
    %p362 = scmp.ne.s32.totalorder %s348, %s349
    %p363 = scmp.eq.s32.totalorder %s27, 3
    %p364 = por %p362, %p363
    %p366 = scmp.ne.s32.totalorder %s349, %s365
    %p367 = scmp.eq.s32.totalorder %s27, 0
    %p368 = por %p366, %p367
    %s369 = ssub.s32 %s29, %s36
    %p370 = scmp.eq.s32.totalorder %s369, 0
    %s372 = sadd.s32 %s371, 1
    %s373 = scalar_select %p370, %s371, %s372
    %p376 = pneg %p370
    %p377 = scmp.eq.s32.totalorder %s21, 3
    %p378 = por %p376, %p377
    %p379 = scmp.ne.s32.totalorder %s371, %s374
    %p380 = scmp.eq.s32.totalorder %s21, 0
    %p381 = por %p379, %p380
    %p382 = scmp.ne.s32.totalorder %s371, %s374
    %p383 = scmp.eq.s32.totalorder %s26, 3
    %p384 = por %p382, %p383
    %p385 = scmp.ne.s32.totalorder %s374, %s375
    %p386 = scmp.eq.s32.totalorder %s26, 0
    %p387 = por %p385, %p386
    %p388 = scmp.ne.s32.totalorder %s374, %s375
    %p389 = scmp.eq.s32.totalorder %s27, 3
    %p390 = por %p388, %p389
    %p392 = scmp.ne.s32.totalorder %s375, %s391
    %p393 = scmp.eq.s32.totalorder %s27, 0
    %p394 = por %p392, %p393
    %s395 = ssub.s32 %s29, %s36
    %p396 = scmp.eq.s32.totalorder %s395, 0
    %s398 = sadd.s32 %s397, 1
    %s399 = scalar_select %p396, %s397, %s398
    %p402 = pneg %p396
    %p403 = scmp.eq.s32.totalorder %s21, 3
    %p404 = por %p402, %p403
    %p405 = scmp.ne.s32.totalorder %s397, %s400
    %p406 = scmp.eq.s32.totalorder %s21, 0
    %p407 = por %p405, %p406
    %p408 = scmp.ne.s32.totalorder %s397, %s400
    %p409 = scmp.eq.s32.totalorder %s26, 3
    %p410 = por %p408, %p409
    %p411 = scmp.ne.s32.totalorder %s400, %s401
    %p412 = scmp.eq.s32.totalorder %s26, 0
    %p413 = por %p411, %p412
    %p414 = scmp.ne.s32.totalorder %s400, %s401
    %p415 = scmp.eq.s32.totalorder %s27, 3
    %p416 = por %p414, %p415
    %p418 = scmp.ne.s32.totalorder %s401, %s417
    %p419 = scmp.eq.s32.totalorder %s27, 0
    %p420 = por %p418, %p419
    %s421 = ssub.s32 %s28, %s40
    %p422 = scmp.eq.s32.totalorder %s421, 0
    %s424 = sadd.s32 %s423, 1
    %s425 = scalar_select %p422, %s423, %s424
    %p428 = pneg %p422
    %p429 = scmp.eq.s32.totalorder %s21, 3
    %p430 = por %p428, %p429
    %p431 = scmp.ne.s32.totalorder %s423, %s426
    %p432 = scmp.eq.s32.totalorder %s21, 0
    %p433 = por %p431, %p432
    %p434 = scmp.ne.s32.totalorder %s423, %s426
    %p435 = scmp.eq.s32.totalorder %s26, 3
    %p436 = por %p434, %p435
    %p437 = scmp.ne.s32.totalorder %s426, %s427
    %p438 = scmp.eq.s32.totalorder %s26, 0
    %p439 = por %p437, %p438
    %p440 = scmp.ne.s32.totalorder %s426, %s427
    %p441 = scmp.eq.s32.totalorder %s27, 3
    %p442 = por %p440, %p441
    %p444 = scmp.ne.s32.totalorder %s427, %s443
    %p445 = scmp.eq.s32.totalorder %s27, 0
    %p446 = por %p444, %p445
    %p447 = scmp.le.s32.totalorder 1, %s21
    %p448 = scmp.lt.s32.totalorder %s21, 5
    %p449 = pnand %p447, %p448
    %p450 = pneg %p449
    // Predicated region
    $region9: #{_lambda_.8} parent=5 // pred_check
      _
    $region10: #{_lambda_.8} parent=5 // pred_check_branch
      %452 = sbr.rel (%p449) target = $region12
    $region11: #{_lambda_.8} parent=5 // pred_region
      %s453 = ssub.s32 %s21, 1
      // Predicated region
      $region13: #{_lambda_.8} parent=11 // pred_check
        %p454 = pneg %p80
      $region14: #{_lambda_.8} parent=11 // pred_check_branch
        %456 = sbr.rel (%p454) target = $region16
      $region15: #{_lambda_.8} parent=11 // pred_region
        _
      $region16: #{_lambda_.8} parent=11 // pred_fallthru
        _
      // Predicated region
      $region17: #{_lambda_.8} parent=11 // pred_check
        %p457 = pneg %p101
      $region18: #{_lambda_.8} parent=11 // pred_check_branch
        %459 = sbr.rel (%p457) target = $region20
      $region19: #{_lambda_.8} parent=11 // pred_region
        _
      $region20: #{_lambda_.8} parent=11 // pred_fallthru
        _
    $region12: #{_lambda_.8} parent=5 // pred_fallthru
      _
    %p460 = scmp.lt.s32.totalorder %s21, 4
    // Predicated region
    $region21: #{_lambda_.8} parent=5 // pred_check
      %p461 = pneg %p460
    $region22: #{_lambda_.8} parent=5 // pred_check_branch
      %463 = sbr.rel (%p461) target = $region24
    $region23: #{_lambda_.8} parent=5 // pred_region
      // Predicated region
      $region25: #{_lambda_.8} parent=23 // pred_check
        %p464 = pneg %p53
      $region26: #{_lambda_.8} parent=23 // pred_check_branch
        %466 = sbr.rel (%p464) target = $region28
      $region27: #{_lambda_.8} parent=23 // pred_region
        %p467 = scmp.lt.s32.totalorder %s28, 1
        %s468 = scalar_select %p467, %s28, 1
        %s469 = smul.addr %s468, 3
        %s470 = smul.addr %s469, 8
        %s471 = scalar_lea.vmem %s0, %s470
      $region28: #{_lambda_.8} parent=23 // pred_fallthru
        _
      // Predicated region
      $region29: #{_lambda_.8} parent=23 // pred_check
        %p472 = pneg %p121
      $region30: #{_lambda_.8} parent=23 // pred_check_branch
        %474 = sbr.rel (%p472) target = $region32
      $region31: #{_lambda_.8} parent=23 // pred_region
        %p475 = scmp.lt.s32.totalorder %s29, 1
        %s476 = scalar_select %p475, %s29, 1
        %s477 = scalar_lea.vmem %s3, %s476
      $region32: #{_lambda_.8} parent=23 // pred_fallthru
        _
      // Predicated region
      $region33: #{_lambda_.8} parent=23 // pred_check
        %p478 = pneg %p147
      $region34: #{_lambda_.8} parent=23 // pred_check_branch
        %480 = sbr.rel (%p478) target = $region36
      $region35: #{_lambda_.8} parent=23 // pred_region
        %p481 = scmp.lt.s32.totalorder %s29, 1
        %s482 = scalar_select %p481, %s29, 1
        %s483 = scalar_lea.vmem %s4, %s482
      $region36: #{_lambda_.8} parent=23 // pred_fallthru
        _
      // Predicated region
      $region37: #{_lambda_.8} parent=23 // pred_check
        %p484 = pneg %p173
      $region38: #{_lambda_.8} parent=23 // pred_check_branch
        %486 = sbr.rel (%p484) target = $region40
      $region39: #{_lambda_.8} parent=23 // pred_region
        %p487 = scmp.lt.s32.totalorder %s29, 1
        %s488 = scalar_select %p487, %s29, 1
        %s489 = smul.addr %s488, 4
        %s490 = smul.addr %s489, 4
        %s491 = scalar_lea.vmem %s5, %s490
      $region40: #{_lambda_.8} parent=23 // pred_fallthru
        _
      // Predicated region
      $region41: #{_lambda_.8} parent=23 // pred_check
        %p492 = pneg %p199
      $region42: #{_lambda_.8} parent=23 // pred_check_branch
        %494 = sbr.rel (%p492) target = $region44
      $region43: #{_lambda_.8} parent=23 // pred_region
        %p495 = scmp.lt.s32.totalorder %s29, 1
        %s496 = scalar_select %p495, %s29, 1
        %s497 = scalar_lea.vmem %s6, %s496
      $region44: #{_lambda_.8} parent=23 // pred_fallthru
        _
      // Predicated region
      $region45: #{_lambda_.8} parent=23 // pred_check
        %p498 = pneg %p225
      $region46: #{_lambda_.8} parent=23 // pred_check_branch
        %500 = sbr.rel (%p498) target = $region48
      $region47: #{_lambda_.8} parent=23 // pred_region
        %p501 = scmp.lt.s32.totalorder %s29, 1
        %s502 = scalar_select %p501, %s29, 1
        %s503 = smul.addr %s502, 4
        %s504 = smul.addr %s503, 4
        %s505 = scalar_lea.vmem %s7, %s504
      $region48: #{_lambda_.8} parent=23 // pred_fallthru
        _
      // Predicated region
      $region49: #{_lambda_.8} parent=23 // pred_check
        %p506 = pneg %p251
      $region50: #{_lambda_.8} parent=23 // pred_check_branch
        %508 = sbr.rel (%p506) target = $region52
      $region51: #{_lambda_.8} parent=23 // pred_region
        %p509 = scmp.lt.s32.totalorder %s29, 1
        %s510 = scalar_select %p509, %s29, 1
        %s511 = scalar_lea.vmem %s8, %s510
      $region52: #{_lambda_.8} parent=23 // pred_fallthru
        _
      // Predicated region
      $region53: #{_lambda_.8} parent=23 // pred_check
        %p512 = pneg %p277
      $region54: #{_lambda_.8} parent=23 // pred_check_branch
        %514 = sbr.rel (%p512) target = $region56
      $region55: #{_lambda_.8} parent=23 // pred_region
        %p515 = scmp.lt.s32.totalorder %s29, 1
        %s516 = scalar_select %p515, %s29, 1
        %s517 = scalar_lea.vmem %s9, %s516
      $region56: #{_lambda_.8} parent=23 // pred_fallthru
        _
      // Predicated region
      $region57: #{_lambda_.8} parent=23 // pred_check
        %p518 = pneg %p303
      $region58: #{_lambda_.8} parent=23 // pred_check_branch
        %520 = sbr.rel (%p518) target = $region60
      $region59: #{_lambda_.8} parent=23 // pred_region
        %p521 = scmp.lt.s32.totalorder %s29, 1
        %s522 = scalar_select %p521, %s29, 1
        %s523 = scalar_lea.vmem %s10, %s522
      $region60: #{_lambda_.8} parent=23 // pred_fallthru
        _
      // Predicated region
      $region61: #{_lambda_.8} parent=23 // pred_check
        %p524 = pneg %p329
      $region62: #{_lambda_.8} parent=23 // pred_check_branch
        %526 = sbr.rel (%p524) target = $region64
      $region63: #{_lambda_.8} parent=23 // pred_region
        %p527 = scmp.lt.s32.totalorder %s29, 1
        %s528 = scalar_select %p527, %s29, 1
        %s529 = smul.addr %s528, 4
        %s530 = smul.addr %s529, 4
        %s531 = scalar_lea.vmem %s11, %s530
      $region64: #{_lambda_.8} parent=23 // pred_fallthru
        _
      // Predicated region
      $region65: #{_lambda_.8} parent=23 // pred_check
        %p532 = pneg %p355
      $region66: #{_lambda_.8} parent=23 // pred_check_branch
        %534 = sbr.rel (%p532) target = $region68
      $region67: #{_lambda_.8} parent=23 // pred_region
        %p535 = scmp.lt.s32.totalorder %s29, 1
        %s536 = scalar_select %p535, %s29, 1
        %s537 = scalar_lea.vmem %s12, %s536
      $region68: #{_lambda_.8} parent=23 // pred_fallthru
        _
      // Predicated region
      $region69: #{_lambda_.8} parent=23 // pred_check
        %p538 = pneg %p381
      $region70: #{_lambda_.8} parent=23 // pred_check_branch
        %540 = sbr.rel (%p538) target = $region72
      $region71: #{_lambda_.8} parent=23 // pred_region
        %p541 = scmp.lt.s32.totalorder %s29, 1
        %s542 = scalar_select %p541, %s29, 1
        %s543 = smul.addr %s542, 8
        %s544 = smul.addr %s543, 4
        %s545 = scalar_lea.vmem %s13, %s544
      $region72: #{_lambda_.8} parent=23 // pred_fallthru
        _
      // Predicated region
      $region73: #{_lambda_.8} parent=23 // pred_check
        %p546 = pneg %p407
      $region74: #{_lambda_.8} parent=23 // pred_check_branch
        %548 = sbr.rel (%p546) target = $region76
      $region75: #{_lambda_.8} parent=23 // pred_region
        %p549 = scmp.lt.s32.totalorder %s29, 1
        %s550 = scalar_select %p549, %s29, 1
        %s551 = scalar_lea.vmem %s14, %s550
      $region76: #{_lambda_.8} parent=23 // pred_fallthru
        _
    $region24: #{_lambda_.8} parent=5 // pred_fallthru
      _
    %p552 = scmp.le.s32.totalorder 1, %s21
    %p553 = scmp.lt.s32.totalorder %s21, 5
    %p554 = pnand %p552, %p553
    %p555 = pneg %p554
    // Predicated region
    $region77: #{_lambda_.8} parent=5 // pred_check
      _
    $region78: #{_lambda_.8} parent=5 // pred_check_branch
      %557 = sbr.rel (%p554) target = $region80
    $region79: #{_lambda_.8} parent=5 // pred_region
      %s558 = ssub.s32 %s21, 1
      %p559 = scmp.lt.s32.totalorder %s30, 1
      %s560 = scalar_select %p559, %s30, 1
      %s561 = smul.addr %s560, 3
      %s562 = smul.addr %s561, 8
      %s563 = scalar_lea.vmem %s0, %s562
      %p564 = pneg %p59
      %p565 = pneg %p56
      %p566 = pneg %p80
      %p567 = pneg %p77
      %p568 = pneg %p101
      %p569 = pneg %p98
      %p570 = scmp.lt.s32.totalorder %s31, 1
      %s571 = scalar_select %p570, %s31, 1
      %s572 = scalar_lea.vmem %s3, %s571
      %p573 = pneg %p127
      %p574 = pneg %p124
      %p575 = scmp.lt.s32.totalorder %s31, 1
      %s576 = scalar_select %p575, %s31, 1
      %s577 = scalar_lea.vmem %s4, %s576
      %p578 = pneg %p153
      %p579 = pneg %p150
      %p580 = scmp.lt.s32.totalorder %s31, 1
      %s581 = scalar_select %p580, %s31, 1
      %s582 = smul.addr %s581, 4
      %s583 = smul.addr %s582, 4
      %s584 = scalar_lea.vmem %s5, %s583
      %p585 = pneg %p179
      %p586 = pneg %p176
      %p587 = scmp.lt.s32.totalorder %s31, 1
      %s588 = scalar_select %p587, %s31, 1
      %s589 = scalar_lea.vmem %s6, %s588
      %p590 = pneg %p205
      %p591 = pneg %p202
      %p592 = scmp.lt.s32.totalorder %s31, 1
      %s593 = scalar_select %p592, %s31, 1
      %s594 = smul.addr %s593, 4
      %s595 = smul.addr %s594, 4
      %s596 = scalar_lea.vmem %s7, %s595
      %p597 = pneg %p231
      %p598 = pneg %p228
      %p599 = scmp.lt.s32.totalorder %s31, 1
      %s600 = scalar_select %p599, %s31, 1
      %s601 = scalar_lea.vmem %s8, %s600
      %p602 = pneg %p257
      %p603 = pneg %p254
      %p604 = scmp.lt.s32.totalorder %s31, 1
      %s605 = scalar_select %p604, %s31, 1
      %s606 = scalar_lea.vmem %s9, %s605
      %p607 = pneg %p283
      %p608 = pneg %p280
      %p609 = scmp.lt.s32.totalorder %s31, 1
      %s610 = scalar_select %p609, %s31, 1
      %s611 = scalar_lea.vmem %s10, %s610
      %p612 = pneg %p309
      %p613 = pneg %p306
      %p614 = scmp.lt.s32.totalorder %s31, 1
      %s615 = scalar_select %p614, %s31, 1
      %s616 = smul.addr %s615, 4
      %s617 = smul.addr %s616, 4
      %s618 = scalar_lea.vmem %s11, %s617
      %p619 = pneg %p335
      %p620 = pneg %p332
      %p621 = scmp.lt.s32.totalorder %s31, 1
      %s622 = scalar_select %p621, %s31, 1
      %s623 = scalar_lea.vmem %s12, %s622
      %p624 = pneg %p361
      %p625 = pneg %p358
      %p626 = scmp.lt.s32.totalorder %s31, 1
      %s627 = scalar_select %p626, %s31, 1
      %s628 = smul.addr %s627, 8
      %s629 = smul.addr %s628, 4
      %s630 = scalar_lea.vmem %s13, %s629
      %p631 = pneg %p387
      %p632 = pneg %p384
      %p633 = scmp.lt.s32.totalorder %s31, 1
      %s634 = scalar_select %p633, %s31, 1
      %s635 = scalar_lea.vmem %s14, %s634
      %p636 = pneg %p413
      %p637 = pneg %p410
      %p638 = pneg %p439
      %p639 = pneg %p436
      %p640 = scmp.lt.s32.totalorder %s30, 1
      %s641 = scalar_select %p640, %s30, 1
      %s642 = smul.addr %s641, 2
      %s643 = smul.addr %s642, 8
      %s644 = scalar_lea.vmem %s15, %s643
      %p645 = scmp.lt.s32.totalorder %s30, 1
      %s646 = scalar_select %p645, %s30, 1
      %s647 = smul.addr %s646, 3
      %s648 = smul.addr %s647, 8
      %s649 = scalar_lea.vmem %s0, %s648
      %p650 = scmp.lt.s32.totalorder %s31, 1
      %s651 = scalar_select %p650, %s31, 1
      %s652 = scalar_lea.vmem %s3, %s651
      %p653 = scmp.lt.s32.totalorder %s31, 1
      %s654 = scalar_select %p653, %s31, 1
      %s655 = scalar_lea.vmem %s4, %s654
      %p656 = scmp.lt.s32.totalorder %s31, 1
      %s657 = scalar_select %p656, %s31, 1
      %s658 = smul.addr %s657, 4
      %s659 = smul.addr %s658, 4
      %s660 = scalar_lea.vmem %s5, %s659
      %p661 = scmp.lt.s32.totalorder %s31, 1
      %s662 = scalar_select %p661, %s31, 1
      %s663 = scalar_lea.vmem %s6, %s662
      %p664 = scmp.lt.s32.totalorder %s31, 1
      %s665 = scalar_select %p664, %s31, 1
      %s666 = smul.addr %s665, 4
      %s667 = smul.addr %s666, 4
      %s668 = scalar_lea.vmem %s7, %s667
      %p669 = scmp.lt.s32.totalorder %s31, 1
      %s670 = scalar_select %p669, %s31, 1
      %s671 = scalar_lea.vmem %s8, %s670
      %p672 = scmp.lt.s32.totalorder %s31, 1
      %s673 = scalar_select %p672, %s31, 1
      %s674 = scalar_lea.vmem %s9, %s673
      %p675 = scmp.lt.s32.totalorder %s31, 1
      %s676 = scalar_select %p675, %s31, 1
      %s677 = scalar_lea.vmem %s10, %s676
      %p678 = scmp.lt.s32.totalorder %s31, 1
      %s679 = scalar_select %p678, %s31, 1
      %s680 = smul.addr %s679, 4
      %s681 = smul.addr %s680, 4
      %s682 = scalar_lea.vmem %s11, %s681
      %p683 = scmp.lt.s32.totalorder %s31, 1
      %s684 = scalar_select %p683, %s31, 1
      %s685 = scalar_lea.vmem %s12, %s684
      %p686 = scmp.lt.s32.totalorder %s31, 1
      %s687 = scalar_select %p686, %s31, 1
      %s688 = smul.addr %s687, 8
      %s689 = smul.addr %s688, 4
      %s690 = scalar_lea.vmem %s13, %s689
      %p691 = scmp.lt.s32.totalorder %s31, 1
      %s692 = scalar_select %p691, %s31, 1
      %s693 = scalar_lea.vmem %s14, %s692
      %p694 = scmp.lt.s32.totalorder %s30, 1
      %s695 = scalar_select %p694, %s30, 1
      %s696 = smul.addr %s695, 2
      %s697 = smul.addr %s696, 8
      %s698 = scalar_lea.vmem %s15, %s697
      %p700 = scmp.eq.s32.totalorder %s31, 0
      // Predicated region
      $region81: #{_lambda_.8} parent=79 // pred_check
        %p701 = pneg %p700
      $region82: #{_lambda_.8} parent=79 // pred_check_branch
        %703 = sbr.rel (%p701) target = $region84
      $region83: #{_lambda_.8} parent=79 // pred_region
        %v704 = vld [vmem:[%s649] sm:$0xff]
        %v705 = vld [vmem:[%s649 + $0x8] sm:$0xff]
        %v706 = vld [vmem:[%s649 + $0x10] sm:$0x7f]
        %v707 = vpack.c.bf16 %v705, %v704
        %v708 = vld [vmem:[%s1] sm:$0xf]
        %v709 = vld [vmem:[%s1 + $0x4] sm:$0xf]
        %v710 = vld [vmem:[%s1 + $0x8] sm:$0xf]
        %v711 = vld [vmem:[%s1 + $0xc] sm:$0xf]
        %s712 = scalar_lea.vmem %s1, 16
        %v713 = vld [vmem:[%s712] sm:$0xf]
        %v714 = vld [vmem:[%s712 + $0x4] sm:$0xf]
        %v715 = vld [vmem:[%s712 + $0x8] sm:$0xf]
        %v716 = vld [vmem:[%s712 + $0xc] sm:$0xf]
        %v718 = vshrl.u32 %v707, 16
        %v720 = vshll.u32 %v707, 16
        %v722 = vrot.slane %v720, 1
        %v723 = vor.u32 %v718, %v722
        %v728 = vunpack.c.l.b16 %v713
        %v729 = vunpack.c.l.b16 %v714
        %v730 = vunpack.c.l.b16 %v715
        %v731 = vunpack.c.l.b16 %v716
        %v732 = vpack.c.b16 %v729, %v728
        %v733 = vpack.c.b16 %v731, %v730
        %vm736 = vcmask 261120
        %v738 = vsel %vm736, %v723, 0
        %740 = vmatprep.subr.bf16.mxu0 0
        %741 = vmatpush1.bf16.msra.mxu0 0
        %742 = vmatprep.subr.bf16.mxu0 0
        %743 = vmatpush1.bf16.msra.mxu0 0
        %744 = vmatprep.subr.bf16.mxu0 0
        %745 = vmatpush1.bf16.msra.mxu0 0
        %746 = vmatprep.subr.bf16.mxu0 0
        %747 = vmatpush1.bf16.msra.mxu0 0
        %748 = vmatprep.subr.bf16.mxu0 0
        %749 = vmatpush1.bf16.msra.mxu0 0
        %750 = vmatprep.subr.bf16.mxu0 0
        %751 = vmatpush1.bf16.msra.mxu0 0
        %752 = vmatprep.subr.bf16.mxu0 0
        %753 = vmatpush1.bf16.msra.mxu0 %v733
        %754 = vmatprep.subr.bf16.mxu0 0
        %755 = vmatpush1.bf16.msra.mxu0 %v732
        %756 = vmatprep.subr.bf16.mxu0 0
        %757 = vmatpush2.bf16.msra.mxu0 0
        %758 = vmatprep.subr.bf16.mxu0 0
        %759 = vmatpush2.bf16.msra.mxu0 0
        %760 = vmatprep.subr.bf16.mxu0 0
        %761 = vmatpush2.bf16.msra.mxu0 0
        %762 = vmatprep.subr.bf16.mxu0 0
        %763 = vmatpush2.bf16.msra.mxu0 0
        %764 = vmatprep.subr.bf16.mxu0 0
        %765 = vmatpush2.bf16.msra.mxu0 0
        %766 = vmatprep.subr.bf16.mxu0 0
        %767 = vmatpush2.bf16.msra.mxu0 0
        %768 = vmatprep.subr.bf16.mxu0 0
        %769 = vmatpush2.bf16.msra.mxu0 0
        %770 = vmatprep.subr.bf16.mxu0 0
        %771 = vmatpush2.bf16.msra.mxu0 0
        %772 = vmatprep.mubr.bf16.mxu0 0
        %773 = vmatmul.mubr.bf16.gmra.mxu0 %v738
        %v774 = vpop.f32.mrf.mxu0
        %v775 = vadd.f32 0.0, %v774
        %v776 = vpop.f32.mrf.mxu0
        %v777 = vpop.f32.mrf.mxu0
        %v778 = vadd.f32 0.0, %v777
        %v779 = vpop.f32.mrf.mxu0
        %780 = vdwg.mxu0
        %v785 = vunpack.c.l.b16 %v708
        %v786 = vunpack.c.l.b16 %v709
        %v787 = vunpack.c.l.b16 %v710
        %v788 = vunpack.c.l.b16 %v711
        %v789 = vpack.c.b16 %v786, %v785
        %v790 = vpack.c.b16 %v788, %v787
        %v793 = vsel %vm736, %v707, 0
        %795 = vmatprep.subr.bf16.mxu0 0
        %796 = vmatpush1.bf16.msra.mxu0 0
        %797 = vmatprep.subr.bf16.mxu0 0
        %798 = vmatpush1.bf16.msra.mxu0 0
        %799 = vmatprep.subr.bf16.mxu0 0
        %800 = vmatpush1.bf16.msra.mxu0 0
        %801 = vmatprep.subr.bf16.mxu0 0
        %802 = vmatpush1.bf16.msra.mxu0 0
        %803 = vmatprep.subr.bf16.mxu0 0
        %804 = vmatpush1.bf16.msra.mxu0 0
        %805 = vmatprep.subr.bf16.mxu0 0
        %806 = vmatpush1.bf16.msra.mxu0 0
        %807 = vmatprep.subr.bf16.mxu0 0
        %808 = vmatpush1.bf16.msra.mxu0 %v790
        %809 = vmatprep.subr.bf16.mxu0 0
        %810 = vmatpush1.bf16.msra.mxu0 %v789
        %811 = vmatprep.subr.bf16.mxu0 0
        %812 = vmatpush2.bf16.msra.mxu0 0
        %813 = vmatprep.subr.bf16.mxu0 0
        %814 = vmatpush2.bf16.msra.mxu0 0
        %815 = vmatprep.subr.bf16.mxu0 0
        %816 = vmatpush2.bf16.msra.mxu0 0
        %817 = vmatprep.subr.bf16.mxu0 0
        %818 = vmatpush2.bf16.msra.mxu0 0
        %819 = vmatprep.subr.bf16.mxu0 0
        %820 = vmatpush2.bf16.msra.mxu0 0
        %821 = vmatprep.subr.bf16.mxu0 0
        %822 = vmatpush2.bf16.msra.mxu0 0
        %823 = vmatprep.subr.bf16.mxu0 0
        %824 = vmatpush2.bf16.msra.mxu0 0
        %825 = vmatprep.subr.bf16.mxu0 0
        %826 = vmatpush2.bf16.msra.mxu0 0
        %827 = vmatprep.mubr.bf16.mxu0 0
        %828 = vmatmul.mubr.bf16.gmra.mxu0 %v793
        %v829 = vpop.f32.mrf.mxu0
        %v830 = vadd.f32 %v775, %v829
        %v831 = vpop.f32.mrf.mxu0
        %v832 = vpop.f32.mrf.mxu0
        %v833 = vadd.f32 %v778, %v832
        %v834 = vpop.f32.mrf.mxu0
        %835 = vdwg.mxu0
        %v836 = vpack.c.bf16 %v706, %v706
        %s837 = scalar_lea.vmem %s1, 32
        %v838 = vld [vmem:[%s837] sm:$0xf]
        %v839 = vld [vmem:[%s837 + $0x4] sm:$0xf]
        %v840 = vld [vmem:[%s837 + $0x8] sm:$0xf]
        %v841 = vld [vmem:[%s837 + $0xc] sm:$0xf]
        %vm844 = vcmask 1046528
        %v845 = vrot.slane %v707, 1
        %v846 = vrot.slane %v836, 1
        %v847 = vsel %vm844, %v845, %v846
        %v852 = vunpack.c.l.b16 %v838
        %v853 = vunpack.c.l.b16 %v839
        %v854 = vunpack.c.l.b16 %v840
        %v855 = vunpack.c.l.b16 %v841
        %v856 = vpack.c.b16 %v853, %v852
        %v857 = vpack.c.b16 %v855, %v854
        %v861 = vsel %vm736, %v847, 0
        %863 = vmatprep.subr.bf16.mxu0 0
        %864 = vmatpush1.bf16.msra.mxu0 0
        %865 = vmatprep.subr.bf16.mxu0 0
        %866 = vmatpush1.bf16.msra.mxu0 0
        %867 = vmatprep.subr.bf16.mxu0 0
        %868 = vmatpush1.bf16.msra.mxu0 0
        %869 = vmatprep.subr.bf16.mxu0 0
        %870 = vmatpush1.bf16.msra.mxu0 0
        %871 = vmatprep.subr.bf16.mxu0 0
        %872 = vmatpush1.bf16.msra.mxu0 0
        %873 = vmatprep.subr.bf16.mxu0 0
        %874 = vmatpush1.bf16.msra.mxu0 0
        %875 = vmatprep.subr.bf16.mxu0 0
        %876 = vmatpush1.bf16.msra.mxu0 %v857
        %877 = vmatprep.subr.bf16.mxu0 0
        %878 = vmatpush1.bf16.msra.mxu0 %v856
        %879 = vmatprep.subr.bf16.mxu0 0
        %880 = vmatpush2.bf16.msra.mxu0 0
        %881 = vmatprep.subr.bf16.mxu0 0
        %882 = vmatpush2.bf16.msra.mxu0 0
        %883 = vmatprep.subr.bf16.mxu0 0
        %884 = vmatpush2.bf16.msra.mxu0 0
        %885 = vmatprep.subr.bf16.mxu0 0
        %886 = vmatpush2.bf16.msra.mxu0 0
        %887 = vmatprep.subr.bf16.mxu0 0
        %888 = vmatpush2.bf16.msra.mxu0 0
        %889 = vmatprep.subr.bf16.mxu0 0
        %890 = vmatpush2.bf16.msra.mxu0 0
        %891 = vmatprep.subr.bf16.mxu0 0
        %892 = vmatpush2.bf16.msra.mxu0 0
        %893 = vmatprep.subr.bf16.mxu0 0
        %894 = vmatpush2.bf16.msra.mxu0 0
        %895 = vmatprep.mubr.bf16.mxu0 0
        %896 = vmatmul.mubr.bf16.gmra.mxu0 %v861
        %v897 = vpop.f32.mrf.mxu0
        %v898 = vadd.f32 0.0, %v897
        %v899 = vpop.f32.mrf.mxu0
        %v900 = vpop.f32.mrf.mxu0
        %v901 = vadd.f32 0.0, %v900
        %v902 = vpop.f32.mrf.mxu0
        %903 = vdwg.mxu0
        %v904 = vadd.f32 %v830, %v898
        %v905 = vadd.f32 %v833, %v901
        %s906 = scalar_lea.vmem %s1, 48
        %v907 = vld [vmem:[%s906] sm:$0xf]
        %v908 = vld [vmem:[%s906 + $0x4] sm:$0xf]
        %v909 = vld [vmem:[%s906 + $0x8] sm:$0xf]
        %v910 = vld [vmem:[%s906 + $0xc] sm:$0xf]
        %vm911 = vsmask.f32 6400
        %v912 = vrot.slane %v718, 1
        %v913 = vrot.slane %v720, 2
        %v914 = vor.u32 %v912, %v913
        %v916 = vshrl.u32 %v836, 16
        %v918 = vrot.slane %v916, 1
        %v919 = vshll.u32 %v836, 16
        %v921 = vrot.slane %v919, 2
        %v922 = vor.u32 %v918, %v921
        %v923 = vsel %vm911, %v914, %v922
        %v928 = vunpack.c.l.b16 %v907
        %v929 = vunpack.c.l.b16 %v908
        %v930 = vunpack.c.l.b16 %v909
        %v931 = vunpack.c.l.b16 %v910
        %v932 = vpack.c.b16 %v929, %v928
        %v933 = vpack.c.b16 %v931, %v930
        %v937 = vsel %vm736, %v923, 0
        %939 = vmatprep.subr.bf16.mxu0 0
        %940 = vmatpush1.bf16.msra.mxu0 0
        %941 = vmatprep.subr.bf16.mxu0 0
        %942 = vmatpush1.bf16.msra.mxu0 0
        %943 = vmatprep.subr.bf16.mxu0 0
        %944 = vmatpush1.bf16.msra.mxu0 0
        %945 = vmatprep.subr.bf16.mxu0 0
        %946 = vmatpush1.bf16.msra.mxu0 0
        %947 = vmatprep.subr.bf16.mxu0 0
        %948 = vmatpush1.bf16.msra.mxu0 0
        %949 = vmatprep.subr.bf16.mxu0 0
        %950 = vmatpush1.bf16.msra.mxu0 0
        %951 = vmatprep.subr.bf16.mxu0 0
        %952 = vmatpush1.bf16.msra.mxu0 %v933
        %953 = vmatprep.subr.bf16.mxu0 0
        %954 = vmatpush1.bf16.msra.mxu0 %v932
        %955 = vmatprep.subr.bf16.mxu0 0
        %956 = vmatpush2.bf16.msra.mxu0 0
        %957 = vmatprep.subr.bf16.mxu0 0
        %958 = vmatpush2.bf16.msra.mxu0 0
        %959 = vmatprep.subr.bf16.mxu0 0
        %960 = vmatpush2.bf16.msra.mxu0 0
        %961 = vmatprep.subr.bf16.mxu0 0
        %962 = vmatpush2.bf16.msra.mxu0 0
        %963 = vmatprep.subr.bf16.mxu0 0
        %964 = vmatpush2.bf16.msra.mxu0 0
        %965 = vmatprep.subr.bf16.mxu0 0
        %966 = vmatpush2.bf16.msra.mxu0 0
        %967 = vmatprep.subr.bf16.mxu0 0
        %968 = vmatpush2.bf16.msra.mxu0 0
        %969 = vmatprep.subr.bf16.mxu0 0
        %970 = vmatpush2.bf16.msra.mxu0 0
        %971 = vmatprep.mubr.bf16.mxu0 0
        %972 = vmatmul.mubr.bf16.gmra.mxu0 %v937
        %v973 = vpop.f32.mrf.mxu0
        %v974 = vadd.f32 0.0, %v973
        %v975 = vpop.f32.mrf.mxu0
        %v976 = vpop.f32.mrf.mxu0
        %v977 = vadd.f32 0.0, %v976
        %v978 = vpop.f32.mrf.mxu0
        %979 = vdwg.mxu0
        %v980 = vadd.f32 %v904, %v974
        %v981 = vadd.f32 %v905, %v977
        %s982 = scalar_lea.vmem %s1, 64
        %v983 = vld [vmem:[%s982] sm:$0xf]
        %v984 = vld [vmem:[%s982 + $0x4] sm:$0xf]
        %v985 = vld [vmem:[%s982 + $0x8] sm:$0xf]
        %v986 = vld [vmem:[%s982 + $0xc] sm:$0xf]
        %vm987 = vcmask 1045504
        %v988 = vrot.slane %v707, 2
        %v989 = vrot.slane %v836, 2
        %v990 = vsel %vm987, %v988, %v989
        %v995 = vunpack.c.l.b16 %v983
        %v996 = vunpack.c.l.b16 %v984
        %v997 = vunpack.c.l.b16 %v985
        %v998 = vunpack.c.l.b16 %v986
        %v999 = vpack.c.b16 %v996, %v995
        %v1000 = vpack.c.b16 %v998, %v997
        %v1004 = vsel %vm736, %v990, 0
        %1006 = vmatprep.subr.bf16.mxu0 0
        %1007 = vmatpush1.bf16.msra.mxu0 0
        %1008 = vmatprep.subr.bf16.mxu0 0
        %1009 = vmatpush1.bf16.msra.mxu0 0
        %1010 = vmatprep.subr.bf16.mxu0 0
        %1011 = vmatpush1.bf16.msra.mxu0 0
        %1012 = vmatprep.subr.bf16.mxu0 0
        %1013 = vmatpush1.bf16.msra.mxu0 0
        %1014 = vmatprep.subr.bf16.mxu0 0
        %1015 = vmatpush1.bf16.msra.mxu0 0
        %1016 = vmatprep.subr.bf16.mxu0 0
        %1017 = vmatpush1.bf16.msra.mxu0 0
        %1018 = vmatprep.subr.bf16.mxu0 0
        %1019 = vmatpush1.bf16.msra.mxu0 %v1000
        %1020 = vmatprep.subr.bf16.mxu0 0
        %1021 = vmatpush1.bf16.msra.mxu0 %v999
        %1022 = vmatprep.subr.bf16.mxu0 0
        %1023 = vmatpush2.bf16.msra.mxu0 0
        %1024 = vmatprep.subr.bf16.mxu0 0
        %1025 = vmatpush2.bf16.msra.mxu0 0
        %1026 = vmatprep.subr.bf16.mxu0 0
        %1027 = vmatpush2.bf16.msra.mxu0 0
        %1028 = vmatprep.subr.bf16.mxu0 0
        %1029 = vmatpush2.bf16.msra.mxu0 0
        %1030 = vmatprep.subr.bf16.mxu0 0
        %1031 = vmatpush2.bf16.msra.mxu0 0
        %1032 = vmatprep.subr.bf16.mxu0 0
        %1033 = vmatpush2.bf16.msra.mxu0 0
        %1034 = vmatprep.subr.bf16.mxu0 0
        %1035 = vmatpush2.bf16.msra.mxu0 0
        %1036 = vmatprep.subr.bf16.mxu0 0
        %1037 = vmatpush2.bf16.msra.mxu0 0
        %1038 = vmatprep.mubr.bf16.mxu0 0
        %1039 = vmatmul.mubr.bf16.gmra.mxu0 %v1004
        %v1040 = vpop.f32.mrf.mxu0
        %v1041 = vadd.f32 0.0, %v1040
        %v1042 = vpop.f32.mrf.mxu0
        %v1043 = vpop.f32.mrf.mxu0
        %v1044 = vadd.f32 0.0, %v1043
        %v1045 = vpop.f32.mrf.mxu0
        %1046 = vdwg.mxu0
        %v1047 = vadd.f32 %v980, %v1041
        %v1048 = vadd.f32 %v981, %v1044
        %s1049 = scalar_lea.vmem %s1, 80
        %v1050 = vld [vmem:[%s1049] sm:$0xf]
        %v1051 = vld [vmem:[%s1049 + $0x4] sm:$0xf]
        %v1052 = vld [vmem:[%s1049 + $0x8] sm:$0xf]
        %v1053 = vld [vmem:[%s1049 + $0xc] sm:$0xf]
        %vm1054 = vsmask.f32 5376
        %v1055 = vrot.slane %v718, 2
        %v1056 = vrot.slane %v720, 3
        %v1057 = vor.u32 %v1055, %v1056
        %v1058 = vrot.slane %v916, 2
        %v1059 = vrot.slane %v919, 3
        %v1060 = vor.u32 %v1058, %v1059
        %v1061 = vsel %vm1054, %v1057, %v1060
        %v1066 = vunpack.c.l.b16 %v1050
        %v1067 = vunpack.c.l.b16 %v1051
        %v1068 = vunpack.c.l.b16 %v1052
        %v1069 = vunpack.c.l.b16 %v1053
        %v1070 = vpack.c.b16 %v1067, %v1066
        %v1071 = vpack.c.b16 %v1069, %v1068
        %v1075 = vsel %vm736, %v1061, 0
        %1077 = vmatprep.subr.bf16.mxu0 0
        %1078 = vmatpush1.bf16.msra.mxu0 0
        %1079 = vmatprep.subr.bf16.mxu0 0
        %1080 = vmatpush1.bf16.msra.mxu0 0
        %1081 = vmatprep.subr.bf16.mxu0 0
        %1082 = vmatpush1.bf16.msra.mxu0 0
        %1083 = vmatprep.subr.bf16.mxu0 0
        %1084 = vmatpush1.bf16.msra.mxu0 0
        %1085 = vmatprep.subr.bf16.mxu0 0
        %1086 = vmatpush1.bf16.msra.mxu0 0
        %1087 = vmatprep.subr.bf16.mxu0 0
        %1088 = vmatpush1.bf16.msra.mxu0 0
        %1089 = vmatprep.subr.bf16.mxu0 0
        %1090 = vmatpush1.bf16.msra.mxu0 %v1071
        %1091 = vmatprep.subr.bf16.mxu0 0
        %1092 = vmatpush1.bf16.msra.mxu0 %v1070
        %1093 = vmatprep.subr.bf16.mxu0 0
        %1094 = vmatpush2.bf16.msra.mxu0 0
        %1095 = vmatprep.subr.bf16.mxu0 0
        %1096 = vmatpush2.bf16.msra.mxu0 0
        %1097 = vmatprep.subr.bf16.mxu0 0
        %1098 = vmatpush2.bf16.msra.mxu0 0
        %1099 = vmatprep.subr.bf16.mxu0 0
        %1100 = vmatpush2.bf16.msra.mxu0 0
        %1101 = vmatprep.subr.bf16.mxu0 0
        %1102 = vmatpush2.bf16.msra.mxu0 0
        %1103 = vmatprep.subr.bf16.mxu0 0
        %1104 = vmatpush2.bf16.msra.mxu0 0
        %1105 = vmatprep.subr.bf16.mxu0 0
        %1106 = vmatpush2.bf16.msra.mxu0 0
        %1107 = vmatprep.subr.bf16.mxu0 0
        %1108 = vmatpush2.bf16.msra.mxu0 0
        %1109 = vmatprep.mubr.bf16.mxu0 0
        %1110 = vmatmul.mubr.bf16.gmra.mxu0 %v1075
        %v1111 = vpop.f32.mrf.mxu0
        %v1112 = vadd.f32 0.0, %v1111
        %v1113 = vpop.f32.mrf.mxu0
        %v1114 = vpop.f32.mrf.mxu0
        %v1115 = vadd.f32 0.0, %v1114
        %v1116 = vpop.f32.mrf.mxu0
        %1117 = vdwg.mxu0
        %v1118 = vadd.f32 %v1047, %v1112
        %v1119 = vadd.f32 %v1048, %v1115
        %s1120 = scalar_lea.vmem %s1, 96
        %v1121 = vld [vmem:[%s1120] sm:$0xf]
        %v1122 = vld [vmem:[%s1120 + $0x4] sm:$0xf]
        %v1123 = vld [vmem:[%s1120 + $0x8] sm:$0xf]
        %v1124 = vld [vmem:[%s1120 + $0xc] sm:$0xf]
        %vm1125 = vcmask 1044480
        %v1126 = vrot.slane %v707, 3
        %v1127 = vrot.slane %v836, 3
        %v1128 = vsel %vm1125, %v1126, %v1127
        %v1133 = vunpack.c.l.b16 %v1121
        %v1134 = vunpack.c.l.b16 %v1122
        %v1135 = vunpack.c.l.b16 %v1123
        %v1136 = vunpack.c.l.b16 %v1124
        %v1137 = vpack.c.b16 %v1134, %v1133
        %v1138 = vpack.c.b16 %v1136, %v1135
        %v1142 = vsel %vm736, %v1128, 0
        %1144 = vmatprep.subr.bf16.mxu0 0
        %1145 = vmatpush1.bf16.msra.mxu0 0
        %1146 = vmatprep.subr.bf16.mxu0 0
        %1147 = vmatpush1.bf16.msra.mxu0 0
        %1148 = vmatprep.subr.bf16.mxu0 0
        %1149 = vmatpush1.bf16.msra.mxu0 0
        %1150 = vmatprep.subr.bf16.mxu0 0
        %1151 = vmatpush1.bf16.msra.mxu0 0
        %1152 = vmatprep.subr.bf16.mxu0 0
        %1153 = vmatpush1.bf16.msra.mxu0 0
        %1154 = vmatprep.subr.bf16.mxu0 0
        %1155 = vmatpush1.bf16.msra.mxu0 0
        %1156 = vmatprep.subr.bf16.mxu0 0
        %1157 = vmatpush1.bf16.msra.mxu0 %v1138
        %1158 = vmatprep.subr.bf16.mxu0 0
        %1159 = vmatpush1.bf16.msra.mxu0 %v1137
        %1160 = vmatprep.subr.bf16.mxu0 0
        %1161 = vmatpush2.bf16.msra.mxu0 0
        %1162 = vmatprep.subr.bf16.mxu0 0
        %1163 = vmatpush2.bf16.msra.mxu0 0
        %1164 = vmatprep.subr.bf16.mxu0 0
        %1165 = vmatpush2.bf16.msra.mxu0 0
        %1166 = vmatprep.subr.bf16.mxu0 0
        %1167 = vmatpush2.bf16.msra.mxu0 0
        %1168 = vmatprep.subr.bf16.mxu0 0
        %1169 = vmatpush2.bf16.msra.mxu0 0
        %1170 = vmatprep.subr.bf16.mxu0 0
        %1171 = vmatpush2.bf16.msra.mxu0 0
        %1172 = vmatprep.subr.bf16.mxu0 0
        %1173 = vmatpush2.bf16.msra.mxu0 0
        %1174 = vmatprep.subr.bf16.mxu0 0
        %1175 = vmatpush2.bf16.msra.mxu0 0
        %1176 = vmatprep.mubr.bf16.mxu0 0
        %1177 = vmatmul.mubr.bf16.gmra.mxu0 %v1142
        %v1178 = vpop.f32.mrf.mxu0
        %v1179 = vadd.f32 0.0, %v1178
        %v1180 = vpop.f32.mrf.mxu0
        %v1181 = vpop.f32.mrf.mxu0
        %v1182 = vadd.f32 0.0, %v1181
        %v1183 = vpop.f32.mrf.mxu0
        %1184 = vdwg.mxu0
        %v1185 = vadd.f32 %v1118, %v1179
        %v1186 = vadd.f32 %v1119, %v1182
        %s1187 = scalar_lea.vmem %s1, 112
        %v1188 = vld [vmem:[%s1187] sm:$0xf]
        %v1189 = vld [vmem:[%s1187 + $0x4] sm:$0xf]
        %v1190 = vld [vmem:[%s1187 + $0x8] sm:$0xf]
        %v1191 = vld [vmem:[%s1187 + $0xc] sm:$0xf]
        %vm1192 = vsmask.f32 4352
        %v1193 = vrot.slane %v718, 3
        %v1194 = vrot.slane %v720, 4
        %v1195 = vor.u32 %v1193, %v1194
        %v1196 = vrot.slane %v916, 3
        %v1197 = vrot.slane %v919, 4
        %v1198 = vor.u32 %v1196, %v1197
        %v1199 = vsel %vm1192, %v1195, %v1198
        %v1204 = vunpack.c.l.b16 %v1188
        %v1205 = vunpack.c.l.b16 %v1189
        %v1206 = vunpack.c.l.b16 %v1190
        %v1207 = vunpack.c.l.b16 %v1191
        %v1208 = vpack.c.b16 %v1205, %v1204
        %v1209 = vpack.c.b16 %v1207, %v1206
        %v1213 = vsel %vm736, %v1199, 0
        %1215 = vmatprep.subr.bf16.mxu0 0
        %1216 = vmatpush1.bf16.msra.mxu0 0
        %1217 = vmatprep.subr.bf16.mxu0 0
        %1218 = vmatpush1.bf16.msra.mxu0 0
        %1219 = vmatprep.subr.bf16.mxu0 0
        %1220 = vmatpush1.bf16.msra.mxu0 0
        %1221 = vmatprep.subr.bf16.mxu0 0
        %1222 = vmatpush1.bf16.msra.mxu0 0
        %1223 = vmatprep.subr.bf16.mxu0 0
        %1224 = vmatpush1.bf16.msra.mxu0 0
        %1225 = vmatprep.subr.bf16.mxu0 0
        %1226 = vmatpush1.bf16.msra.mxu0 0
        %1227 = vmatprep.subr.bf16.mxu0 0
        %1228 = vmatpush1.bf16.msra.mxu0 %v1209
        %1229 = vmatprep.subr.bf16.mxu0 0
        %1230 = vmatpush1.bf16.msra.mxu0 %v1208
        %1231 = vmatprep.subr.bf16.mxu0 0
        %1232 = vmatpush2.bf16.msra.mxu0 0
        %1233 = vmatprep.subr.bf16.mxu0 0
        %1234 = vmatpush2.bf16.msra.mxu0 0
        %1235 = vmatprep.subr.bf16.mxu0 0
        %1236 = vmatpush2.bf16.msra.mxu0 0
        %1237 = vmatprep.subr.bf16.mxu0 0
        %1238 = vmatpush2.bf16.msra.mxu0 0
        %1239 = vmatprep.subr.bf16.mxu0 0
        %1240 = vmatpush2.bf16.msra.mxu0 0
        %1241 = vmatprep.subr.bf16.mxu0 0
        %1242 = vmatpush2.bf16.msra.mxu0 0
        %1243 = vmatprep.subr.bf16.mxu0 0
        %1244 = vmatpush2.bf16.msra.mxu0 0
        %1245 = vmatprep.subr.bf16.mxu0 0
        %1246 = vmatpush2.bf16.msra.mxu0 0
        %1247 = vmatprep.mubr.bf16.mxu0 0
        %1248 = vmatmul.mubr.bf16.gmra.mxu0 %v1213
        %v1249 = vpop.f32.mrf.mxu0
        %v1250 = vadd.f32 0.0, %v1249
        %v1251 = vpop.f32.mrf.mxu0
        %v1252 = vpop.f32.mrf.mxu0
        %v1253 = vadd.f32 0.0, %v1252
        %v1254 = vpop.f32.mrf.mxu0
        %1255 = vdwg.mxu0
        %v1256 = vadd.f32 %v1185, %v1250
        %v1257 = vadd.f32 %v1186, %v1253
        %v1258 = vld [vmem:[%s2] sm:$0x1]
        %v1260 = vlaneseq
        %v1261 = vshrl.u32 %v1260, 7
        %v1262 = vsub.s32 0, %v1261
        %v1263 = vrot.slane %v1258, %v1262
        %v1265 = vadd.f32 %v1256, %v1263
        %v1266 = vadd.f32 %v1257, %v1263
        %v1267 = vmul.f32 %v1265, 0.5
        %v1268 = vmul.f32 %v1266, 0.5
        %v1269 = vmul.f32 %v1265, 0.70710677
        %v1270 = vmul.f32 %v1266, 0.70710677
        %v1271 = verf.f32.pop %v1269
        %v1272 = verf.f32.pop %v1270
        %v1273 = vadd.f32 %v1271, 1.0
        %v1274 = vadd.f32 %v1272, 1.0
        %v1275 = vmul.f32 %v1267, %v1273
        %v1276 = vmul.f32 %v1268, %v1274
        %vm1279 = vcmask 1043456
        %v1280 = vrot.slane %v1275, 4
        %v1281 = vrot.slane %v1276, 4
        %v1282 = vsel %vm1279, %v1280, %v1281
        %v1286 = vadd.f32 %v704, %v1280
        %v1287 = vadd.f32 %v705, %v1282
        %v1288 = vadd.f32 %v706, %v1281
        %vm1289 = vcmask 261124
        %1290 = vst.msk [vmem:[%s698 - $0x4] sm:$0xf0] %vm1289, %v1286
        %1291 = vst.msk [vmem:[%s698 + $0x4] sm:$0xff] %vm736, %v1287
        %vm1292 = vcmask 256000
        %1293 = vst.msk [vmem:[%s698 + $0xc] sm:$0x7] %vm1292, %v1288
      $region84: #{_lambda_.8} parent=79 // pred_fallthru
        _
      %v1294 = vld [vmem:[%s698] sm:$0xff]
      %v1295 = vld [vmem:[%s698 + $0x8] sm:$0x7f]
      %v1296 = vld [vmem:[%s652] sm:$0x1]
      %v1297 = vld [vmem:[%s655] sm:$0x1]
      %vm1298 = vcmask 261120
      %v1299 = vsel %vm1298, %v1294, 0.0
      %1300 = vadd.xlane.f32.xlu0 %v1299
      %v1301 = vpop.xlane.xlu0 %1300
      %vm1302 = vcmask 260096
      %v1303 = vsel %vm1302, %v1295, 0.0
      %1304 = vadd.xlane.f32.xlu0 %v1303
      %v1305 = vpop.xlane.xlu0 %1304
      %v1306 = vrcp.pop 32.0
      %v1307 = vmul.f32 %v1301, %v1306
      %v1308 = vmul.f32 %v1305, %v1306
      %v1309 = vsub.f32 %v1294, %v1307
      %v1310 = vsub.f32 %v1295, %v1308
      %v1311 = vmul.f32 %v1309, %v1309
      %v1312 = vmul.f32 %v1310, %v1310
      %v1313 = vsel %vm1298, %v1311, 0.0
      %1314 = vadd.xlane.f32.xlu0 %v1313
      %v1315 = vpop.xlane.xlu0 %1314
      %v1316 = vsel %vm1302, %v1312, 0.0
      %1317 = vadd.xlane.f32.xlu0 %v1316
      %v1318 = vpop.xlane.xlu0 %1317
      %v1319 = vmul.f32 %v1315, %v1306
      %v1320 = vmul.f32 %v1318, %v1306
      %v1321 = vadd.f32 %v1319, 1e-05
      %v1322 = vadd.f32 %v1320, 1e-05
      %v1323 = vrsqrt.pop %v1321
      %v1324 = vrsqrt.pop %v1322
      %v1325 = vmul.f32 %v1309, %v1323
      %v1326 = vmul.f32 %v1310, %v1324
      %v1328 = vlaneseq
      %v1329 = vshrl.u32 %v1328, 7
      %v1330 = vsub.s32 0, %v1329
      %v1331 = vrot.slane %v1296, %v1330
      %v1333 = vmul.f32 %v1325, %v1331
      %v1334 = vmul.f32 %v1326, %v1331
      %v1336 = vlaneseq
      %v1337 = vshrl.u32 %v1336, 7
      %v1338 = vsub.s32 0, %v1337
      %v1339 = vrot.slane %v1297, %v1338
      %v1341 = vadd.f32 %v1333, %v1339
      %v1342 = vadd.f32 %v1334, %v1339
      %v1343 = vpack.c.bf16 %v1342, %v1341
      %v1344 = vld [vmem:[%s660] sm:$0xf]
      %v1345 = vld [vmem:[%s660 + $0x4] sm:$0xf]
      %v1346 = vld [vmem:[%s660 + $0x8] sm:$0xf]
      %v1347 = vld [vmem:[%s660 + $0xc] sm:$0xf]
      %v1348 = vld [vmem:[%s663] sm:$0x1]
      %v1350 = vlaneseq
      %v1351 = vshrl.u32 %v1350, 7
      %v1352 = vsub.s32 0, %v1351
      %v1353 = vrot.slane %v1348, %v1352
      %v1359 = vunpack.c.l.b16 %v1344
      %v1360 = vunpack.c.l.b16 %v1345
      %v1361 = vunpack.c.l.b16 %v1346
      %v1362 = vunpack.c.l.b16 %v1347
      %v1363 = vpack.c.b16 %v1360, %v1359
      %v1364 = vpack.c.b16 %v1362, %v1361
      %v1368 = vsel %vm1298, %v1343, 0
      %1370 = vmatprep.subr.bf16.mxu0 0
      %1371 = vmatpush1.bf16.msra.mxu0 0
      %1372 = vmatprep.subr.bf16.mxu0 0
      %1373 = vmatpush1.bf16.msra.mxu0 0
      %1374 = vmatprep.subr.bf16.mxu0 0
      %1375 = vmatpush1.bf16.msra.mxu0 0
      %1376 = vmatprep.subr.bf16.mxu0 0
      %1377 = vmatpush1.bf16.msra.mxu0 0
      %1378 = vmatprep.subr.bf16.mxu0 0
      %1379 = vmatpush1.bf16.msra.mxu0 0
      %1380 = vmatprep.subr.bf16.mxu0 0
      %1381 = vmatpush1.bf16.msra.mxu0 0
      %1382 = vmatprep.subr.bf16.mxu0 0
      %1383 = vmatpush1.bf16.msra.mxu0 %v1364
      %1384 = vmatprep.subr.bf16.mxu0 0
      %1385 = vmatpush1.bf16.msra.mxu0 %v1363
      %1386 = vmatprep.subr.bf16.mxu0 0
      %1387 = vmatpush2.bf16.msra.mxu0 0
      %1388 = vmatprep.subr.bf16.mxu0 0
      %1389 = vmatpush2.bf16.msra.mxu0 0
      %1390 = vmatprep.subr.bf16.mxu0 0
      %1391 = vmatpush2.bf16.msra.mxu0 0
      %1392 = vmatprep.subr.bf16.mxu0 0
      %1393 = vmatpush2.bf16.msra.mxu0 0
      %1394 = vmatprep.subr.bf16.mxu0 0
      %1395 = vmatpush2.bf16.msra.mxu0 0
      %1396 = vmatprep.subr.bf16.mxu0 0
      %1397 = vmatpush2.bf16.msra.mxu0 0
      %1398 = vmatprep.subr.bf16.mxu0 0
      %1399 = vmatpush2.bf16.msra.mxu0 0
      %1400 = vmatprep.subr.bf16.mxu0 0
      %1401 = vmatpush2.bf16.msra.mxu0 0
      %1402 = vmatprep.mubr.bf16.mxu0 0
      %1403 = vmatmul.mubr.bf16.gmra.mxu0 %v1368
      %v1404 = vpop.f32.mrf.mxu0
      %v1405 = vadd.f32 %v1353, %v1404
      %v1406 = vpop.f32.mrf.mxu0
      %v1407 = vpop.f32.mrf.mxu0
      %v1408 = vadd.f32 %v1353, %v1407
      %v1409 = vpop.f32.mrf.mxu0
      %1410 = vdwg.mxu0
      %v1411 = vpack.c.bf16 %v1408, %v1405
      %1413 = vrot.lane.b32.xlu0 %v1411, 96
      %v1414 = vpop.permute.xlu0 %1413
      %vm1415 = vcmask 64512
      %v1417 = vsel %vm1415, %v1411, 0
      %v1420 = vsel %vm1415, %v1414, 0
      %1422 = vmatprep.subr.bf16.mxu0 0
      %1423 = vmatpush1.bf16.xpose.msra.mxu0 0
      %1424 = vmatprep.subr.bf16.mxu0 0
      %1425 = vmatpush1.bf16.xpose.msra.mxu0 0
      %1426 = vmatprep.subr.bf16.mxu0 0
      %1427 = vmatpush1.bf16.xpose.msra.mxu0 0
      %1428 = vmatprep.subr.bf16.mxu0 0
      %1429 = vmatpush1.bf16.xpose.msra.mxu0 0
      %1430 = vmatprep.subr.bf16.mxu0 0
      %1431 = vmatpush1.bf16.xpose.msra.mxu0 0
      %1432 = vmatprep.subr.bf16.mxu0 0
      %1433 = vmatpush1.bf16.xpose.msra.mxu0 0
      %1434 = vmatprep.subr.bf16.mxu0 0
      %1435 = vmatpush1.bf16.xpose.msra.mxu0 0
      %1436 = vmatprep.subr.bf16.mxu0 0
      %1437 = vmatpush1.bf16.xpose.msra.mxu0 %v1420
      %1438 = vmatprep.subr.bf16.mxu0 0
      %1439 = vmatpush2.bf16.xpose.msra.mxu0 0
      %1440 = vmatprep.subr.bf16.mxu0 0
      %1441 = vmatpush2.bf16.xpose.msra.mxu0 0
      %1442 = vmatprep.subr.bf16.mxu0 0
      %1443 = vmatpush2.bf16.xpose.msra.mxu0 0
      %1444 = vmatprep.subr.bf16.mxu0 0
      %1445 = vmatpush2.bf16.xpose.msra.mxu0 0
      %1446 = vmatprep.subr.bf16.mxu0 0
      %1447 = vmatpush2.bf16.xpose.msra.mxu0 0
      %1448 = vmatprep.subr.bf16.mxu0 0
      %1449 = vmatpush2.bf16.xpose.msra.mxu0 0
      %1450 = vmatprep.subr.bf16.mxu0 0
      %1451 = vmatpush2.bf16.xpose.msra.mxu0 0
      %1452 = vmatprep.subr.bf16.mxu0 0
      %1453 = vmatpush2.bf16.xpose.msra.mxu0 0
      %1454 = vmatprep.mubr.bf16.mxu0 0
      %1455 = vmatmul.mubr.bf16.gmra.mxu0 %v1417
      %v1456 = vpop.f32.mrf.mxu0
      %v1457 = vadd.f32 0.0, %v1456
      %v1458 = vpop.f32.mrf.mxu0
      %v1459 = vpop.f32.mrf.mxu0
      %v1460 = vadd.f32 0.0, %v1459
      %v1461 = vpop.f32.mrf.mxu0
      %1462 = vdwg.mxu0
      %vm1463 = vcmask 121856
      %v1464 = vsel %vm1463, %v1457, -inf
      %1465 = vmax.xlane.f32.xlu0 %v1464
      %v1466 = vpop.xlane.xlu0 %1465
      %vm1467 = vcmask 120832
      %v1468 = vsel %vm1467, %v1460, -inf
      %1469 = vmax.xlane.f32.xlu0 %v1468
      %v1470 = vpop.xlane.xlu0 %1469
      %v1471 = vsub.f32 %v1457, %v1466
      %v1472 = vsub.f32 %v1460, %v1470
      %v1473 = vmul.f32 %v1471, 1.442695
      %v1474 = vpow.pop %v1473
      %v1475 = vmul.f32 %v1472, 1.442695
      %v1476 = vpow.pop %v1475
      %v1477 = vsel %vm1463, %v1474, 0.0
      %1478 = vadd.xlane.f32.xlu0 %v1477
      %v1479 = vpop.xlane.xlu0 %1478
      %v1480 = vsel %vm1467, %v1476, 0.0
      %1481 = vadd.xlane.f32.xlu0 %v1480
      %v1482 = vpop.xlane.xlu0 %1481
      %v1483 = vrcp.pop %v1479
      %v1484 = vrcp.pop %v1482
      %v1485 = vmul.f32 %v1474, %v1483
      %v1486 = vmul.f32 %v1476, %v1484
      %v1487 = vpack.c.bf16 %v1486, %v1485
      %1488 = vrot.lane.b32.xlu0 %v1411, 64
      %v1489 = vpop.permute.xlu0 %1488
      %v1491 = vsel %vm1463, %v1487, 0
      %vm1493 = vcmask 1046528
      %vm1494 = vcmask 1047552
      %v1495 = vsel %vm1493, 4294967295, 65535
      %v1496 = vsel %vm1494, %v1495, 0
      %v1498 = vand.u32 %v1489, %v1496
      %1500 = vmatprep.subr.bf16.mxu0 0
      %1501 = vmatpush1.bf16.msra.mxu0 0
      %1502 = vmatprep.subr.bf16.mxu0 0
      %1503 = vmatpush1.bf16.msra.mxu0 0
      %1504 = vmatprep.subr.bf16.mxu0 0
      %1505 = vmatpush1.bf16.msra.mxu0 0
      %1506 = vmatprep.subr.bf16.mxu0 0
      %1507 = vmatpush1.bf16.msra.mxu0 0
      %1508 = vmatprep.subr.bf16.mxu0 0
      %1509 = vmatpush1.bf16.msra.mxu0 0
      %1510 = vmatprep.subr.bf16.mxu0 0
      %1511 = vmatpush1.bf16.msra.mxu0 0
      %1512 = vmatprep.subr.bf16.mxu0 0
      %1513 = vmatpush1.bf16.msra.mxu0 0
      %1514 = vmatprep.subr.bf16.mxu0 0
      %1515 = vmatpush1.bf16.msra.mxu0 %v1498
      %1516 = vmatprep.subr.bf16.mxu0 0
      %1517 = vmatpush2.bf16.msra.mxu0 0
      %1518 = vmatprep.subr.bf16.mxu0 0
      %1519 = vmatpush2.bf16.msra.mxu0 0
      %1520 = vmatprep.subr.bf16.mxu0 0
      %1521 = vmatpush2.bf16.msra.mxu0 0
      %1522 = vmatprep.subr.bf16.mxu0 0
      %1523 = vmatpush2.bf16.msra.mxu0 0
      %1524 = vmatprep.subr.bf16.mxu0 0
      %1525 = vmatpush2.bf16.msra.mxu0 0
      %1526 = vmatprep.subr.bf16.mxu0 0
      %1527 = vmatpush2.bf16.msra.mxu0 0
      %1528 = vmatprep.subr.bf16.mxu0 0
      %1529 = vmatpush2.bf16.msra.mxu0 0
      %1530 = vmatprep.subr.bf16.mxu0 0
      %1531 = vmatpush2.bf16.msra.mxu0 0
      %1532 = vmatprep.mubr.bf16.mxu0 0
      %1533 = vmatmul.mubr.bf16.gmra.mxu0 %v1491
      %v1534 = vpop.f32.mrf.mxu0
      %v1535 = vadd.f32 0.0, %v1534
      %v1536 = vpop.f32.mrf.mxu0
      %v1537 = vpop.f32.mrf.mxu0
      %v1538 = vadd.f32 0.0, %v1537
      %v1539 = vpop.f32.mrf.mxu0
      %1540 = vdwg.mxu0
      %1541 = vrot.lane.b32.xlu0 %v1411, 120
      %v1542 = vpop.permute.xlu0 %1541
      %1543 = vrot.lane.b32.xlu0 %v1411, 88
      %v1544 = vpop.permute.xlu0 %1543
      %v1546 = vsel %vm1415, %v1542, 0
      %v1549 = vsel %vm1415, %v1544, 0
      %1551 = vmatprep.subr.bf16.mxu0 0
      %1552 = vmatpush1.bf16.xpose.msra.mxu0 0
      %1553 = vmatprep.subr.bf16.mxu0 0
      %1554 = vmatpush1.bf16.xpose.msra.mxu0 0
      %1555 = vmatprep.subr.bf16.mxu0 0
      %1556 = vmatpush1.bf16.xpose.msra.mxu0 0
      %1557 = vmatprep.subr.bf16.mxu0 0
      %1558 = vmatpush1.bf16.xpose.msra.mxu0 0
      %1559 = vmatprep.subr.bf16.mxu0 0
      %1560 = vmatpush1.bf16.xpose.msra.mxu0 0
      %1561 = vmatprep.subr.bf16.mxu0 0
      %1562 = vmatpush1.bf16.xpose.msra.mxu0 0
      %1563 = vmatprep.subr.bf16.mxu0 0
      %1564 = vmatpush1.bf16.xpose.msra.mxu0 0
      %1565 = vmatprep.subr.bf16.mxu0 0
      %1566 = vmatpush1.bf16.xpose.msra.mxu0 %v1549
      %1567 = vmatprep.subr.bf16.mxu0 0
      %1568 = vmatpush2.bf16.xpose.msra.mxu0 0
      %1569 = vmatprep.subr.bf16.mxu0 0
      %1570 = vmatpush2.bf16.xpose.msra.mxu0 0
      %1571 = vmatprep.subr.bf16.mxu0 0
      %1572 = vmatpush2.bf16.xpose.msra.mxu0 0
      %1573 = vmatprep.subr.bf16.mxu0 0
      %1574 = vmatpush2.bf16.xpose.msra.mxu0 0
      %1575 = vmatprep.subr.bf16.mxu0 0
      %1576 = vmatpush2.bf16.xpose.msra.mxu0 0
      %1577 = vmatprep.subr.bf16.mxu0 0
      %1578 = vmatpush2.bf16.xpose.msra.mxu0 0
      %1579 = vmatprep.subr.bf16.mxu0 0
      %1580 = vmatpush2.bf16.xpose.msra.mxu0 0
      %1581 = vmatprep.subr.bf16.mxu0 0
      %1582 = vmatpush2.bf16.xpose.msra.mxu0 0
      %1583 = vmatprep.mubr.bf16.mxu0 0
      %1584 = vmatmul.mubr.bf16.gmra.mxu0 %v1546
      %v1585 = vpop.f32.mrf.mxu0
      %v1586 = vadd.f32 0.0, %v1585
      %v1587 = vpop.f32.mrf.mxu0
      %v1588 = vpop.f32.mrf.mxu0
      %v1589 = vadd.f32 0.0, %v1588
      %v1590 = vpop.f32.mrf.mxu0
      %1591 = vdwg.mxu0
      %v1592 = vsel %vm1463, %v1586, -inf
      %1593 = vmax.xlane.f32.xlu0 %v1592
      %v1594 = vpop.xlane.xlu0 %1593
      %v1595 = vsel %vm1467, %v1589, -inf
      %1596 = vmax.xlane.f32.xlu0 %v1595
      %v1597 = vpop.xlane.xlu0 %1596
      %v1598 = vsub.f32 %v1586, %v1594
      %v1599 = vsub.f32 %v1589, %v1597
      %v1600 = vmul.f32 %v1598, 1.442695
      %v1601 = vpow.pop %v1600
      %v1602 = vmul.f32 %v1599, 1.442695
      %v1603 = vpow.pop %v1602
      %v1604 = vsel %vm1463, %v1601, 0.0
      %1605 = vadd.xlane.f32.xlu0 %v1604
      %v1606 = vpop.xlane.xlu0 %1605
      %v1607 = vsel %vm1467, %v1603, 0.0
      %1608 = vadd.xlane.f32.xlu0 %v1607
      %v1609 = vpop.xlane.xlu0 %1608
      %v1610 = vrcp.pop %v1606
      %v1611 = vrcp.pop %v1609
      %v1612 = vmul.f32 %v1601, %v1610
      %v1613 = vmul.f32 %v1603, %v1611
      %v1614 = vpack.c.bf16 %v1613, %v1612
      %1615 = vrot.lane.b32.xlu0 %v1411, 56
      %v1616 = vpop.permute.xlu0 %1615
      %v1618 = vsel %vm1463, %v1614, 0
      %v1621 = vand.u32 %v1616, %v1496
      %1623 = vmatprep.subr.bf16.mxu0 0
      %1624 = vmatpush1.bf16.msra.mxu0 0
      %1625 = vmatprep.subr.bf16.mxu0 0
      %1626 = vmatpush1.bf16.msra.mxu0 0
      %1627 = vmatprep.subr.bf16.mxu0 0
      %1628 = vmatpush1.bf16.msra.mxu0 0
      %1629 = vmatprep.subr.bf16.mxu0 0
      %1630 = vmatpush1.bf16.msra.mxu0 0
      %1631 = vmatprep.subr.bf16.mxu0 0
      %1632 = vmatpush1.bf16.msra.mxu0 0
      %1633 = vmatprep.subr.bf16.mxu0 0
      %1634 = vmatpush1.bf16.msra.mxu0 0
      %1635 = vmatprep.subr.bf16.mxu0 0
      %1636 = vmatpush1.bf16.msra.mxu0 0
      %1637 = vmatprep.subr.bf16.mxu0 0
      %1638 = vmatpush1.bf16.msra.mxu0 %v1621
      %1639 = vmatprep.subr.bf16.mxu0 0
      %1640 = vmatpush2.bf16.msra.mxu0 0
      %1641 = vmatprep.subr.bf16.mxu0 0
      %1642 = vmatpush2.bf16.msra.mxu0 0
      %1643 = vmatprep.subr.bf16.mxu0 0
      %1644 = vmatpush2.bf16.msra.mxu0 0
      %1645 = vmatprep.subr.bf16.mxu0 0
      %1646 = vmatpush2.bf16.msra.mxu0 0
      %1647 = vmatprep.subr.bf16.mxu0 0
      %1648 = vmatpush2.bf16.msra.mxu0 0
      %1649 = vmatprep.subr.bf16.mxu0 0
      %1650 = vmatpush2.bf16.msra.mxu0 0
      %1651 = vmatprep.subr.bf16.mxu0 0
      %1652 = vmatpush2.bf16.msra.mxu0 0
      %1653 = vmatprep.subr.bf16.mxu0 0
      %1654 = vmatpush2.bf16.msra.mxu0 0
      %1655 = vmatprep.mubr.bf16.mxu0 0
      %1656 = vmatmul.mubr.bf16.gmra.mxu0 %v1618
      %v1657 = vpop.f32.mrf.mxu0
      %v1658 = vadd.f32 0.0, %v1657
      %v1659 = vpop.f32.mrf.mxu0
      %v1660 = vpop.f32.mrf.mxu0
      %v1661 = vadd.f32 0.0, %v1660
      %v1662 = vpop.f32.mrf.mxu0
      %1663 = vdwg.mxu0
      %1664 = vrot.lane.b32.xlu0 %v1411, 112
      %v1665 = vpop.permute.xlu0 %1664
      %1666 = vrot.lane.b32.xlu0 %v1411, 80
      %v1667 = vpop.permute.xlu0 %1666
      %v1669 = vsel %vm1415, %v1665, 0
      %v1672 = vsel %vm1415, %v1667, 0
      %1674 = vmatprep.subr.bf16.mxu0 0
      %1675 = vmatpush1.bf16.xpose.msra.mxu0 0
      %1676 = vmatprep.subr.bf16.mxu0 0
      %1677 = vmatpush1.bf16.xpose.msra.mxu0 0
      %1678 = vmatprep.subr.bf16.mxu0 0
      %1679 = vmatpush1.bf16.xpose.msra.mxu0 0
      %1680 = vmatprep.subr.bf16.mxu0 0
      %1681 = vmatpush1.bf16.xpose.msra.mxu0 0
      %1682 = vmatprep.subr.bf16.mxu0 0
      %1683 = vmatpush1.bf16.xpose.msra.mxu0 0
      %1684 = vmatprep.subr.bf16.mxu0 0
      %1685 = vmatpush1.bf16.xpose.msra.mxu0 0
      %1686 = vmatprep.subr.bf16.mxu0 0
      %1687 = vmatpush1.bf16.xpose.msra.mxu0 0
      %1688 = vmatprep.subr.bf16.mxu0 0
      %1689 = vmatpush1.bf16.xpose.msra.mxu0 %v1672
      %1690 = vmatprep.subr.bf16.mxu0 0
      %1691 = vmatpush2.bf16.xpose.msra.mxu0 0
      %1692 = vmatprep.subr.bf16.mxu0 0
      %1693 = vmatpush2.bf16.xpose.msra.mxu0 0
      %1694 = vmatprep.subr.bf16.mxu0 0
      %1695 = vmatpush2.bf16.xpose.msra.mxu0 0
      %1696 = vmatprep.subr.bf16.mxu0 0
      %1697 = vmatpush2.bf16.xpose.msra.mxu0 0
      %1698 = vmatprep.subr.bf16.mxu0 0
      %1699 = vmatpush2.bf16.xpose.msra.mxu0 0
      %1700 = vmatprep.subr.bf16.mxu0 0
      %1701 = vmatpush2.bf16.xpose.msra.mxu0 0
      %1702 = vmatprep.subr.bf16.mxu0 0
      %1703 = vmatpush2.bf16.xpose.msra.mxu0 0
      %1704 = vmatprep.subr.bf16.mxu0 0
      %1705 = vmatpush2.bf16.xpose.msra.mxu0 0
      %1706 = vmatprep.mubr.bf16.mxu0 0
      %1707 = vmatmul.mubr.bf16.gmra.mxu0 %v1669
      %v1708 = vpop.f32.mrf.mxu0
      %v1709 = vadd.f32 0.0, %v1708
      %v1710 = vpop.f32.mrf.mxu0
      %v1711 = vpop.f32.mrf.mxu0
      %v1712 = vadd.f32 0.0, %v1711
      %v1713 = vpop.f32.mrf.mxu0
      %1714 = vdwg.mxu0
      %v1715 = vsel %vm1463, %v1709, -inf
      %1716 = vmax.xlane.f32.xlu0 %v1715
      %v1717 = vpop.xlane.xlu0 %1716
      %v1718 = vsel %vm1467, %v1712, -inf
      %1719 = vmax.xlane.f32.xlu0 %v1718
      %v1720 = vpop.xlane.xlu0 %1719
      %v1721 = vsub.f32 %v1709, %v1717
      %v1722 = vsub.f32 %v1712, %v1720
      %v1723 = vmul.f32 %v1721, 1.442695
      %v1724 = vpow.pop %v1723
      %v1725 = vmul.f32 %v1722, 1.442695
      %v1726 = vpow.pop %v1725
      %v1727 = vsel %vm1463, %v1724, 0.0
      %1728 = vadd.xlane.f32.xlu0 %v1727
      %v1729 = vpop.xlane.xlu0 %1728
      %v1730 = vsel %vm1467, %v1726, 0.0
      %1731 = vadd.xlane.f32.xlu0 %v1730
      %v1732 = vpop.xlane.xlu0 %1731
      %v1733 = vrcp.pop %v1729
      %v1734 = vrcp.pop %v1732
      %v1735 = vmul.f32 %v1724, %v1733
      %v1736 = vmul.f32 %v1726, %v1734
      %v1737 = vpack.c.bf16 %v1736, %v1735
      %1738 = vrot.lane.b32.xlu0 %v1411, 48
      %v1739 = vpop.permute.xlu0 %1738
      %v1741 = vsel %vm1463, %v1737, 0
      %v1744 = vand.u32 %v1739, %v1496
      %1746 = vmatprep.subr.bf16.mxu0 0
      %1747 = vmatpush1.bf16.msra.mxu0 0
      %1748 = vmatprep.subr.bf16.mxu0 0
      %1749 = vmatpush1.bf16.msra.mxu0 0
      %1750 = vmatprep.subr.bf16.mxu0 0
      %1751 = vmatpush1.bf16.msra.mxu0 0
      %1752 = vmatprep.subr.bf16.mxu0 0
      %1753 = vmatpush1.bf16.msra.mxu0 0
      %1754 = vmatprep.subr.bf16.mxu0 0
      %1755 = vmatpush1.bf16.msra.mxu0 0
      %1756 = vmatprep.subr.bf16.mxu0 0
      %1757 = vmatpush1.bf16.msra.mxu0 0
      %1758 = vmatprep.subr.bf16.mxu0 0
      %1759 = vmatpush1.bf16.msra.mxu0 0
      %1760 = vmatprep.subr.bf16.mxu0 0
      %1761 = vmatpush1.bf16.msra.mxu0 %v1744
      %1762 = vmatprep.subr.bf16.mxu0 0
      %1763 = vmatpush2.bf16.msra.mxu0 0
      %1764 = vmatprep.subr.bf16.mxu0 0
      %1765 = vmatpush2.bf16.msra.mxu0 0
      %1766 = vmatprep.subr.bf16.mxu0 0
      %1767 = vmatpush2.bf16.msra.mxu0 0
      %1768 = vmatprep.subr.bf16.mxu0 0
      %1769 = vmatpush2.bf16.msra.mxu0 0
      %1770 = vmatprep.subr.bf16.mxu0 0
      %1771 = vmatpush2.bf16.msra.mxu0 0
      %1772 = vmatprep.subr.bf16.mxu0 0
      %1773 = vmatpush2.bf16.msra.mxu0 0
      %1774 = vmatprep.subr.bf16.mxu0 0
      %1775 = vmatpush2.bf16.msra.mxu0 0
      %1776 = vmatprep.subr.bf16.mxu0 0
      %1777 = vmatpush2.bf16.msra.mxu0 0
      %1778 = vmatprep.mubr.bf16.mxu0 0
      %1779 = vmatmul.mubr.bf16.gmra.mxu0 %v1741
      %v1780 = vpop.f32.mrf.mxu0
      %v1781 = vadd.f32 0.0, %v1780
      %v1782 = vpop.f32.mrf.mxu0
      %v1783 = vpop.f32.mrf.mxu0
      %v1784 = vadd.f32 0.0, %v1783
      %v1785 = vpop.f32.mrf.mxu0
      %1786 = vdwg.mxu0
      %1787 = vrot.lane.b32.xlu0 %v1411, 104
      %v1788 = vpop.permute.xlu0 %1787
      %1789 = vrot.lane.b32.xlu0 %v1411, 72
      %v1790 = vpop.permute.xlu0 %1789
      %v1792 = vsel %vm1415, %v1788, 0
      %v1795 = vsel %vm1415, %v1790, 0
      %1797 = vmatprep.subr.bf16.mxu0 0
      %1798 = vmatpush1.bf16.xpose.msra.mxu0 0
      %1799 = vmatprep.subr.bf16.mxu0 0
      %1800 = vmatpush1.bf16.xpose.msra.mxu0 0
      %1801 = vmatprep.subr.bf16.mxu0 0
      %1802 = vmatpush1.bf16.xpose.msra.mxu0 0
      %1803 = vmatprep.subr.bf16.mxu0 0
      %1804 = vmatpush1.bf16.xpose.msra.mxu0 0
      %1805 = vmatprep.subr.bf16.mxu0 0
      %1806 = vmatpush1.bf16.xpose.msra.mxu0 0
      %1807 = vmatprep.subr.bf16.mxu0 0
      %1808 = vmatpush1.bf16.xpose.msra.mxu0 0
      %1809 = vmatprep.subr.bf16.mxu0 0
      %1810 = vmatpush1.bf16.xpose.msra.mxu0 0
      %1811 = vmatprep.subr.bf16.mxu0 0
      %1812 = vmatpush1.bf16.xpose.msra.mxu0 %v1795
      %1813 = vmatprep.subr.bf16.mxu0 0
      %1814 = vmatpush2.bf16.xpose.msra.mxu0 0
      %1815 = vmatprep.subr.bf16.mxu0 0
      %1816 = vmatpush2.bf16.xpose.msra.mxu0 0
      %1817 = vmatprep.subr.bf16.mxu0 0
      %1818 = vmatpush2.bf16.xpose.msra.mxu0 0
      %1819 = vmatprep.subr.bf16.mxu0 0
      %1820 = vmatpush2.bf16.xpose.msra.mxu0 0
      %1821 = vmatprep.subr.bf16.mxu0 0
      %1822 = vmatpush2.bf16.xpose.msra.mxu0 0
      %1823 = vmatprep.subr.bf16.mxu0 0
      %1824 = vmatpush2.bf16.xpose.msra.mxu0 0
      %1825 = vmatprep.subr.bf16.mxu0 0
      %1826 = vmatpush2.bf16.xpose.msra.mxu0 0
      %1827 = vmatprep.subr.bf16.mxu0 0
      %1828 = vmatpush2.bf16.xpose.msra.mxu0 0
      %1829 = vmatprep.mubr.bf16.mxu0 0
      %1830 = vmatmul.mubr.bf16.gmra.mxu0 %v1792
      %v1831 = vpop.f32.mrf.mxu0
      %v1832 = vadd.f32 0.0, %v1831
      %v1833 = vpop.f32.mrf.mxu0
      %v1834 = vpop.f32.mrf.mxu0
      %v1835 = vadd.f32 0.0, %v1834
      %v1836 = vpop.f32.mrf.mxu0
      %1837 = vdwg.mxu0
      %v1838 = vsel %vm1463, %v1832, -inf
      %1839 = vmax.xlane.f32.xlu0 %v1838
      %v1840 = vpop.xlane.xlu0 %1839
      %v1841 = vsel %vm1467, %v1835, -inf
      %1842 = vmax.xlane.f32.xlu0 %v1841
      %v1843 = vpop.xlane.xlu0 %1842
      %v1844 = vsub.f32 %v1832, %v1840
      %v1845 = vsub.f32 %v1835, %v1843
      %v1846 = vmul.f32 %v1844, 1.442695
      %v1847 = vpow.pop %v1846
      %v1848 = vmul.f32 %v1845, 1.442695
      %v1849 = vpow.pop %v1848
      %v1850 = vsel %vm1463, %v1847, 0.0
      %1851 = vadd.xlane.f32.xlu0 %v1850
      %v1852 = vpop.xlane.xlu0 %1851
      %v1853 = vsel %vm1467, %v1849, 0.0
      %1854 = vadd.xlane.f32.xlu0 %v1853
      %v1855 = vpop.xlane.xlu0 %1854
      %v1856 = vrcp.pop %v1852
      %v1857 = vrcp.pop %v1855
      %v1858 = vmul.f32 %v1847, %v1856
      %v1859 = vmul.f32 %v1849, %v1857
      %v1860 = vpack.c.bf16 %v1859, %v1858
      %1861 = vrot.lane.b32.xlu0 %v1411, 40
      %v1862 = vpop.permute.xlu0 %1861
      %v1864 = vsel %vm1463, %v1860, 0
      %v1867 = vand.u32 %v1862, %v1496
      %1869 = vmatprep.subr.bf16.mxu0 0
      %1870 = vmatpush1.bf16.msra.mxu0 0
      %1871 = vmatprep.subr.bf16.mxu0 0
      %1872 = vmatpush1.bf16.msra.mxu0 0
      %1873 = vmatprep.subr.bf16.mxu0 0
      %1874 = vmatpush1.bf16.msra.mxu0 0
      %1875 = vmatprep.subr.bf16.mxu0 0
      %1876 = vmatpush1.bf16.msra.mxu0 0
      %1877 = vmatprep.subr.bf16.mxu0 0
      %1878 = vmatpush1.bf16.msra.mxu0 0
      %1879 = vmatprep.subr.bf16.mxu0 0
      %1880 = vmatpush1.bf16.msra.mxu0 0
      %1881 = vmatprep.subr.bf16.mxu0 0
      %1882 = vmatpush1.bf16.msra.mxu0 0
      %1883 = vmatprep.subr.bf16.mxu0 0
      %1884 = vmatpush1.bf16.msra.mxu0 %v1867
      %1885 = vmatprep.subr.bf16.mxu0 0
      %1886 = vmatpush2.bf16.msra.mxu0 0
      %1887 = vmatprep.subr.bf16.mxu0 0
      %1888 = vmatpush2.bf16.msra.mxu0 0
      %1889 = vmatprep.subr.bf16.mxu0 0
      %1890 = vmatpush2.bf16.msra.mxu0 0
      %1891 = vmatprep.subr.bf16.mxu0 0
      %1892 = vmatpush2.bf16.msra.mxu0 0
      %1893 = vmatprep.subr.bf16.mxu0 0
      %1894 = vmatpush2.bf16.msra.mxu0 0
      %1895 = vmatprep.subr.bf16.mxu0 0
      %1896 = vmatpush2.bf16.msra.mxu0 0
      %1897 = vmatprep.subr.bf16.mxu0 0
      %1898 = vmatpush2.bf16.msra.mxu0 0
      %1899 = vmatprep.subr.bf16.mxu0 0
      %1900 = vmatpush2.bf16.msra.mxu0 0
      %1901 = vmatprep.mubr.bf16.mxu0 0
      %1902 = vmatmul.mubr.bf16.gmra.mxu0 %v1864
      %v1903 = vpop.f32.mrf.mxu0
      %v1904 = vadd.f32 0.0, %v1903
      %v1905 = vpop.f32.mrf.mxu0
      %v1906 = vpop.f32.mrf.mxu0
      %v1907 = vadd.f32 0.0, %v1906
      %v1908 = vpop.f32.mrf.mxu0
      %1909 = vdwg.mxu0
      %1912 = vrot.lane.b32.xlu0 %v1658, 8
      %v1913 = vpop.permute.xlu0 %1912
      %1914 = vrot.lane.b32.xlu0 %v1661, 8
      %v1915 = vpop.permute.xlu0 %1914
      %1920 = vrot.lane.b32.xlu0 %v1781, 16
      %v1921 = vpop.permute.xlu0 %1920
      %1922 = vrot.lane.b32.xlu0 %v1784, 16
      %v1923 = vpop.permute.xlu0 %1922
      %1928 = vrot.lane.b32.xlu0 %v1904, 24
      %v1929 = vpop.permute.xlu0 %1928
      %1930 = vrot.lane.b32.xlu0 %v1907, 24
      %v1931 = vpop.permute.xlu0 %1930
      %v1934 = vsel %vm1415, %v1535, %v1913
      %v1935 = vsel %vm1415, %v1538, %v1915
      %vm1936 = vcmask 130048
      %v1937 = vsel %vm1936, %v1934, %v1921
      %v1938 = vsel %vm1936, %v1935, %v1923
      %vm1939 = vcmask 195584
      %v1940 = vsel %vm1939, %v1937, %v1929
      %v1941 = vsel %vm1939, %v1938, %v1931
      %v1942 = vpack.c.bf16 %v1941, %v1940
      %v1943 = vld [vmem:[%s668] sm:$0xf]
      %v1944 = vld [vmem:[%s668 + $0x4] sm:$0xf]
      %v1945 = vld [vmem:[%s668 + $0x8] sm:$0xf]
      %v1946 = vld [vmem:[%s668 + $0xc] sm:$0xf]
      %v1947 = vld [vmem:[%s671] sm:$0x1]
      %v1949 = vlaneseq
      %v1950 = vshrl.u32 %v1949, 7
      %v1951 = vsub.s32 0, %v1950
      %v1952 = vrot.slane %v1947, %v1951
      %v1958 = vunpack.c.l.b16 %v1943
      %v1959 = vunpack.c.l.b16 %v1944
      %v1960 = vunpack.c.l.b16 %v1945
      %v1961 = vunpack.c.l.b16 %v1946
      %v1962 = vpack.c.b16 %v1959, %v1958
      %v1963 = vpack.c.b16 %v1961, %v1960
      %v1967 = vsel %vm1298, %v1942, 0
      %1969 = vmatprep.subr.bf16.mxu0 0
      %1970 = vmatpush1.bf16.msra.mxu0 0
      %1971 = vmatprep.subr.bf16.mxu0 0
      %1972 = vmatpush1.bf16.msra.mxu0 0
      %1973 = vmatprep.subr.bf16.mxu0 0
      %1974 = vmatpush1.bf16.msra.mxu0 0
      %1975 = vmatprep.subr.bf16.mxu0 0
      %1976 = vmatpush1.bf16.msra.mxu0 0
      %1977 = vmatprep.subr.bf16.mxu0 0
      %1978 = vmatpush1.bf16.msra.mxu0 0
      %1979 = vmatprep.subr.bf16.mxu0 0
      %1980 = vmatpush1.bf16.msra.mxu0 0
      %1981 = vmatprep.subr.bf16.mxu0 0
      %1982 = vmatpush1.bf16.msra.mxu0 %v1963
      %1983 = vmatprep.subr.bf16.mxu0 0
      %1984 = vmatpush1.bf16.msra.mxu0 %v1962
      %1985 = vmatprep.subr.bf16.mxu0 0
      %1986 = vmatpush2.bf16.msra.mxu0 0
      %1987 = vmatprep.subr.bf16.mxu0 0
      %1988 = vmatpush2.bf16.msra.mxu0 0
      %1989 = vmatprep.subr.bf16.mxu0 0
      %1990 = vmatpush2.bf16.msra.mxu0 0
      %1991 = vmatprep.subr.bf16.mxu0 0
      %1992 = vmatpush2.bf16.msra.mxu0 0
      %1993 = vmatprep.subr.bf16.mxu0 0
      %1994 = vmatpush2.bf16.msra.mxu0 0
      %1995 = vmatprep.subr.bf16.mxu0 0
      %1996 = vmatpush2.bf16.msra.mxu0 0
      %1997 = vmatprep.subr.bf16.mxu0 0
      %1998 = vmatpush2.bf16.msra.mxu0 0
      %1999 = vmatprep.subr.bf16.mxu0 0
      %2000 = vmatpush2.bf16.msra.mxu0 0
      %2001 = vmatprep.mubr.bf16.mxu0 0
      %2002 = vmatmul.mubr.bf16.gmra.mxu0 %v1967
      %v2003 = vpop.f32.mrf.mxu0
      %v2004 = vadd.f32 %v1952, %v2003
      %v2005 = vpop.f32.mrf.mxu0
      %v2006 = vpop.f32.mrf.mxu0
      %v2007 = vadd.f32 %v1952, %v2006
      %v2008 = vpop.f32.mrf.mxu0
      %2009 = vdwg.mxu0
      %v2010 = vadd.f32 %v1294, %v2004
      %v2011 = vadd.f32 %v1295, %v2007
      %v2012 = vld [vmem:[%s674] sm:$0x1]
      %v2013 = vld [vmem:[%s677] sm:$0x1]
      %v2014 = vsel %vm1298, %v2010, 0.0
      %2015 = vadd.xlane.f32.xlu0 %v2014
      %v2016 = vpop.xlane.xlu0 %2015
      %v2017 = vsel %vm1302, %v2011, 0.0
      %2018 = vadd.xlane.f32.xlu0 %v2017
      %v2019 = vpop.xlane.xlu0 %2018
      %v2020 = vmul.f32 %v2016, %v1306
      %v2021 = vmul.f32 %v2019, %v1306
      %v2022 = vsub.f32 %v2010, %v2020
      %v2023 = vsub.f32 %v2011, %v2021
      %v2024 = vmul.f32 %v2022, %v2022
      %v2025 = vmul.f32 %v2023, %v2023
      %v2026 = vsel %vm1298, %v2024, 0.0
      %2027 = vadd.xlane.f32.xlu0 %v2026
      %v2028 = vpop.xlane.xlu0 %2027
      %v2029 = vsel %vm1302, %v2025, 0.0
      %2030 = vadd.xlane.f32.xlu0 %v2029
      %v2031 = vpop.xlane.xlu0 %2030
      %v2032 = vmul.f32 %v2028, %v1306
      %v2033 = vmul.f32 %v2031, %v1306
      %v2034 = vadd.f32 %v2032, 1e-05
      %v2035 = vadd.f32 %v2033, 1e-05
      %v2036 = vrsqrt.pop %v2034
      %v2037 = vrsqrt.pop %v2035
      %v2038 = vmul.f32 %v2022, %v2036
      %v2039 = vmul.f32 %v2023, %v2037
      %v2041 = vlaneseq
      %v2042 = vshrl.u32 %v2041, 7
      %v2043 = vsub.s32 0, %v2042
      %v2044 = vrot.slane %v2012, %v2043
      %v2046 = vmul.f32 %v2038, %v2044
      %v2047 = vmul.f32 %v2039, %v2044
      %v2049 = vlaneseq
      %v2050 = vshrl.u32 %v2049, 7
      %v2051 = vsub.s32 0, %v2050
      %v2052 = vrot.slane %v2013, %v2051
      %v2054 = vadd.f32 %v2046, %v2052
      %v2055 = vadd.f32 %v2047, %v2052
      %v2056 = vpack.c.bf16 %v2055, %v2054
      %v2057 = vld [vmem:[%s682] sm:$0xf]
      %v2058 = vld [vmem:[%s682 + $0x4] sm:$0xf]
      %v2059 = vld [vmem:[%s682 + $0x8] sm:$0xf]
      %v2060 = vld [vmem:[%s682 + $0xc] sm:$0xf]
      %v2061 = vld [vmem:[%s685] sm:$0x1]
      %v2063 = vlaneseq
      %v2064 = vshrl.u32 %v2063, 7
      %v2065 = vsub.s32 0, %v2064
      %v2066 = vrot.slane %v2061, %v2065
      %v2072 = vunpack.c.l.b16 %v2057
      %v2073 = vunpack.c.l.b16 %v2058
      %v2074 = vunpack.c.l.b16 %v2059
      %v2075 = vunpack.c.l.b16 %v2060
      %v2076 = vpack.c.b16 %v2073, %v2072
      %v2077 = vpack.c.b16 %v2075, %v2074
      %v2081 = vsel %vm1298, %v2056, 0
      %2083 = vmatprep.subr.bf16.mxu0 0
      %2084 = vmatpush1.bf16.msra.mxu0 0
      %2085 = vmatprep.subr.bf16.mxu0 0
      %2086 = vmatpush1.bf16.msra.mxu0 0
      %2087 = vmatprep.subr.bf16.mxu0 0
      %2088 = vmatpush1.bf16.msra.mxu0 0
      %2089 = vmatprep.subr.bf16.mxu0 0
      %2090 = vmatpush1.bf16.msra.mxu0 0
      %2091 = vmatprep.subr.bf16.mxu0 0
      %2092 = vmatpush1.bf16.msra.mxu0 0
      %2093 = vmatprep.subr.bf16.mxu0 0
      %2094 = vmatpush1.bf16.msra.mxu0 0
      %2095 = vmatprep.subr.bf16.mxu0 0
      %2096 = vmatpush1.bf16.msra.mxu0 %v2077
      %2097 = vmatprep.subr.bf16.mxu0 0
      %2098 = vmatpush1.bf16.msra.mxu0 %v2076
      %2099 = vmatprep.subr.bf16.mxu0 0
      %2100 = vmatpush2.bf16.msra.mxu0 0
      %2101 = vmatprep.subr.bf16.mxu0 0
      %2102 = vmatpush2.bf16.msra.mxu0 0
      %2103 = vmatprep.subr.bf16.mxu0 0
      %2104 = vmatpush2.bf16.msra.mxu0 0
      %2105 = vmatprep.subr.bf16.mxu0 0
      %2106 = vmatpush2.bf16.msra.mxu0 0
      %2107 = vmatprep.subr.bf16.mxu0 0
      %2108 = vmatpush2.bf16.msra.mxu0 0
      %2109 = vmatprep.subr.bf16.mxu0 0
      %2110 = vmatpush2.bf16.msra.mxu0 0
      %2111 = vmatprep.subr.bf16.mxu0 0
      %2112 = vmatpush2.bf16.msra.mxu0 0
      %2113 = vmatprep.subr.bf16.mxu0 0
      %2114 = vmatpush2.bf16.msra.mxu0 0
      %2115 = vmatprep.mubr.bf16.mxu0 0
      %2116 = vmatmul.mubr.bf16.gmra.mxu0 %v2081
      %v2117 = vpop.f32.mrf.mxu0
      %v2118 = vadd.f32 %v2066, %v2117
      %v2119 = vpop.f32.mrf.mxu0
      %v2120 = vpop.f32.mrf.mxu0
      %v2121 = vadd.f32 %v2066, %v2120
      %v2122 = vpop.f32.mrf.mxu0
      %2123 = vdwg.mxu0
      %v2124 = vmul.f32 %v2118, 0.5
      %v2125 = vmul.f32 %v2121, 0.5
      %v2126 = vmul.f32 %v2118, 0.70710677
      %v2127 = vmul.f32 %v2121, 0.70710677
      %v2128 = verf.f32.pop %v2126
      %v2129 = verf.f32.pop %v2127
      %v2130 = vadd.f32 %v2128, 1.0
      %v2131 = vadd.f32 %v2129, 1.0
      %v2132 = vmul.f32 %v2124, %v2130
      %v2133 = vmul.f32 %v2125, %v2131
      %v2134 = vpack.c.bf16 %v2133, %v2132
      %v2135 = vld [vmem:[%s690] sm:$0xf]
      %v2136 = vld [vmem:[%s690 + $0x4] sm:$0xf]
      %v2137 = vld [vmem:[%s690 + $0x8] sm:$0xf]
      %v2138 = vld [vmem:[%s690 + $0xc] sm:$0xf]
      %v2139 = vld [vmem:[%s690 + $0x10] sm:$0xf]
      %v2140 = vld [vmem:[%s690 + $0x14] sm:$0xf]
      %v2141 = vld [vmem:[%s690 + $0x18] sm:$0xf]
      %v2142 = vld [vmem:[%s690 + $0x1c] sm:$0xf]
      %v2151 = vunpack.c.l.b16 %v2135
      %v2152 = vunpack.c.l.b16 %v2136
      %v2153 = vunpack.c.l.b16 %v2137
      %v2154 = vunpack.c.l.b16 %v2138
      %v2155 = vunpack.c.l.b16 %v2139
      %v2156 = vunpack.c.l.b16 %v2140
      %v2157 = vunpack.c.l.b16 %v2141
      %v2158 = vunpack.c.l.b16 %v2142
      %v2159 = vpack.c.b16 %v2152, %v2151
      %v2160 = vpack.c.b16 %v2154, %v2153
      %v2161 = vpack.c.b16 %v2156, %v2155
      %v2162 = vpack.c.b16 %v2158, %v2157
      %vm2167 = vcmask 523264
      %v2169 = vsel %vm2167, %v2134, 0
      %2171 = vmatprep.subr.bf16.mxu0 0
      %2172 = vmatpush1.bf16.msra.mxu0 0
      %2173 = vmatprep.subr.bf16.mxu0 0
      %2174 = vmatpush1.bf16.msra.mxu0 0
      %2175 = vmatprep.subr.bf16.mxu0 0
      %2176 = vmatpush1.bf16.msra.mxu0 0
      %2177 = vmatprep.subr.bf16.mxu0 0
      %2178 = vmatpush1.bf16.msra.mxu0 0
      %2179 = vmatprep.subr.bf16.mxu0 0
      %2180 = vmatpush1.bf16.msra.mxu0 %v2162
      %2181 = vmatprep.subr.bf16.mxu0 0
      %2182 = vmatpush1.bf16.msra.mxu0 %v2161
      %2183 = vmatprep.subr.bf16.mxu0 0
      %2184 = vmatpush1.bf16.msra.mxu0 %v2160
      %2185 = vmatprep.subr.bf16.mxu0 0
      %2186 = vmatpush1.bf16.msra.mxu0 %v2159
      %2187 = vmatprep.subr.bf16.mxu0 0
      %2188 = vmatpush2.bf16.msra.mxu0 0
      %2189 = vmatprep.subr.bf16.mxu0 0
      %2190 = vmatpush2.bf16.msra.mxu0 0
      %2191 = vmatprep.subr.bf16.mxu0 0
      %2192 = vmatpush2.bf16.msra.mxu0 0
      %2193 = vmatprep.subr.bf16.mxu0 0
      %2194 = vmatpush2.bf16.msra.mxu0 0
      %2195 = vmatprep.subr.bf16.mxu0 0
      %2196 = vmatpush2.bf16.msra.mxu0 0
      %2197 = vmatprep.subr.bf16.mxu0 0
      %2198 = vmatpush2.bf16.msra.mxu0 0
      %2199 = vmatprep.subr.bf16.mxu0 0
      %2200 = vmatpush2.bf16.msra.mxu0 0
      %2201 = vmatprep.subr.bf16.mxu0 0
      %2202 = vmatpush2.bf16.msra.mxu0 0
      %2203 = vmatprep.mubr.bf16.mxu0 0
      %2204 = vmatmul.mubr.bf16.gmra.mxu0 %v2169
      %v2205 = vpop.f32.mrf.mxu0
      %v2206 = vadd.f32 0.0, %v2205
      %v2207 = vpop.f32.mrf.mxu0
      %v2208 = vpop.f32.mrf.mxu0
      %v2209 = vadd.f32 0.0, %v2208
      %v2210 = vpop.f32.mrf.mxu0
      %2211 = vdwg.mxu0
      %v2212 = vadd.f32 %v2010, %v2206
      %v2213 = vadd.f32 %v2011, %v2209
      %v2214 = vld [vmem:[%s693] sm:$0x1]
      %v2216 = vlaneseq
      %v2217 = vshrl.u32 %v2216, 7
      %v2218 = vsub.s32 0, %v2217
      %v2219 = vrot.slane %v2214, %v2218
      %v2221 = vadd.f32 %v2212, %v2219
      %v2222 = vadd.f32 %v2213, %v2219
      %2223 = vst.msk [vmem:[%s698] sm:$0xff] %vm1298, %v2221
      %2224 = vst.msk [vmem:[%s698 + $0x8] sm:$0x7f] %vm1302, %v2222
      %p2225 = scmp.lt.s32.totalorder %s30, 1
      %s2226 = scalar_select %p2225, %s30, 1
      %s2227 = smul.addr %s2226, 2
      %s2228 = smul.addr %s2227, 8
      %s2229 = scalar_lea.vmem %s15, %s2228
      // Predicated region
      $region85: #{_lambda_.8} parent=79 // pred_check
        %p2230 = pneg %p436
      $region86: #{_lambda_.8} parent=79 // pred_check_branch
        %2232 = sbr.rel (%p2230) target = $region88
      $region87: #{_lambda_.8} parent=79 // pred_region
        _
      $region88: #{_lambda_.8} parent=79 // pred_fallthru
        _
    $region80: #{_lambda_.8} parent=5 // pred_fallthru
      _
    %p2233 = scmp.le.s32.totalorder 2, %s21
    // Predicated region
    $region89: #{_lambda_.8} parent=5 // pred_check
      %p2234 = pneg %p2233
    $region90: #{_lambda_.8} parent=5 // pred_check_branch
      %2236 = sbr.rel (%p2234) target = $region92
    $region91: #{_lambda_.8} parent=5 // pred_region
      %s2237 = ssub.s32 %s21, 2
      // Predicated region
      $region93: #{_lambda_.8} parent=91 // pred_check
        %p2238 = pneg %p442
      $region94: #{_lambda_.8} parent=91 // pred_check_branch
        %2240 = sbr.rel (%p2238) target = $region96
      $region95: #{_lambda_.8} parent=91 // pred_region
        %p2241 = scmp.lt.s32.totalorder %s32, 1
        %s2242 = scalar_select %p2241, %s32, 1
        %s2243 = smul.addr %s2242, 2
        %s2244 = smul.addr %s2243, 8
        %s2245 = scalar_lea.vmem %s15, %s2244
      $region96: #{_lambda_.8} parent=91 // pred_fallthru
        _
    $region92: #{_lambda_.8} parent=5 // pred_fallthru
      _
  $region6: #{_lambda_.8} parent=0 // loop_footer
    %s25 = sadd.s32 1, %s21
  $region7: #{_lambda_.8} parent=0 // loop_footer_branch
    %20 = sbr.rel target = $region3
  $region8: #{_lambda_.8} parent=0 // loop_exit
    _

</llo_original>
